<compile_context>
chip_gen: v6e
topology: v6e:2x2x1
jax: 0.10.0
libtpu: 0.0.40
codegen_flags: <defaults>
</compile_context>

<pallas_src>
import jax
import jax.numpy as jnp
from jax.experimental import pallas as pl
from jax.experimental.pallas import tpu as pltpu

# ----------------------------- model config ---------------------------------
BATCH = 2
IN_CH = 3
IMG = 16
PATCH = 8
GRID = IMG // PATCH                # 2
TOKENS = GRID * GRID + 1           # 4 patches + CLS = 5
WIDTH = 32
HEADS = 4
HEAD_DIM = WIDTH // HEADS          # 8
MLP_DIM = 4 * WIDTH                # 128
LAYERS = 2
OUT_DIM = 16                       # CLIP visual projection dim (synthetic)
LN_EPS = 1e-5
PATCH_FEAT = IN_CH * PATCH * PATCH  # 192
NEG_INF = -1e9


# --------------------------- in-kernel helpers --------------------------------
def _layernorm(x, g, b):
    """Row-wise LayerNorm in f32. x: (N, D); g/b: (1, D)."""
    mean = jnp.mean(x, axis=-1, keepdims=True)
    var = jnp.mean(jnp.square(x - mean), axis=-1, keepdims=True)
    return (x - mean) * jax.lax.rsqrt(var + LN_EPS) * g + b


def _mm(a, w):
    """Activation x bf16 weight matmul on the MXU with f32 accumulation."""
    return jnp.dot(a.astype(w.dtype), w, preferred_element_type=jnp.float32)


# ------------------------------ fused kernel ----------------------------------
def _clip_vit_kernel(
        patches_ref,     # (B*T, C*p*p) f32 — CLS rows are zeros
        clspos_ref,      # (B*T, W)  f32 — pos_emb (+class_emb in CLS rows), tiled per batch
        mask_ref,        # (B*T, B*T) f32 — 0 within a batch element, -1e9 across
        conv_w_ref,      # (C*p*p, W) bf16
        ln_pre_g_ref, ln_pre_b_ref,          # (1, W) f32
        ln1_g_ref, ln1_b_ref,                # (L, 1, W) f32
        qk_w_ref,        # (L, 2, H, W, Dh) bf16 — per-head q/k projection blocks
        qk_b_ref,        # (L, 2, H, 1, Dh) f32
        vo_w_ref,        # (L, H, W, W) bf16 — per-head value proj fused with out proj
        vo_b_ref,        # (L, H, 1, W) f32
        out_b_ref,       # (L, 1, W) f32
        ln2_g_ref, ln2_b_ref,                # (L, 1, W) f32
        fc_w_ref,        # (L, W, M) bf16
        fc_b_ref,        # (L, 1, M) f32
        proj_w_ref,      # (L, M, W) bf16
        proj_b_ref,      # (L, 1, W) f32
        ln_post_g_ref, ln_post_b_ref,        # (1, W) f32
        vproj_ref,       # (W, OUT) bf16
        o_ref):          # (B*T, OUT) f32
    n_layers, _, n_heads, _, hd = qk_w_ref.shape
    scale = float(hd) ** -0.5
    mask = mask_ref[...]

    # patch-embed "conv" (no bias in CLIP) + CLS / positional embeddings.
    # CLS rows of `patches` are zero, so they become class_emb + pos_emb[0].
    x = _mm(patches_ref[...], conv_w_ref[...]) + clspos_ref[...]   # (B*T, W) f32
    x = _layernorm(x, ln_pre_g_ref[...], ln_pre_b_ref[...])

    for li in range(n_layers):                          # LAYERS = 2, unrolled
        # ---------------- multi-head self-attention (batch via mask) ---------
        y = _layernorm(x, ln1_g_ref[li], ln1_b_ref[li])
        attn = jnp.zeros_like(x)
        for h in range(n_heads):                        # HEADS = 4, unrolled
            q = _mm(y, qk_w_ref[li, 0, h]) + qk_b_ref[li, 0, h]      # (B*T, Dh)
            k = _mm(y, qk_w_ref[li, 1, h]) + qk_b_ref[li, 1, h]      # (B*T, Dh)
            # value projection already folded with this head's out-proj slice
            v = _mm(y, vo_w_ref[li, h]) + vo_b_ref[li, h]            # (B*T, W)
            s = jax.lax.dot_general(q, k, (((1,), (1,)), ((), ())),
                                    preferred_element_type=jnp.float32)
            s = s * scale + mask                                     # block-diag
            s = s - jnp.max(s, axis=-1, keepdims=True)
            p = jnp.exp(s)
            p = p * pl.reciprocal(jnp.sum(p, axis=-1, keepdims=True),
                                  approx=True)
            attn = attn + jnp.dot(p, v, preferred_element_type=jnp.float32)
        x = x + attn + out_b_ref[li]

        # ---------------- MLP with QuickGELU ----------------
        y = _layernorm(x, ln2_g_ref[li], ln2_b_ref[li])
        hmid = _mm(y, fc_w_ref[li]) + fc_b_ref[li]                   # (B*T, M)
        hmid = hmid * jax.nn.sigmoid(1.702 * hmid)                   # QuickGELU
        x = x + _mm(hmid, proj_w_ref[li]) + proj_b_ref[li]

    # ln_post on all tokens + visual projection (forward_full -> full seq).
    # TODO(synk): exact `forward_full` return contract of the FAS repo's CLIP
    # fork is unknown; here it returns ln_post(x) @ proj for every token.
    x = _layernorm(x, ln_post_g_ref[...], ln_post_b_ref[...])
    o_ref[...] = _mm(x, vproj_ref[...]).astype(o_ref.dtype)          # (B*T, OUT)


# ------------------------------ parameters -----------------------------------
def init_params(key):
    def nrm(k, shape, scale):
        return scale * jax.random.normal(k, shape, dtype=jnp.float32)

    keys = jax.random.split(key, 8 + LAYERS)
    params = {
        # patch-embed conv (kernel=stride=PATCH, no bias in CLIP) as a matmul
        "conv_w": nrm(keys[0], (PATCH_FEAT, WIDTH), WIDTH ** -0.5),
        "class_emb": nrm(keys[1], (WIDTH,), WIDTH ** -0.5),
        "pos_emb": nrm(keys[2], (TOKENS, WIDTH), WIDTH ** -0.5),
        "ln_pre_g": jnp.ones((WIDTH,), jnp.float32),
        "ln_pre_b": jnp.zeros((WIDTH,), jnp.float32),
        "ln_post_g": jnp.ones((WIDTH,), jnp.float32),
        "ln_post_b": jnp.zeros((WIDTH,), jnp.float32),
        "proj": nrm(keys[3], (WIDTH, OUT_DIM), WIDTH ** -0.5),
        "layers": [],
    }
    for li in range(LAYERS):
        lk = jax.random.split(keys[8 + li], 4)
        params["layers"].append({
            "ln1_g": jnp.ones((WIDTH,), jnp.float32),
            "ln1_b": jnp.zeros((WIDTH,), jnp.float32),
            "qkv_w": nrm(lk[0], (WIDTH, 3 * WIDTH), WIDTH ** -0.5),
            "qkv_b": jnp.zeros((3 * WIDTH,), jnp.float32),
            "out_w": nrm(lk[1], (WIDTH, WIDTH), WIDTH ** -0.5),
            "out_b": jnp.zeros((WIDTH,), jnp.float32),
            "ln2_g": jnp.ones((WIDTH,), jnp.float32),
            "ln2_b": jnp.zeros((WIDTH,), jnp.float32),
            "fc_w": nrm(lk[2], (WIDTH, MLP_DIM), WIDTH ** -0.5),
            "fc_b": jnp.zeros((MLP_DIM,), jnp.float32),
            "proj_w": nrm(lk[3], (MLP_DIM, WIDTH), MLP_DIM ** -0.5),
            "proj_b": jnp.zeros((WIDTH,), jnp.float32),
        })
    return params


def _pack_params(params):
    """Repack module-style weights for the fused kernel: stack per layer, split
    QK per head, fuse each head's V projection with its out-proj slice, cast
    matmul weights to bf16 (biases / LN params stay f32)."""
    L, W, H, Dh, M = LAYERS, WIDTH, HEADS, HEAD_DIM, MLP_DIM
    bf16 = jnp.bfloat16

    def stack(name):
        return jnp.stack([lp[name] for lp in params["layers"]])

    # (L, W, 3W) with column c = s*W + h*Dh + d  ->  (L, 3, H, W, Dh)
    qkv_w = stack("qkv_w").reshape(L, W, 3, H, Dh).transpose(0, 2, 3, 1, 4)
    qkv_b = stack("qkv_b").reshape(L, 3, H, 1, Dh)
    # (L, W, W): input rows are concatenated heads -> (L, H, Dh, W)
    out_w = stack("out_w").reshape(L, H, Dh, W)

    # fuse per-head value projection with the matching out-proj slice:
    #   v'_h = y @ (Wv_h @ Wout_h) + bv_h @ Wout_h ;  attn = sum_h softmax_h @ v'_h
    vo_w = jnp.einsum("lhwd,lhdo->lhwo", qkv_w[:, 2], out_w)       # (L, H, W, W)
    vo_b = jnp.einsum("lhxd,lhdo->lhxo", qkv_b[:, 2], out_w)       # (L, H, 1, W)

    # class embedding folded into row 0 of the positional table
    clspos = params["pos_emb"].at[0].add(params["class_emb"])

    return {
        "clspos": clspos,                                  # (T, W) f32
        "conv_w": params["conv_w"].astype(bf16),
        "ln_pre_g": params["ln_pre_g"].reshape(1, W),
        "ln_pre_b": params["ln_pre_b"].reshape(1, W),
        "ln1_g": stack("ln1_g").reshape(L, 1, W),
        "ln1_b": stack("ln1_b").reshape(L, 1, W),
        "qk_w": qkv_w[:, :2].astype(bf16),                 # (L, 2, H, W, Dh)
        "qk_b": qkv_b[:, :2],                              # (L, 2, H, 1, Dh)
        "vo_w": vo_w.astype(bf16),
        "vo_b": vo_b,
        "out_b": stack("out_b").reshape(L, 1, W),
        "ln2_g": stack("ln2_g").reshape(L, 1, W),
        "ln2_b": stack("ln2_b").reshape(L, 1, W),
        "fc_w": stack("fc_w").astype(bf16),
        "fc_b": stack("fc_b").reshape(L, 1, M),
        "proj_w": stack("proj_w").astype(bf16),
        "proj_b": stack("proj_b").reshape(L, 1, W),
        "ln_post_g": params["ln_post_g"].reshape(1, W),
        "ln_post_b": params["ln_post_b"].reshape(1, W),
        "vproj": params["proj"].astype(bf16),
    }


# ------------------------------ forward pass ----------------------------------
def feature_generator_clip_forward(x_nchw, params):
    """Mirrors CLIP ViT `visual.forward_full`: returns the full token-feature
    sequence (B, T, OUT_DIM). The whole network runs inside ONE fused Pallas
    kernel; only the NCHW patchify, batch-mask build, and weight repacking
    remain as XLA glue."""
    b, c, h, w = x_nchw.shape
    p = PATCH
    gh, gw = h // p, w // p
    t = gh * gw + 1
    bt = b * t

    # patchify: NCHW -> (B, gh*gw, C*p*p); prepend an all-zero "CLS patch" row
    # per batch, then flatten batch into the token axis.
    patches = x_nchw.reshape(b, c, gh, p, gw, p).transpose(0, 2, 4, 1, 3, 5)
    patches = patches.reshape(b, gh * gw, c * p * p)
    patches = jnp.concatenate(
        [jnp.zeros((b, 1, c * p * p), patches.dtype), patches], axis=1)
    patches = patches.reshape(bt, c * p * p)

    pk = _pack_params(params)
    clspos = jnp.tile(pk["clspos"], (b, 1))                 # (B*T, W)

    # additive block-diagonal mask: tokens only attend within their own image
    bid = jnp.repeat(jnp.arange(b, dtype=jnp.int32), t)
    mask = jnp.where(bid[:, None] == bid[None, :], 0.0, NEG_INF)
    mask = mask.astype(jnp.float32)

    args = (patches, clspos, mask, pk["conv_w"],
            pk["ln_pre_g"], pk["ln_pre_b"],
            pk["ln1_g"], pk["ln1_b"],
            pk["qk_w"], pk["qk_b"], pk["vo_w"], pk["vo_b"], pk["out_b"],
            pk["ln2_g"], pk["ln2_b"],
            pk["fc_w"], pk["fc_b"], pk["proj_w"], pk["proj_b"],
            pk["ln_post_g"], pk["ln_post_b"], pk["vproj"])

    # Single grid-less pallas_call: every operand (< 100 KiB total) is resident
    # whole in VMEM — fits trivially on v5e/v6e (128 MiB) and v7x (64 MiB).
    feats = pl.pallas_call(
        _clip_vit_kernel,
        out_shape=jax.ShapeDtypeStruct((bt, OUT_DIM), jnp.float32),
        in_specs=[pl.BlockSpec(memory_space=pltpu.MemorySpace.VMEM)
                  for _ in args],
        out_specs=pl.BlockSpec(memory_space=pltpu.MemorySpace.VMEM),
    )(*args)
    return feats.reshape(b, t, OUT_DIM)


# --------------------------------- main ---------------------------------------
if __name__ == "__main__":
    key = jax.random.PRNGKey(0)
    k_in, k_par = jax.random.split(key)
    x = jax.random.normal(k_in, (BATCH, IN_CH, IMG, IMG), dtype=jnp.float32)
    params = init_params(k_par)

    fwd = jax.jit(feature_generator_clip_forward)
    feat = fwd(x, params)
    jax.block_until_ready(feat)

    assert feat.shape == (BATCH, TOKENS, OUT_DIM)
    assert bool(jnp.all(jnp.isfinite(feat)))
    print("KERNEL_OK")
</pallas_src>

<mosaic_0001>
module attributes {stable_mosaic.version = 11 : i64} {
  func.func @_clip_vit_kernel(%arg0: memref<10x192xf32, #tpu.memory_space<vmem>>, %arg1: memref<10x32xf32, #tpu.memory_space<vmem>>, %arg2: memref<10x10xf32, #tpu.memory_space<vmem>>, %arg3: memref<192x32xbf16, #tpu.memory_space<vmem>>, %arg4: memref<1x32xf32, #tpu.memory_space<vmem>>, %arg5: memref<1x32xf32, #tpu.memory_space<vmem>>, %arg6: memref<2x1x32xf32, #tpu.memory_space<vmem>>, %arg7: memref<2x1x32xf32, #tpu.memory_space<vmem>>, %arg8: memref<2x2x4x32x8xbf16, #tpu.memory_space<vmem>>, %arg9: memref<2x2x4x1x8xf32, #tpu.memory_space<vmem>>, %arg10: memref<2x4x32x32xbf16, #tpu.memory_space<vmem>>, %arg11: memref<2x4x1x32xf32, #tpu.memory_space<vmem>>, %arg12: memref<2x1x32xf32, #tpu.memory_space<vmem>>, %arg13: memref<2x1x32xf32, #tpu.memory_space<vmem>>, %arg14: memref<2x1x32xf32, #tpu.memory_space<vmem>>, %arg15: memref<2x32x128xbf16, #tpu.memory_space<vmem>>, %arg16: memref<2x1x128xf32, #tpu.memory_space<vmem>>, %arg17: memref<2x128x32xbf16, #tpu.memory_space<vmem>>, %arg18: memref<2x1x32xf32, #tpu.memory_space<vmem>>, %arg19: memref<1x32xf32, #tpu.memory_space<vmem>>, %arg20: memref<1x32xf32, #tpu.memory_space<vmem>>, %arg21: memref<32x16xbf16, #tpu.memory_space<vmem>>, %arg22: memref<10x16xf32, #tpu.memory_space<vmem>>) attributes {dimension_semantics = [], scalar_prefetch = 0 : i64, scratch_operands = 0 : i64, tpu.core_type = #tpu.core_type<tc>} {
    %c0 = arith.constant 0 : index
    %c0_0 = arith.constant 0 : index
    %0 = vector.load %arg2[%c0, %c0_0] : memref<10x10xf32, #tpu.memory_space<vmem>>, vector<10x10xf32>
    %c0_1 = arith.constant 0 : index
    %c0_2 = arith.constant 0 : index
    %1 = vector.load %arg0[%c0_1, %c0_2] : memref<10x192xf32, #tpu.memory_space<vmem>>, vector<10x192xf32>
    %c0_3 = arith.constant 0 : index
    %c0_4 = arith.constant 0 : index
    %2 = vector.load %arg3[%c0_3, %c0_4] : memref<192x32xbf16, #tpu.memory_space<vmem>>, vector<192x32xbf16>
    %3 = arith.truncf %1 : vector<10x192xf32> to vector<10x192xbf16>
    %cst = arith.constant dense<0.000000e+00> : vector<10x32xf32>
    %4 = tpu.matmul %3, %2, %cst {dimension_numbers = #tpu.dot_dimension_numbers<[1], [0], [0], [1], [0, 0, 1, 1], [], []>} : vector<10x192xbf16>, vector<192x32xbf16>, vector<10x32xf32> -> vector<10x32xf32>
    %c0_5 = arith.constant 0 : index
    %c0_6 = arith.constant 0 : index
    %5 = vector.load %arg1[%c0_5, %c0_6] : memref<10x32xf32, #tpu.memory_space<vmem>>, vector<10x32xf32>
    %6 = arith.addf %4, %5 : vector<10x32xf32>
    %c0_7 = arith.constant 0 : index
    %c0_8 = arith.constant 0 : index
    %7 = vector.load %arg4[%c0_7, %c0_8] : memref<1x32xf32, #tpu.memory_space<vmem>>, vector<1x32xf32>
    %c0_9 = arith.constant 0 : index
    %c0_10 = arith.constant 0 : index
    %8 = vector.load %arg5[%c0_9, %c0_10] : memref<1x32xf32, #tpu.memory_space<vmem>>, vector<1x32xf32>
    %cst_11 = arith.constant dense<0.000000e+00> : vector<10xf32>
    %9 = vector.multi_reduction <add>, %6, %cst_11 [1] : vector<10x32xf32> to vector<10xf32>
    %10 = vector.shape_cast %9 : vector<10xf32> to vector<10x1xf32>
    %cst_12 = arith.constant 3.200000e+01 : f32
    %11 = vector.broadcast %cst_12 : f32 to vector<10x1xf32>
    %12 = arith.divf %10, %11 : vector<10x1xf32>
    %13 = vector.broadcast %12 : vector<10x1xf32> to vector<10x32xf32>
    %14 = arith.subf %6, %13 : vector<10x32xf32>
    %15 = arith.mulf %14, %14 : vector<10x32xf32>
    %cst_13 = arith.constant dense<0.000000e+00> : vector<10xf32>
    %16 = vector.multi_reduction <add>, %15, %cst_13 [1] : vector<10x32xf32> to vector<10xf32>
    %17 = vector.shape_cast %16 : vector<10xf32> to vector<10x1xf32>
    %cst_14 = arith.constant 3.200000e+01 : f32
    %18 = vector.broadcast %cst_14 : f32 to vector<10x1xf32>
    %19 = arith.divf %17, %18 : vector<10x1xf32>
    %20 = vector.broadcast %12 : vector<10x1xf32> to vector<10x32xf32>
    %21 = arith.subf %6, %20 : vector<10x32xf32>
    %cst_15 = arith.constant 9.99999974E-6 : f32
    %22 = vector.broadcast %cst_15 : f32 to vector<10x1xf32>
    %23 = arith.addf %19, %22 : vector<10x1xf32>
    %24 = math.rsqrt %23 : vector<10x1xf32>
    %25 = vector.broadcast %24 : vector<10x1xf32> to vector<10x32xf32>
    %26 = arith.mulf %21, %25 : vector<10x32xf32>
    %27 = vector.broadcast %7 : vector<1x32xf32> to vector<10x32xf32>
    %28 = arith.mulf %26, %27 : vector<10x32xf32>
    %29 = vector.broadcast %8 : vector<1x32xf32> to vector<10x32xf32>
    %30 = arith.addf %28, %29 : vector<10x32xf32>
    %c0_16 = arith.constant 0 : index
    %c0_17 = arith.constant 0 : index
    %c0_18 = arith.constant 0 : index
    %31 = vector.load %arg6[%c0_16, %c0_17, %c0_18] : memref<2x1x32xf32, #tpu.memory_space<vmem>>, vector<1x1x32xf32>
    %32 = vector.shape_cast %31 : vector<1x1x32xf32> to vector<1x32xf32>
    %c0_19 = arith.constant 0 : index
    %c0_20 = arith.constant 0 : index
    %c0_21 = arith.constant 0 : index
    %33 = vector.load %arg7[%c0_19, %c0_20, %c0_21] : memref<2x1x32xf32, #tpu.memory_space<vmem>>, vector<1x1x32xf32>
    %34 = vector.shape_cast %33 : vector<1x1x32xf32> to vector<1x32xf32>
    %cst_22 = arith.constant dense<0.000000e+00> : vector<10xf32>
    %35 = vector.multi_reduction <add>, %30, %cst_22 [1] : vector<10x32xf32> to vector<10xf32>
    %36 = vector.shape_cast %35 : vector<10xf32> to vector<10x1xf32>
    %cst_23 = arith.constant 3.200000e+01 : f32
    %37 = vector.broadcast %cst_23 : f32 to vector<10x1xf32>
    %38 = arith.divf %36, %37 : vector<10x1xf32>
    %39 = vector.broadcast %38 : vector<10x1xf32> to vector<10x32xf32>
    %40 = arith.subf %30, %39 : vector<10x32xf32>
    %41 = arith.mulf %40, %40 : vector<10x32xf32>
    %cst_24 = arith.constant dense<0.000000e+00> : vector<10xf32>
    %42 = vector.multi_reduction <add>, %41, %cst_24 [1] : vector<10x32xf32> to vector<10xf32>
    %43 = vector.shape_cast %42 : vector<10xf32> to vector<10x1xf32>
    %cst_25 = arith.constant 3.200000e+01 : f32
    %44 = vector.broadcast %cst_25 : f32 to vector<10x1xf32>
    %45 = arith.divf %43, %44 : vector<10x1xf32>
    %46 = vector.broadcast %38 : vector<10x1xf32> to vector<10x32xf32>
    %47 = arith.subf %30, %46 : vector<10x32xf32>
    %cst_26 = arith.constant 9.99999974E-6 : f32
    %48 = vector.broadcast %cst_26 : f32 to vector<10x1xf32>
    %49 = arith.addf %45, %48 : vector<10x1xf32>
    %50 = math.rsqrt %49 : vector<10x1xf32>
    %51 = vector.broadcast %50 : vector<10x1xf32> to vector<10x32xf32>
    %52 = arith.mulf %47, %51 : vector<10x32xf32>
    %53 = vector.broadcast %32 : vector<1x32xf32> to vector<10x32xf32>
    %54 = arith.mulf %52, %53 : vector<10x32xf32>
    %55 = vector.broadcast %34 : vector<1x32xf32> to vector<10x32xf32>
    %56 = arith.addf %54, %55 : vector<10x32xf32>
    %cst_27 = arith.constant 0.000000e+00 : f32
    %57 = vector.broadcast %cst_27 : f32 to vector<10x32xf32>
    %c0_28 = arith.constant 0 : index
    %c0_29 = arith.constant 0 : index
    %c0_30 = arith.constant 0 : index
    %c0_31 = arith.constant 0 : index
    %c0_32 = arith.constant 0 : index
    %58 = vector.load %arg8[%c0_28, %c0_29, %c0_30, %c0_31, %c0_32] : memref<2x2x4x32x8xbf16, #tpu.memory_space<vmem>>, vector<1x1x1x32x8xbf16>
    %59 = vector.shape_cast %58 : vector<1x1x1x32x8xbf16> to vector<32x8xbf16>
    %60 = arith.truncf %56 : vector<10x32xf32> to vector<10x32xbf16>
    %cst_33 = arith.constant dense<0.000000e+00> : vector<10x8xf32>
    %61 = tpu.matmul %60, %59, %cst_33 {dimension_numbers = #tpu.dot_dimension_numbers<[1], [0], [0], [1], [0, 0, 1, 1], [], []>} : vector<10x32xbf16>, vector<32x8xbf16>, vector<10x8xf32> -> vector<10x8xf32>
    %c0_34 = arith.constant 0 : index
    %c0_35 = arith.constant 0 : index
    %c0_36 = arith.constant 0 : index
    %c0_37 = arith.constant 0 : index
    %c0_38 = arith.constant 0 : index
    %62 = vector.load %arg9[%c0_34, %c0_35, %c0_36, %c0_37, %c0_38] : memref<2x2x4x1x8xf32, #tpu.memory_space<vmem>>, vector<1x1x1x1x8xf32>
    %63 = vector.shape_cast %62 : vector<1x1x1x1x8xf32> to vector<1x8xf32>
    %64 = vector.broadcast %63 : vector<1x8xf32> to vector<10x8xf32>
    %65 = arith.addf %61, %64 : vector<10x8xf32>
    %c0_39 = arith.constant 0 : index
    %c1 = arith.constant 1 : index
    %c0_40 = arith.constant 0 : index
    %c0_41 = arith.constant 0 : index
    %c0_42 = arith.constant 0 : index
    %66 = vector.load %arg8[%c0_39, %c1, %c0_40, %c0_41, %c0_42] : memref<2x2x4x32x8xbf16, #tpu.memory_space<vmem>>, vector<1x1x1x32x8xbf16>
    %67 = vector.shape_cast %66 : vector<1x1x1x32x8xbf16> to vector<32x8xbf16>
    %68 = arith.truncf %56 : vector<10x32xf32> to vector<10x32xbf16>
    %cst_43 = arith.constant dense<0.000000e+00> : vector<10x8xf32>
    %69 = tpu.matmul %68, %67, %cst_43 {dimension_numbers = #tpu.dot_dimension_numbers<[1], [0], [0], [1], [0, 0, 1, 1], [], []>} : vector<10x32xbf16>, vector<32x8xbf16>, vector<10x8xf32> -> vector<10x8xf32>
    %c0_44 = arith.constant 0 : index
    %c1_45 = arith.constant 1 : index
    %c0_46 = arith.constant 0 : index
    %c0_47 = arith.constant 0 : index
    %c0_48 = arith.constant 0 : index
    %70 = vector.load %arg9[%c0_44, %c1_45, %c0_46, %c0_47, %c0_48] : memref<2x2x4x1x8xf32, #tpu.memory_space<vmem>>, vector<1x1x1x1x8xf32>
    %71 = vector.shape_cast %70 : vector<1x1x1x1x8xf32> to vector<1x8xf32>
    %72 = vector.broadcast %71 : vector<1x8xf32> to vector<10x8xf32>
    %73 = arith.addf %69, %72 : vector<10x8xf32>
    %c0_49 = arith.constant 0 : index
    %c0_50 = arith.constant 0 : index
    %c0_51 = arith.constant 0 : index
    %c0_52 = arith.constant 0 : index
    %74 = vector.load %arg10[%c0_49, %c0_50, %c0_51, %c0_52] : memref<2x4x32x32xbf16, #tpu.memory_space<vmem>>, vector<1x1x32x32xbf16>
    %75 = vector.shape_cast %74 : vector<1x1x32x32xbf16> to vector<32x32xbf16>
    %76 = arith.truncf %56 : vector<10x32xf32> to vector<10x32xbf16>
    %cst_53 = arith.constant dense<0.000000e+00> : vector<10x32xf32>
    %77 = tpu.matmul %76, %75, %cst_53 {dimension_numbers = #tpu.dot_dimension_numbers<[1], [0], [0], [1], [0, 0, 1, 1], [], []>} : vector<10x32xbf16>, vector<32x32xbf16>, vector<10x32xf32> -> vector<10x32xf32>
    %c0_54 = arith.constant 0 : index
    %c0_55 = arith.constant 0 : index
    %c0_56 = arith.constant 0 : index
    %c0_57 = arith.constant 0 : index
    %78 = vector.load %arg11[%c0_54, %c0_55, %c0_56, %c0_57] : memref<2x4x1x32xf32, #tpu.memory_space<vmem>>, vector<1x1x1x32xf32>
    %79 = vector.shape_cast %78 : vector<1x1x1x32xf32> to vector<1x32xf32>
    %80 = vector.broadcast %79 : vector<1x32xf32> to vector<10x32xf32>
    %81 = arith.addf %77, %80 : vector<10x32xf32>
    %cst_58 = arith.constant dense<0.000000e+00> : vector<10x10xf32>
    %82 = tpu.matmul %65, %73, %cst_58 {dimension_numbers = #tpu.dot_dimension_numbers<[1], [1], [0], [0], [0, 0, 1, 0], [], []>} : vector<10x8xf32>, vector<10x8xf32>, vector<10x10xf32> -> vector<10x10xf32>
    %cst_59 = arith.constant 0.353553385 : f32
    %83 = vector.broadcast %cst_59 : f32 to vector<10x10xf32>
    %84 = arith.mulf %82, %83 : vector<10x10xf32>
    %85 = arith.addf %84, %0 : vector<10x10xf32>
    %cst_60 = arith.constant dense<0xFF800000> : vector<10xf32>
    %86 = vector.multi_reduction <maximumf>, %85, %cst_60 [1] : vector<10x10xf32> to vector<10xf32>
    %87 = vector.shape_cast %86 : vector<10xf32> to vector<10x1xf32>
    %88 = vector.broadcast %87 : vector<10x1xf32> to vector<10x10xf32>
    %89 = arith.subf %85, %88 : vector<10x10xf32>
    %90 = math.exp %89 : vector<10x10xf32>
    %cst_61 = arith.constant dense<0.000000e+00> : vector<10xf32>
    %91 = vector.multi_reduction <add>, %90, %cst_61 [1] : vector<10x10xf32> to vector<10xf32>
    %92 = vector.shape_cast %91 : vector<10xf32> to vector<10x1xf32>
    %93 = tpu.reciprocal %92 {approx = true} : vector<10x1xf32> -> vector<10x1xf32>
    %94 = vector.broadcast %93 : vector<10x1xf32> to vector<10x10xf32>
    %95 = arith.mulf %90, %94 : vector<10x10xf32>
    %cst_62 = arith.constant dense<0.000000e+00> : vector<10x32xf32>
    %96 = tpu.matmul %95, %81, %cst_62 {dimension_numbers = #tpu.dot_dimension_numbers<[1], [0], [0], [1], [0, 0, 1, 1], [], []>} : vector<10x10xf32>, vector<10x32xf32>, vector<10x32xf32> -> vector<10x32xf32>
    %97 = arith.addf %57, %96 : vector<10x32xf32>
    %c0_63 = arith.constant 0 : index
    %c0_64 = arith.constant 0 : index
    %c1_65 = arith.constant 1 : index
    %c0_66 = arith.constant 0 : index
    %c0_67 = arith.constant 0 : index
    %98 = vector.load %arg8[%c0_63, %c0_64, %c1_65, %c0_66, %c0_67] : memref<2x2x4x32x8xbf16, #tpu.memory_space<vmem>>, vector<1x1x1x32x8xbf16>
    %99 = vector.shape_cast %98 : vector<1x1x1x32x8xbf16> to vector<32x8xbf16>
    %100 = arith.truncf %56 : vector<10x32xf32> to vector<10x32xbf16>
    %cst_68 = arith.constant dense<0.000000e+00> : vector<10x8xf32>
    %101 = tpu.matmul %100, %99, %cst_68 {dimension_numbers = #tpu.dot_dimension_numbers<[1], [0], [0], [1], [0, 0, 1, 1], [], []>} : vector<10x32xbf16>, vector<32x8xbf16>, vector<10x8xf32> -> vector<10x8xf32>
    %c0_69 = arith.constant 0 : index
    %c0_70 = arith.constant 0 : index
    %c1_71 = arith.constant 1 : index
    %c0_72 = arith.constant 0 : index
    %c0_73 = arith.constant 0 : index
    %102 = vector.load %arg9[%c0_69, %c0_70, %c1_71, %c0_72, %c0_73] : memref<2x2x4x1x8xf32, #tpu.memory_space<vmem>>, vector<1x1x1x1x8xf32>
    %103 = vector.shape_cast %102 : vector<1x1x1x1x8xf32> to vector<1x8xf32>
    %104 = vector.broadcast %103 : vector<1x8xf32> to vector<10x8xf32>
    %105 = arith.addf %101, %104 : vector<10x8xf32>
    %c0_74 = arith.constant 0 : index
    %c1_75 = arith.constant 1 : index
    %c1_76 = arith.constant 1 : index
    %c0_77 = arith.constant 0 : index
    %c0_78 = arith.constant 0 : index
    %106 = vector.load %arg8[%c0_74, %c1_75, %c1_76, %c0_77, %c0_78] : memref<2x2x4x32x8xbf16, #tpu.memory_space<vmem>>, vector<1x1x1x32x8xbf16>
    %107 = vector.shape_cast %106 : vector<1x1x1x32x8xbf16> to vector<32x8xbf16>
    %108 = arith.truncf %56 : vector<10x32xf32> to vector<10x32xbf16>
    %cst_79 = arith.constant dense<0.000000e+00> : vector<10x8xf32>
    %109 = tpu.matmul %108, %107, %cst_79 {dimension_numbers = #tpu.dot_dimension_numbers<[1], [0], [0], [1], [0, 0, 1, 1], [], []>} : vector<10x32xbf16>, vector<32x8xbf16>, vector<10x8xf32> -> vector<10x8xf32>
    %c0_80 = arith.constant 0 : index
    %c1_81 = arith.constant 1 : index
    %c1_82 = arith.constant 1 : index
    %c0_83 = arith.constant 0 : index
    %c0_84 = arith.constant 0 : index
    %110 = vector.load %arg9[%c0_80, %c1_81, %c1_82, %c0_83, %c0_84] : memref<2x2x4x1x8xf32, #tpu.memory_space<vmem>>, vector<1x1x1x1x8xf32>
    %111 = vector.shape_cast %110 : vector<1x1x1x1x8xf32> to vector<1x8xf32>
    %112 = vector.broadcast %111 : vector<1x8xf32> to vector<10x8xf32>
    %113 = arith.addf %109, %112 : vector<10x8xf32>
    %c0_85 = arith.constant 0 : index
    %c1_86 = arith.constant 1 : index
    %c0_87 = arith.constant 0 : index
    %c0_88 = arith.constant 0 : index
    %114 = vector.load %arg10[%c0_85, %c1_86, %c0_87, %c0_88] : memref<2x4x32x32xbf16, #tpu.memory_space<vmem>>, vector<1x1x32x32xbf16>
    %115 = vector.shape_cast %114 : vector<1x1x32x32xbf16> to vector<32x32xbf16>
    %116 = arith.truncf %56 : vector<10x32xf32> to vector<10x32xbf16>
    %cst_89 = arith.constant dense<0.000000e+00> : vector<10x32xf32>
    %117 = tpu.matmul %116, %115, %cst_89 {dimension_numbers = #tpu.dot_dimension_numbers<[1], [0], [0], [1], [0, 0, 1, 1], [], []>} : vector<10x32xbf16>, vector<32x32xbf16>, vector<10x32xf32> -> vector<10x32xf32>
    %c0_90 = arith.constant 0 : index
    %c1_91 = arith.constant 1 : index
    %c0_92 = arith.constant 0 : index
    %c0_93 = arith.constant 0 : index
    %118 = vector.load %arg11[%c0_90, %c1_91, %c0_92, %c0_93] : memref<2x4x1x32xf32, #tpu.memory_space<vmem>>, vector<1x1x1x32xf32>
    %119 = vector.shape_cast %118 : vector<1x1x1x32xf32> to vector<1x32xf32>
    %120 = vector.broadcast %119 : vector<1x32xf32> to vector<10x32xf32>
    %121 = arith.addf %117, %120 : vector<10x32xf32>
    %cst_94 = arith.constant dense<0.000000e+00> : vector<10x10xf32>
    %122 = tpu.matmul %105, %113, %cst_94 {dimension_numbers = #tpu.dot_dimension_numbers<[1], [1], [0], [0], [0, 0, 1, 0], [], []>} : vector<10x8xf32>, vector<10x8xf32>, vector<10x10xf32> -> vector<10x10xf32>
    %cst_95 = arith.constant 0.353553385 : f32
    %123 = vector.broadcast %cst_95 : f32 to vector<10x10xf32>
    %124 = arith.mulf %122, %123 : vector<10x10xf32>
    %125 = arith.addf %124, %0 : vector<10x10xf32>
    %cst_96 = arith.constant dense<0xFF800000> : vector<10xf32>
    %126 = vector.multi_reduction <maximumf>, %125, %cst_96 [1] : vector<10x10xf32> to vector<10xf32>
    %127 = vector.shape_cast %126 : vector<10xf32> to vector<10x1xf32>
    %128 = vector.broadcast %127 : vector<10x1xf32> to vector<10x10xf32>
    %129 = arith.subf %125, %128 : vector<10x10xf32>
    %130 = math.exp %129 : vector<10x10xf32>
    %cst_97 = arith.constant dense<0.000000e+00> : vector<10xf32>
    %131 = vector.multi_reduction <add>, %130, %cst_97 [1] : vector<10x10xf32> to vector<10xf32>
    %132 = vector.shape_cast %131 : vector<10xf32> to vector<10x1xf32>
    %133 = tpu.reciprocal %132 {approx = true} : vector<10x1xf32> -> vector<10x1xf32>
    %134 = vector.broadcast %133 : vector<10x1xf32> to vector<10x10xf32>
    %135 = arith.mulf %130, %134 : vector<10x10xf32>
    %cst_98 = arith.constant dense<0.000000e+00> : vector<10x32xf32>
    %136 = tpu.matmul %135, %121, %cst_98 {dimension_numbers = #tpu.dot_dimension_numbers<[1], [0], [0], [1], [0, 0, 1, 1], [], []>} : vector<10x10xf32>, vector<10x32xf32>, vector<10x32xf32> -> vector<10x32xf32>
    %137 = arith.addf %97, %136 : vector<10x32xf32>
    %c0_99 = arith.constant 0 : index
    %c0_100 = arith.constant 0 : index
    %c2 = arith.constant 2 : index
    %c0_101 = arith.constant 0 : index
    %c0_102 = arith.constant 0 : index
    %138 = vector.load %arg8[%c0_99, %c0_100, %c2, %c0_101, %c0_102] : memref<2x2x4x32x8xbf16, #tpu.memory_space<vmem>>, vector<1x1x1x32x8xbf16>
    %139 = vector.shape_cast %138 : vector<1x1x1x32x8xbf16> to vector<32x8xbf16>
    %140 = arith.truncf %56 : vector<10x32xf32> to vector<10x32xbf16>
    %cst_103 = arith.constant dense<0.000000e+00> : vector<10x8xf32>
    %141 = tpu.matmul %140, %139, %cst_103 {dimension_numbers = #tpu.dot_dimension_numbers<[1], [0], [0], [1], [0, 0, 1, 1], [], []>} : vector<10x32xbf16>, vector<32x8xbf16>, vector<10x8xf32> -> vector<10x8xf32>
    %c0_104 = arith.constant 0 : index
    %c0_105 = arith.constant 0 : index
    %c2_106 = arith.constant 2 : index
    %c0_107 = arith.constant 0 : index
    %c0_108 = arith.constant 0 : index
    %142 = vector.load %arg9[%c0_104, %c0_105, %c2_106, %c0_107, %c0_108] : memref<2x2x4x1x8xf32, #tpu.memory_space<vmem>>, vector<1x1x1x1x8xf32>
    %143 = vector.shape_cast %142 : vector<1x1x1x1x8xf32> to vector<1x8xf32>
    %144 = vector.broadcast %143 : vector<1x8xf32> to vector<10x8xf32>
    %145 = arith.addf %141, %144 : vector<10x8xf32>
    %c0_109 = arith.constant 0 : index
    %c1_110 = arith.constant 1 : index
    %c2_111 = arith.constant 2 : index
    %c0_112 = arith.constant 0 : index
    %c0_113 = arith.constant 0 : index
    %146 = vector.load %arg8[%c0_109, %c1_110, %c2_111, %c0_112, %c0_113] : memref<2x2x4x32x8xbf16, #tpu.memory_space<vmem>>, vector<1x1x1x32x8xbf16>
    %147 = vector.shape_cast %146 : vector<1x1x1x32x8xbf16> to vector<32x8xbf16>
    %148 = arith.truncf %56 : vector<10x32xf32> to vector<10x32xbf16>
    %cst_114 = arith.constant dense<0.000000e+00> : vector<10x8xf32>
    %149 = tpu.matmul %148, %147, %cst_114 {dimension_numbers = #tpu.dot_dimension_numbers<[1], [0], [0], [1], [0, 0, 1, 1], [], []>} : vector<10x32xbf16>, vector<32x8xbf16>, vector<10x8xf32> -> vector<10x8xf32>
    %c0_115 = arith.constant 0 : index
    %c1_116 = arith.constant 1 : index
    %c2_117 = arith.constant 2 : index
    %c0_118 = arith.constant 0 : index
    %c0_119 = arith.constant 0 : index
    %150 = vector.load %arg9[%c0_115, %c1_116, %c2_117, %c0_118, %c0_119] : memref<2x2x4x1x8xf32, #tpu.memory_space<vmem>>, vector<1x1x1x1x8xf32>
    %151 = vector.shape_cast %150 : vector<1x1x1x1x8xf32> to vector<1x8xf32>
    %152 = vector.broadcast %151 : vector<1x8xf32> to vector<10x8xf32>
    %153 = arith.addf %149, %152 : vector<10x8xf32>
    %c0_120 = arith.constant 0 : index
    %c2_121 = arith.constant 2 : index
    %c0_122 = arith.constant 0 : index
    %c0_123 = arith.constant 0 : index
    %154 = vector.load %arg10[%c0_120, %c2_121, %c0_122, %c0_123] : memref<2x4x32x32xbf16, #tpu.memory_space<vmem>>, vector<1x1x32x32xbf16>
    %155 = vector.shape_cast %154 : vector<1x1x32x32xbf16> to vector<32x32xbf16>
    %156 = arith.truncf %56 : vector<10x32xf32> to vector<10x32xbf16>
    %cst_124 = arith.constant dense<0.000000e+00> : vector<10x32xf32>
    %157 = tpu.matmul %156, %155, %cst_124 {dimension_numbers = #tpu.dot_dimension_numbers<[1], [0], [0], [1], [0, 0, 1, 1], [], []>} : vector<10x32xbf16>, vector<32x32xbf16>, vector<10x32xf32> -> vector<10x32xf32>
    %c0_125 = arith.constant 0 : index
    %c2_126 = arith.constant 2 : index
    %c0_127 = arith.constant 0 : index
    %c0_128 = arith.constant 0 : index
    %158 = vector.load %arg11[%c0_125, %c2_126, %c0_127, %c0_128] : memref<2x4x1x32xf32, #tpu.memory_space<vmem>>, vector<1x1x1x32xf32>
    %159 = vector.shape_cast %158 : vector<1x1x1x32xf32> to vector<1x32xf32>
    %160 = vector.broadcast %159 : vector<1x32xf32> to vector<10x32xf32>
    %161 = arith.addf %157, %160 : vector<10x32xf32>
    %cst_129 = arith.constant dense<0.000000e+00> : vector<10x10xf32>
    %162 = tpu.matmul %145, %153, %cst_129 {dimension_numbers = #tpu.dot_dimension_numbers<[1], [1], [0], [0], [0, 0, 1, 0], [], []>} : vector<10x8xf32>, vector<10x8xf32>, vector<10x10xf32> -> vector<10x10xf32>
    %cst_130 = arith.constant 0.353553385 : f32
    %163 = vector.broadcast %cst_130 : f32 to vector<10x10xf32>
    %164 = arith.mulf %162, %163 : vector<10x10xf32>
    %165 = arith.addf %164, %0 : vector<10x10xf32>
    %cst_131 = arith.constant dense<0xFF800000> : vector<10xf32>
    %166 = vector.multi_reduction <maximumf>, %165, %cst_131 [1] : vector<10x10xf32> to vector<10xf32>
    %167 = vector.shape_cast %166 : vector<10xf32> to vector<10x1xf32>
    %168 = vector.broadcast %167 : vector<10x1xf32> to vector<10x10xf32>
    %169 = arith.subf %165, %168 : vector<10x10xf32>
    %170 = math.exp %169 : vector<10x10xf32>
    %cst_132 = arith.constant dense<0.000000e+00> : vector<10xf32>
    %171 = vector.multi_reduction <add>, %170, %cst_132 [1] : vector<10x10xf32> to vector<10xf32>
    %172 = vector.shape_cast %171 : vector<10xf32> to vector<10x1xf32>
    %173 = tpu.reciprocal %172 {approx = true} : vector<10x1xf32> -> vector<10x1xf32>
    %174 = vector.broadcast %173 : vector<10x1xf32> to vector<10x10xf32>
    %175 = arith.mulf %170, %174 : vector<10x10xf32>
    %cst_133 = arith.constant dense<0.000000e+00> : vector<10x32xf32>
    %176 = tpu.matmul %175, %161, %cst_133 {dimension_numbers = #tpu.dot_dimension_numbers<[1], [0], [0], [1], [0, 0, 1, 1], [], []>} : vector<10x10xf32>, vector<10x32xf32>, vector<10x32xf32> -> vector<10x32xf32>
    %177 = arith.addf %137, %176 : vector<10x32xf32>
    %c0_134 = arith.constant 0 : index
    %c0_135 = arith.constant 0 : index
    %c3 = arith.constant 3 : index
    %c0_136 = arith.constant 0 : index
    %c0_137 = arith.constant 0 : index
    %178 = vector.load %arg8[%c0_134, %c0_135, %c3, %c0_136, %c0_137] : memref<2x2x4x32x8xbf16, #tpu.memory_space<vmem>>, vector<1x1x1x32x8xbf16>
    %179 = vector.shape_cast %178 : vector<1x1x1x32x8xbf16> to vector<32x8xbf16>
    %180 = arith.truncf %56 : vector<10x32xf32> to vector<10x32xbf16>
    %cst_138 = arith.constant dense<0.000000e+00> : vector<10x8xf32>
    %181 = tpu.matmul %180, %179, %cst_138 {dimension_numbers = #tpu.dot_dimension_numbers<[1], [0], [0], [1], [0, 0, 1, 1], [], []>} : vector<10x32xbf16>, vector<32x8xbf16>, vector<10x8xf32> -> vector<10x8xf32>
    %c0_139 = arith.constant 0 : index
    %c0_140 = arith.constant 0 : index
    %c3_141 = arith.constant 3 : index
    %c0_142 = arith.constant 0 : index
    %c0_143 = arith.constant 0 : index
    %182 = vector.load %arg9[%c0_139, %c0_140, %c3_141, %c0_142, %c0_143] : memref<2x2x4x1x8xf32, #tpu.memory_space<vmem>>, vector<1x1x1x1x8xf32>
    %183 = vector.shape_cast %182 : vector<1x1x1x1x8xf32> to vector<1x8xf32>
    %184 = vector.broadcast %183 : vector<1x8xf32> to vector<10x8xf32>
    %185 = arith.addf %181, %184 : vector<10x8xf32>
    %c0_144 = arith.constant 0 : index
    %c1_145 = arith.constant 1 : index
    %c3_146 = arith.constant 3 : index
    %c0_147 = arith.constant 0 : index
    %c0_148 = arith.constant 0 : index
    %186 = vector.load %arg8[%c0_144, %c1_145, %c3_146, %c0_147, %c0_148] : memref<2x2x4x32x8xbf16, #tpu.memory_space<vmem>>, vector<1x1x1x32x8xbf16>
    %187 = vector.shape_cast %186 : vector<1x1x1x32x8xbf16> to vector<32x8xbf16>
    %188 = arith.truncf %56 : vector<10x32xf32> to vector<10x32xbf16>
    %cst_149 = arith.constant dense<0.000000e+00> : vector<10x8xf32>
    %189 = tpu.matmul %188, %187, %cst_149 {dimension_numbers = #tpu.dot_dimension_numbers<[1], [0], [0], [1], [0, 0, 1, 1], [], []>} : vector<10x32xbf16>, vector<32x8xbf16>, vector<10x8xf32> -> vector<10x8xf32>
    %c0_150 = arith.constant 0 : index
    %c1_151 = arith.constant 1 : index
    %c3_152 = arith.constant 3 : index
    %c0_153 = arith.constant 0 : index
    %c0_154 = arith.constant 0 : index
    %190 = vector.load %arg9[%c0_150, %c1_151, %c3_152, %c0_153, %c0_154] : memref<2x2x4x1x8xf32, #tpu.memory_space<vmem>>, vector<1x1x1x1x8xf32>
    %191 = vector.shape_cast %190 : vector<1x1x1x1x8xf32> to vector<1x8xf32>
    %192 = vector.broadcast %191 : vector<1x8xf32> to vector<10x8xf32>
    %193 = arith.addf %189, %192 : vector<10x8xf32>
    %c0_155 = arith.constant 0 : index
    %c3_156 = arith.constant 3 : index
    %c0_157 = arith.constant 0 : index
    %c0_158 = arith.constant 0 : index
    %194 = vector.load %arg10[%c0_155, %c3_156, %c0_157, %c0_158] : memref<2x4x32x32xbf16, #tpu.memory_space<vmem>>, vector<1x1x32x32xbf16>
    %195 = vector.shape_cast %194 : vector<1x1x32x32xbf16> to vector<32x32xbf16>
    %196 = arith.truncf %56 : vector<10x32xf32> to vector<10x32xbf16>
    %cst_159 = arith.constant dense<0.000000e+00> : vector<10x32xf32>
    %197 = tpu.matmul %196, %195, %cst_159 {dimension_numbers = #tpu.dot_dimension_numbers<[1], [0], [0], [1], [0, 0, 1, 1], [], []>} : vector<10x32xbf16>, vector<32x32xbf16>, vector<10x32xf32> -> vector<10x32xf32>
    %c0_160 = arith.constant 0 : index
    %c3_161 = arith.constant 3 : index
    %c0_162 = arith.constant 0 : index
    %c0_163 = arith.constant 0 : index
    %198 = vector.load %arg11[%c0_160, %c3_161, %c0_162, %c0_163] : memref<2x4x1x32xf32, #tpu.memory_space<vmem>>, vector<1x1x1x32xf32>
    %199 = vector.shape_cast %198 : vector<1x1x1x32xf32> to vector<1x32xf32>
    %200 = vector.broadcast %199 : vector<1x32xf32> to vector<10x32xf32>
    %201 = arith.addf %197, %200 : vector<10x32xf32>
    %cst_164 = arith.constant dense<0.000000e+00> : vector<10x10xf32>
    %202 = tpu.matmul %185, %193, %cst_164 {dimension_numbers = #tpu.dot_dimension_numbers<[1], [1], [0], [0], [0, 0, 1, 0], [], []>} : vector<10x8xf32>, vector<10x8xf32>, vector<10x10xf32> -> vector<10x10xf32>
    %cst_165 = arith.constant 0.353553385 : f32
    %203 = vector.broadcast %cst_165 : f32 to vector<10x10xf32>
    %204 = arith.mulf %202, %203 : vector<10x10xf32>
    %205 = arith.addf %204, %0 : vector<10x10xf32>
    %cst_166 = arith.constant dense<0xFF800000> : vector<10xf32>
    %206 = vector.multi_reduction <maximumf>, %205, %cst_166 [1] : vector<10x10xf32> to vector<10xf32>
    %207 = vector.shape_cast %206 : vector<10xf32> to vector<10x1xf32>
    %208 = vector.broadcast %207 : vector<10x1xf32> to vector<10x10xf32>
    %209 = arith.subf %205, %208 : vector<10x10xf32>
    %210 = math.exp %209 : vector<10x10xf32>
    %cst_167 = arith.constant dense<0.000000e+00> : vector<10xf32>
    %211 = vector.multi_reduction <add>, %210, %cst_167 [1] : vector<10x10xf32> to vector<10xf32>
    %212 = vector.shape_cast %211 : vector<10xf32> to vector<10x1xf32>
    %213 = tpu.reciprocal %212 {approx = true} : vector<10x1xf32> -> vector<10x1xf32>
    %214 = vector.broadcast %213 : vector<10x1xf32> to vector<10x10xf32>
    %215 = arith.mulf %210, %214 : vector<10x10xf32>
    %cst_168 = arith.constant dense<0.000000e+00> : vector<10x32xf32>
    %216 = tpu.matmul %215, %201, %cst_168 {dimension_numbers = #tpu.dot_dimension_numbers<[1], [0], [0], [1], [0, 0, 1, 1], [], []>} : vector<10x10xf32>, vector<10x32xf32>, vector<10x32xf32> -> vector<10x32xf32>
    %217 = arith.addf %177, %216 : vector<10x32xf32>
    %218 = arith.addf %30, %217 : vector<10x32xf32>
    %c0_169 = arith.constant 0 : index
    %c0_170 = arith.constant 0 : index
    %c0_171 = arith.constant 0 : index
    %219 = vector.load %arg12[%c0_169, %c0_170, %c0_171] : memref<2x1x32xf32, #tpu.memory_space<vmem>>, vector<1x1x32xf32>
    %220 = vector.shape_cast %219 : vector<1x1x32xf32> to vector<1x32xf32>
    %221 = vector.broadcast %220 : vector<1x32xf32> to vector<10x32xf32>
    %222 = arith.addf %218, %221 : vector<10x32xf32>
    %c0_172 = arith.constant 0 : index
    %c0_173 = arith.constant 0 : index
    %c0_174 = arith.constant 0 : index
    %223 = vector.load %arg13[%c0_172, %c0_173, %c0_174] : memref<2x1x32xf32, #tpu.memory_space<vmem>>, vector<1x1x32xf32>
    %224 = vector.shape_cast %223 : vector<1x1x32xf32> to vector<1x32xf32>
    %c0_175 = arith.constant 0 : index
    %c0_176 = arith.constant 0 : index
    %c0_177 = arith.constant 0 : index
    %225 = vector.load %arg14[%c0_175, %c0_176, %c0_177] : memref<2x1x32xf32, #tpu.memory_space<vmem>>, vector<1x1x32xf32>
    %226 = vector.shape_cast %225 : vector<1x1x32xf32> to vector<1x32xf32>
    %cst_178 = arith.constant dense<0.000000e+00> : vector<10xf32>
    %227 = vector.multi_reduction <add>, %222, %cst_178 [1] : vector<10x32xf32> to vector<10xf32>
    %228 = vector.shape_cast %227 : vector<10xf32> to vector<10x1xf32>
    %cst_179 = arith.constant 3.200000e+01 : f32
    %229 = vector.broadcast %cst_179 : f32 to vector<10x1xf32>
    %230 = arith.divf %228, %229 : vector<10x1xf32>
    %231 = vector.broadcast %230 : vector<10x1xf32> to vector<10x32xf32>
    %232 = arith.subf %222, %231 : vector<10x32xf32>
    %233 = arith.mulf %232, %232 : vector<10x32xf32>
    %cst_180 = arith.constant dense<0.000000e+00> : vector<10xf32>
    %234 = vector.multi_reduction <add>, %233, %cst_180 [1] : vector<10x32xf32> to vector<10xf32>
    %235 = vector.shape_cast %234 : vector<10xf32> to vector<10x1xf32>
    %cst_181 = arith.constant 3.200000e+01 : f32
    %236 = vector.broadcast %cst_181 : f32 to vector<10x1xf32>
    %237 = arith.divf %235, %236 : vector<10x1xf32>
    %238 = vector.broadcast %230 : vector<10x1xf32> to vector<10x32xf32>
    %239 = arith.subf %222, %238 : vector<10x32xf32>
    %cst_182 = arith.constant 9.99999974E-6 : f32
    %240 = vector.broadcast %cst_182 : f32 to vector<10x1xf32>
    %241 = arith.addf %237, %240 : vector<10x1xf32>
    %242 = math.rsqrt %241 : vector<10x1xf32>
    %243 = vector.broadcast %242 : vector<10x1xf32> to vector<10x32xf32>
    %244 = arith.mulf %239, %243 : vector<10x32xf32>
    %245 = vector.broadcast %224 : vector<1x32xf32> to vector<10x32xf32>
    %246 = arith.mulf %244, %245 : vector<10x32xf32>
    %247 = vector.broadcast %226 : vector<1x32xf32> to vector<10x32xf32>
    %248 = arith.addf %246, %247 : vector<10x32xf32>
    %c0_183 = arith.constant 0 : index
    %c0_184 = arith.constant 0 : index
    %c0_185 = arith.constant 0 : index
    %249 = vector.load %arg15[%c0_183, %c0_184, %c0_185] : memref<2x32x128xbf16, #tpu.memory_space<vmem>>, vector<1x32x128xbf16>
    %250 = vector.shape_cast %249 : vector<1x32x128xbf16> to vector<32x128xbf16>
    %251 = arith.truncf %248 : vector<10x32xf32> to vector<10x32xbf16>
    %cst_186 = arith.constant dense<0.000000e+00> : vector<10x128xf32>
    %252 = tpu.matmul %251, %250, %cst_186 {dimension_numbers = #tpu.dot_dimension_numbers<[1], [0], [0], [1], [0, 0, 1, 1], [], []>} : vector<10x32xbf16>, vector<32x128xbf16>, vector<10x128xf32> -> vector<10x128xf32>
    %c0_187 = arith.constant 0 : index
    %c0_188 = arith.constant 0 : index
    %c0_189 = arith.constant 0 : index
    %253 = vector.load %arg16[%c0_187, %c0_188, %c0_189] : memref<2x1x128xf32, #tpu.memory_space<vmem>>, vector<1x1x128xf32>
    %254 = vector.shape_cast %253 : vector<1x1x128xf32> to vector<1x128xf32>
    %255 = vector.broadcast %254 : vector<1x128xf32> to vector<10x128xf32>
    %256 = arith.addf %252, %255 : vector<10x128xf32>
    %cst_190 = arith.constant 1.702000e+00 : f32
    %257 = vector.broadcast %cst_190 : f32 to vector<10x128xf32>
    %258 = arith.mulf %257, %256 : vector<10x128xf32>
    %259 = arith.negf %258 : vector<10x128xf32>
    %260 = math.exp %259 : vector<10x128xf32>
    %cst_191 = arith.constant 1.000000e+00 : f32
    %261 = vector.broadcast %cst_191 : f32 to vector<10x128xf32>
    %262 = arith.addf %261, %260 : vector<10x128xf32>
    %263 = arith.divf %261, %262 : vector<10x128xf32>
    %264 = arith.mulf %256, %263 : vector<10x128xf32>
    %c0_192 = arith.constant 0 : index
    %c0_193 = arith.constant 0 : index
    %c0_194 = arith.constant 0 : index
    %265 = vector.load %arg17[%c0_192, %c0_193, %c0_194] : memref<2x128x32xbf16, #tpu.memory_space<vmem>>, vector<1x128x32xbf16>
    %266 = vector.shape_cast %265 : vector<1x128x32xbf16> to vector<128x32xbf16>
    %267 = arith.truncf %264 : vector<10x128xf32> to vector<10x128xbf16>
    %cst_195 = arith.constant dense<0.000000e+00> : vector<10x32xf32>
    %268 = tpu.matmul %267, %266, %cst_195 {dimension_numbers = #tpu.dot_dimension_numbers<[1], [0], [0], [1], [0, 0, 1, 1], [], []>} : vector<10x128xbf16>, vector<128x32xbf16>, vector<10x32xf32> -> vector<10x32xf32>
    %269 = arith.addf %222, %268 : vector<10x32xf32>
    %c0_196 = arith.constant 0 : index
    %c0_197 = arith.constant 0 : index
    %c0_198 = arith.constant 0 : index
    %270 = vector.load %arg18[%c0_196, %c0_197, %c0_198] : memref<2x1x32xf32, #tpu.memory_space<vmem>>, vector<1x1x32xf32>
    %271 = vector.shape_cast %270 : vector<1x1x32xf32> to vector<1x32xf32>
    %272 = vector.broadcast %271 : vector<1x32xf32> to vector<10x32xf32>
    %273 = arith.addf %269, %272 : vector<10x32xf32>
    %c1_199 = arith.constant 1 : index
    %c0_200 = arith.constant 0 : index
    %c0_201 = arith.constant 0 : index
    %274 = vector.load %arg6[%c1_199, %c0_200, %c0_201] : memref<2x1x32xf32, #tpu.memory_space<vmem>>, vector<1x1x32xf32>
    %275 = vector.shape_cast %274 : vector<1x1x32xf32> to vector<1x32xf32>
    %c1_202 = arith.constant 1 : index
    %c0_203 = arith.constant 0 : index
    %c0_204 = arith.constant 0 : index
    %276 = vector.load %arg7[%c1_202, %c0_203, %c0_204] : memref<2x1x32xf32, #tpu.memory_space<vmem>>, vector<1x1x32xf32>
    %277 = vector.shape_cast %276 : vector<1x1x32xf32> to vector<1x32xf32>
    %cst_205 = arith.constant dense<0.000000e+00> : vector<10xf32>
    %278 = vector.multi_reduction <add>, %273, %cst_205 [1] : vector<10x32xf32> to vector<10xf32>
    %279 = vector.shape_cast %278 : vector<10xf32> to vector<10x1xf32>
    %cst_206 = arith.constant 3.200000e+01 : f32
    %280 = vector.broadcast %cst_206 : f32 to vector<10x1xf32>
    %281 = arith.divf %279, %280 : vector<10x1xf32>
    %282 = vector.broadcast %281 : vector<10x1xf32> to vector<10x32xf32>
    %283 = arith.subf %273, %282 : vector<10x32xf32>
    %284 = arith.mulf %283, %283 : vector<10x32xf32>
    %cst_207 = arith.constant dense<0.000000e+00> : vector<10xf32>
    %285 = vector.multi_reduction <add>, %284, %cst_207 [1] : vector<10x32xf32> to vector<10xf32>
    %286 = vector.shape_cast %285 : vector<10xf32> to vector<10x1xf32>
    %cst_208 = arith.constant 3.200000e+01 : f32
    %287 = vector.broadcast %cst_208 : f32 to vector<10x1xf32>
    %288 = arith.divf %286, %287 : vector<10x1xf32>
    %289 = vector.broadcast %281 : vector<10x1xf32> to vector<10x32xf32>
    %290 = arith.subf %273, %289 : vector<10x32xf32>
    %cst_209 = arith.constant 9.99999974E-6 : f32
    %291 = vector.broadcast %cst_209 : f32 to vector<10x1xf32>
    %292 = arith.addf %288, %291 : vector<10x1xf32>
    %293 = math.rsqrt %292 : vector<10x1xf32>
    %294 = vector.broadcast %293 : vector<10x1xf32> to vector<10x32xf32>
    %295 = arith.mulf %290, %294 : vector<10x32xf32>
    %296 = vector.broadcast %275 : vector<1x32xf32> to vector<10x32xf32>
    %297 = arith.mulf %295, %296 : vector<10x32xf32>
    %298 = vector.broadcast %277 : vector<1x32xf32> to vector<10x32xf32>
    %299 = arith.addf %297, %298 : vector<10x32xf32>
    %cst_210 = arith.constant 0.000000e+00 : f32
    %300 = vector.broadcast %cst_210 : f32 to vector<10x32xf32>
    %c1_211 = arith.constant 1 : index
    %c0_212 = arith.constant 0 : index
    %c0_213 = arith.constant 0 : index
    %c0_214 = arith.constant 0 : index
    %c0_215 = arith.constant 0 : index
    %301 = vector.load %arg8[%c1_211, %c0_212, %c0_213, %c0_214, %c0_215] : memref<2x2x4x32x8xbf16, #tpu.memory_space<vmem>>, vector<1x1x1x32x8xbf16>
    %302 = vector.shape_cast %301 : vector<1x1x1x32x8xbf16> to vector<32x8xbf16>
    %303 = arith.truncf %299 : vector<10x32xf32> to vector<10x32xbf16>
    %cst_216 = arith.constant dense<0.000000e+00> : vector<10x8xf32>
    %304 = tpu.matmul %303, %302, %cst_216 {dimension_numbers = #tpu.dot_dimension_numbers<[1], [0], [0], [1], [0, 0, 1, 1], [], []>} : vector<10x32xbf16>, vector<32x8xbf16>, vector<10x8xf32> -> vector<10x8xf32>
    %c1_217 = arith.constant 1 : index
    %c0_218 = arith.constant 0 : index
    %c0_219 = arith.constant 0 : index
    %c0_220 = arith.constant 0 : index
    %c0_221 = arith.constant 0 : index
    %305 = vector.load %arg9[%c1_217, %c0_218, %c0_219, %c0_220, %c0_221] : memref<2x2x4x1x8xf32, #tpu.memory_space<vmem>>, vector<1x1x1x1x8xf32>
    %306 = vector.shape_cast %305 : vector<1x1x1x1x8xf32> to vector<1x8xf32>
    %307 = vector.broadcast %306 : vector<1x8xf32> to vector<10x8xf32>
    %308 = arith.addf %304, %307 : vector<10x8xf32>
    %c1_222 = arith.constant 1 : index
    %c1_223 = arith.constant 1 : index
    %c0_224 = arith.constant 0 : index
    %c0_225 = arith.constant 0 : index
    %c0_226 = arith.constant 0 : index
    %309 = vector.load %arg8[%c1_222, %c1_223, %c0_224, %c0_225, %c0_226] : memref<2x2x4x32x8xbf16, #tpu.memory_space<vmem>>, vector<1x1x1x32x8xbf16>
    %310 = vector.shape_cast %309 : vector<1x1x1x32x8xbf16> to vector<32x8xbf16>
    %311 = arith.truncf %299 : vector<10x32xf32> to vector<10x32xbf16>
    %cst_227 = arith.constant dense<0.000000e+00> : vector<10x8xf32>
    %312 = tpu.matmul %311, %310, %cst_227 {dimension_numbers = #tpu.dot_dimension_numbers<[1], [0], [0], [1], [0, 0, 1, 1], [], []>} : vector<10x32xbf16>, vector<32x8xbf16>, vector<10x8xf32> -> vector<10x8xf32>
    %c1_228 = arith.constant 1 : index
    %c1_229 = arith.constant 1 : index
    %c0_230 = arith.constant 0 : index
    %c0_231 = arith.constant 0 : index
    %c0_232 = arith.constant 0 : index
    %313 = vector.load %arg9[%c1_228, %c1_229, %c0_230, %c0_231, %c0_232] : memref<2x2x4x1x8xf32, #tpu.memory_space<vmem>>, vector<1x1x1x1x8xf32>
    %314 = vector.shape_cast %313 : vector<1x1x1x1x8xf32> to vector<1x8xf32>
    %315 = vector.broadcast %314 : vector<1x8xf32> to vector<10x8xf32>
    %316 = arith.addf %312, %315 : vector<10x8xf32>
    %c1_233 = arith.constant 1 : index
    %c0_234 = arith.constant 0 : index
    %c0_235 = arith.constant 0 : index
    %c0_236 = arith.constant 0 : index
    %317 = vector.load %arg10[%c1_233, %c0_234, %c0_235, %c0_236] : memref<2x4x32x32xbf16, #tpu.memory_space<vmem>>, vector<1x1x32x32xbf16>
    %318 = vector.shape_cast %317 : vector<1x1x32x32xbf16> to vector<32x32xbf16>
    %319 = arith.truncf %299 : vector<10x32xf32> to vector<10x32xbf16>
    %cst_237 = arith.constant dense<0.000000e+00> : vector<10x32xf32>
    %320 = tpu.matmul %319, %318, %cst_237 {dimension_numbers = #tpu.dot_dimension_numbers<[1], [0], [0], [1], [0, 0, 1, 1], [], []>} : vector<10x32xbf16>, vector<32x32xbf16>, vector<10x32xf32> -> vector<10x32xf32>
    %c1_238 = arith.constant 1 : index
    %c0_239 = arith.constant 0 : index
    %c0_240 = arith.constant 0 : index
    %c0_241 = arith.constant 0 : index
    %321 = vector.load %arg11[%c1_238, %c0_239, %c0_240, %c0_241] : memref<2x4x1x32xf32, #tpu.memory_space<vmem>>, vector<1x1x1x32xf32>
    %322 = vector.shape_cast %321 : vector<1x1x1x32xf32> to vector<1x32xf32>
    %323 = vector.broadcast %322 : vector<1x32xf32> to vector<10x32xf32>
    %324 = arith.addf %320, %323 : vector<10x32xf32>
    %cst_242 = arith.constant dense<0.000000e+00> : vector<10x10xf32>
    %325 = tpu.matmul %308, %316, %cst_242 {dimension_numbers = #tpu.dot_dimension_numbers<[1], [1], [0], [0], [0, 0, 1, 0], [], []>} : vector<10x8xf32>, vector<10x8xf32>, vector<10x10xf32> -> vector<10x10xf32>
    %cst_243 = arith.constant 0.353553385 : f32
    %326 = vector.broadcast %cst_243 : f32 to vector<10x10xf32>
    %327 = arith.mulf %325, %326 : vector<10x10xf32>
    %328 = arith.addf %327, %0 : vector<10x10xf32>
    %cst_244 = arith.constant dense<0xFF800000> : vector<10xf32>
    %329 = vector.multi_reduction <maximumf>, %328, %cst_244 [1] : vector<10x10xf32> to vector<10xf32>
    %330 = vector.shape_cast %329 : vector<10xf32> to vector<10x1xf32>
    %331 = vector.broadcast %330 : vector<10x1xf32> to vector<10x10xf32>
    %332 = arith.subf %328, %331 : vector<10x10xf32>
    %333 = math.exp %332 : vector<10x10xf32>
    %cst_245 = arith.constant dense<0.000000e+00> : vector<10xf32>
    %334 = vector.multi_reduction <add>, %333, %cst_245 [1] : vector<10x10xf32> to vector<10xf32>
    %335 = vector.shape_cast %334 : vector<10xf32> to vector<10x1xf32>
    %336 = tpu.reciprocal %335 {approx = true} : vector<10x1xf32> -> vector<10x1xf32>
    %337 = vector.broadcast %336 : vector<10x1xf32> to vector<10x10xf32>
    %338 = arith.mulf %333, %337 : vector<10x10xf32>
    %cst_246 = arith.constant dense<0.000000e+00> : vector<10x32xf32>
    %339 = tpu.matmul %338, %324, %cst_246 {dimension_numbers = #tpu.dot_dimension_numbers<[1], [0], [0], [1], [0, 0, 1, 1], [], []>} : vector<10x10xf32>, vector<10x32xf32>, vector<10x32xf32> -> vector<10x32xf32>
    %340 = arith.addf %300, %339 : vector<10x32xf32>
    %c1_247 = arith.constant 1 : index
    %c0_248 = arith.constant 0 : index
    %c1_249 = arith.constant 1 : index
    %c0_250 = arith.constant 0 : index
    %c0_251 = arith.constant 0 : index
    %341 = vector.load %arg8[%c1_247, %c0_248, %c1_249, %c0_250, %c0_251] : memref<2x2x4x32x8xbf16, #tpu.memory_space<vmem>>, vector<1x1x1x32x8xbf16>
    %342 = vector.shape_cast %341 : vector<1x1x1x32x8xbf16> to vector<32x8xbf16>
    %343 = arith.truncf %299 : vector<10x32xf32> to vector<10x32xbf16>
    %cst_252 = arith.constant dense<0.000000e+00> : vector<10x8xf32>
    %344 = tpu.matmul %343, %342, %cst_252 {dimension_numbers = #tpu.dot_dimension_numbers<[1], [0], [0], [1], [0, 0, 1, 1], [], []>} : vector<10x32xbf16>, vector<32x8xbf16>, vector<10x8xf32> -> vector<10x8xf32>
    %c1_253 = arith.constant 1 : index
    %c0_254 = arith.constant 0 : index
    %c1_255 = arith.constant 1 : index
    %c0_256 = arith.constant 0 : index
    %c0_257 = arith.constant 0 : index
    %345 = vector.load %arg9[%c1_253, %c0_254, %c1_255, %c0_256, %c0_257] : memref<2x2x4x1x8xf32, #tpu.memory_space<vmem>>, vector<1x1x1x1x8xf32>
    %346 = vector.shape_cast %345 : vector<1x1x1x1x8xf32> to vector<1x8xf32>
    %347 = vector.broadcast %346 : vector<1x8xf32> to vector<10x8xf32>
    %348 = arith.addf %344, %347 : vector<10x8xf32>
    %c1_258 = arith.constant 1 : index
    %c1_259 = arith.constant 1 : index
    %c1_260 = arith.constant 1 : index
    %c0_261 = arith.constant 0 : index
    %c0_262 = arith.constant 0 : index
    %349 = vector.load %arg8[%c1_258, %c1_259, %c1_260, %c0_261, %c0_262] : memref<2x2x4x32x8xbf16, #tpu.memory_space<vmem>>, vector<1x1x1x32x8xbf16>
    %350 = vector.shape_cast %349 : vector<1x1x1x32x8xbf16> to vector<32x8xbf16>
    %351 = arith.truncf %299 : vector<10x32xf32> to vector<10x32xbf16>
    %cst_263 = arith.constant dense<0.000000e+00> : vector<10x8xf32>
    %352 = tpu.matmul %351, %350, %cst_263 {dimension_numbers = #tpu.dot_dimension_numbers<[1], [0], [0], [1], [0, 0, 1, 1], [], []>} : vector<10x32xbf16>, vector<32x8xbf16>, vector<10x8xf32> -> vector<10x8xf32>
    %c1_264 = arith.constant 1 : index
    %c1_265 = arith.constant 1 : index
    %c1_266 = arith.constant 1 : index
    %c0_267 = arith.constant 0 : index
    %c0_268 = arith.constant 0 : index
    %353 = vector.load %arg9[%c1_264, %c1_265, %c1_266, %c0_267, %c0_268] : memref<2x2x4x1x8xf32, #tpu.memory_space<vmem>>, vector<1x1x1x1x8xf32>
    %354 = vector.shape_cast %353 : vector<1x1x1x1x8xf32> to vector<1x8xf32>
    %355 = vector.broadcast %354 : vector<1x8xf32> to vector<10x8xf32>
    %356 = arith.addf %352, %355 : vector<10x8xf32>
    %c1_269 = arith.constant 1 : index
    %c1_270 = arith.constant 1 : index
    %c0_271 = arith.constant 0 : index
    %c0_272 = arith.constant 0 : index
    %357 = vector.load %arg10[%c1_269, %c1_270, %c0_271, %c0_272] : memref<2x4x32x32xbf16, #tpu.memory_space<vmem>>, vector<1x1x32x32xbf16>
    %358 = vector.shape_cast %357 : vector<1x1x32x32xbf16> to vector<32x32xbf16>
    %359 = arith.truncf %299 : vector<10x32xf32> to vector<10x32xbf16>
    %cst_273 = arith.constant dense<0.000000e+00> : vector<10x32xf32>
    %360 = tpu.matmul %359, %358, %cst_273 {dimension_numbers = #tpu.dot_dimension_numbers<[1], [0], [0], [1], [0, 0, 1, 1], [], []>} : vector<10x32xbf16>, vector<32x32xbf16>, vector<10x32xf32> -> vector<10x32xf32>
    %c1_274 = arith.constant 1 : index
    %c1_275 = arith.constant 1 : index
    %c0_276 = arith.constant 0 : index
    %c0_277 = arith.constant 0 : index
    %361 = vector.load %arg11[%c1_274, %c1_275, %c0_276, %c0_277] : memref<2x4x1x32xf32, #tpu.memory_space<vmem>>, vector<1x1x1x32xf32>
    %362 = vector.shape_cast %361 : vector<1x1x1x32xf32> to vector<1x32xf32>
    %363 = vector.broadcast %362 : vector<1x32xf32> to vector<10x32xf32>
    %364 = arith.addf %360, %363 : vector<10x32xf32>
    %cst_278 = arith.constant dense<0.000000e+00> : vector<10x10xf32>
    %365 = tpu.matmul %348, %356, %cst_278 {dimension_numbers = #tpu.dot_dimension_numbers<[1], [1], [0], [0], [0, 0, 1, 0], [], []>} : vector<10x8xf32>, vector<10x8xf32>, vector<10x10xf32> -> vector<10x10xf32>
    %cst_279 = arith.constant 0.353553385 : f32
    %366 = vector.broadcast %cst_279 : f32 to vector<10x10xf32>
    %367 = arith.mulf %365, %366 : vector<10x10xf32>
    %368 = arith.addf %367, %0 : vector<10x10xf32>
    %cst_280 = arith.constant dense<0xFF800000> : vector<10xf32>
    %369 = vector.multi_reduction <maximumf>, %368, %cst_280 [1] : vector<10x10xf32> to vector<10xf32>
    %370 = vector.shape_cast %369 : vector<10xf32> to vector<10x1xf32>
    %371 = vector.broadcast %370 : vector<10x1xf32> to vector<10x10xf32>
    %372 = arith.subf %368, %371 : vector<10x10xf32>
    %373 = math.exp %372 : vector<10x10xf32>
    %cst_281 = arith.constant dense<0.000000e+00> : vector<10xf32>
    %374 = vector.multi_reduction <add>, %373, %cst_281 [1] : vector<10x10xf32> to vector<10xf32>
    %375 = vector.shape_cast %374 : vector<10xf32> to vector<10x1xf32>
    %376 = tpu.reciprocal %375 {approx = true} : vector<10x1xf32> -> vector<10x1xf32>
    %377 = vector.broadcast %376 : vector<10x1xf32> to vector<10x10xf32>
    %378 = arith.mulf %373, %377 : vector<10x10xf32>
    %cst_282 = arith.constant dense<0.000000e+00> : vector<10x32xf32>
    %379 = tpu.matmul %378, %364, %cst_282 {dimension_numbers = #tpu.dot_dimension_numbers<[1], [0], [0], [1], [0, 0, 1, 1], [], []>} : vector<10x10xf32>, vector<10x32xf32>, vector<10x32xf32> -> vector<10x32xf32>
    %380 = arith.addf %340, %379 : vector<10x32xf32>
    %c1_283 = arith.constant 1 : index
    %c0_284 = arith.constant 0 : index
    %c2_285 = arith.constant 2 : index
    %c0_286 = arith.constant 0 : index
    %c0_287 = arith.constant 0 : index
    %381 = vector.load %arg8[%c1_283, %c0_284, %c2_285, %c0_286, %c0_287] : memref<2x2x4x32x8xbf16, #tpu.memory_space<vmem>>, vector<1x1x1x32x8xbf16>
    %382 = vector.shape_cast %381 : vector<1x1x1x32x8xbf16> to vector<32x8xbf16>
    %383 = arith.truncf %299 : vector<10x32xf32> to vector<10x32xbf16>
    %cst_288 = arith.constant dense<0.000000e+00> : vector<10x8xf32>
    %384 = tpu.matmul %383, %382, %cst_288 {dimension_numbers = #tpu.dot_dimension_numbers<[1], [0], [0], [1], [0, 0, 1, 1], [], []>} : vector<10x32xbf16>, vector<32x8xbf16>, vector<10x8xf32> -> vector<10x8xf32>
    %c1_289 = arith.constant 1 : index
    %c0_290 = arith.constant 0 : index
    %c2_291 = arith.constant 2 : index
    %c0_292 = arith.constant 0 : index
    %c0_293 = arith.constant 0 : index
    %385 = vector.load %arg9[%c1_289, %c0_290, %c2_291, %c0_292, %c0_293] : memref<2x2x4x1x8xf32, #tpu.memory_space<vmem>>, vector<1x1x1x1x8xf32>
    %386 = vector.shape_cast %385 : vector<1x1x1x1x8xf32> to vector<1x8xf32>
    %387 = vector.broadcast %386 : vector<1x8xf32> to vector<10x8xf32>
    %388 = arith.addf %384, %387 : vector<10x8xf32>
    %c1_294 = arith.constant 1 : index
    %c1_295 = arith.constant 1 : index
    %c2_296 = arith.constant 2 : index
    %c0_297 = arith.constant 0 : index
    %c0_298 = arith.constant 0 : index
    %389 = vector.load %arg8[%c1_294, %c1_295, %c2_296, %c0_297, %c0_298] : memref<2x2x4x32x8xbf16, #tpu.memory_space<vmem>>, vector<1x1x1x32x8xbf16>
    %390 = vector.shape_cast %389 : vector<1x1x1x32x8xbf16> to vector<32x8xbf16>
    %391 = arith.truncf %299 : vector<10x32xf32> to vector<10x32xbf16>
    %cst_299 = arith.constant dense<0.000000e+00> : vector<10x8xf32>
    %392 = tpu.matmul %391, %390, %cst_299 {dimension_numbers = #tpu.dot_dimension_numbers<[1], [0], [0], [1], [0, 0, 1, 1], [], []>} : vector<10x32xbf16>, vector<32x8xbf16>, vector<10x8xf32> -> vector<10x8xf32>
    %c1_300 = arith.constant 1 : index
    %c1_301 = arith.constant 1 : index
    %c2_302 = arith.constant 2 : index
    %c0_303 = arith.constant 0 : index
    %c0_304 = arith.constant 0 : index
    %393 = vector.load %arg9[%c1_300, %c1_301, %c2_302, %c0_303, %c0_304] : memref<2x2x4x1x8xf32, #tpu.memory_space<vmem>>, vector<1x1x1x1x8xf32>
    %394 = vector.shape_cast %393 : vector<1x1x1x1x8xf32> to vector<1x8xf32>
    %395 = vector.broadcast %394 : vector<1x8xf32> to vector<10x8xf32>
    %396 = arith.addf %392, %395 : vector<10x8xf32>
    %c1_305 = arith.constant 1 : index
    %c2_306 = arith.constant 2 : index
    %c0_307 = arith.constant 0 : index
    %c0_308 = arith.constant 0 : index
    %397 = vector.load %arg10[%c1_305, %c2_306, %c0_307, %c0_308] : memref<2x4x32x32xbf16, #tpu.memory_space<vmem>>, vector<1x1x32x32xbf16>
    %398 = vector.shape_cast %397 : vector<1x1x32x32xbf16> to vector<32x32xbf16>
    %399 = arith.truncf %299 : vector<10x32xf32> to vector<10x32xbf16>
    %cst_309 = arith.constant dense<0.000000e+00> : vector<10x32xf32>
    %400 = tpu.matmul %399, %398, %cst_309 {dimension_numbers = #tpu.dot_dimension_numbers<[1], [0], [0], [1], [0, 0, 1, 1], [], []>} : vector<10x32xbf16>, vector<32x32xbf16>, vector<10x32xf32> -> vector<10x32xf32>
    %c1_310 = arith.constant 1 : index
    %c2_311 = arith.constant 2 : index
    %c0_312 = arith.constant 0 : index
    %c0_313 = arith.constant 0 : index
    %401 = vector.load %arg11[%c1_310, %c2_311, %c0_312, %c0_313] : memref<2x4x1x32xf32, #tpu.memory_space<vmem>>, vector<1x1x1x32xf32>
    %402 = vector.shape_cast %401 : vector<1x1x1x32xf32> to vector<1x32xf32>
    %403 = vector.broadcast %402 : vector<1x32xf32> to vector<10x32xf32>
    %404 = arith.addf %400, %403 : vector<10x32xf32>
    %cst_314 = arith.constant dense<0.000000e+00> : vector<10x10xf32>
    %405 = tpu.matmul %388, %396, %cst_314 {dimension_numbers = #tpu.dot_dimension_numbers<[1], [1], [0], [0], [0, 0, 1, 0], [], []>} : vector<10x8xf32>, vector<10x8xf32>, vector<10x10xf32> -> vector<10x10xf32>
    %cst_315 = arith.constant 0.353553385 : f32
    %406 = vector.broadcast %cst_315 : f32 to vector<10x10xf32>
    %407 = arith.mulf %405, %406 : vector<10x10xf32>
    %408 = arith.addf %407, %0 : vector<10x10xf32>
    %cst_316 = arith.constant dense<0xFF800000> : vector<10xf32>
    %409 = vector.multi_reduction <maximumf>, %408, %cst_316 [1] : vector<10x10xf32> to vector<10xf32>
    %410 = vector.shape_cast %409 : vector<10xf32> to vector<10x1xf32>
    %411 = vector.broadcast %410 : vector<10x1xf32> to vector<10x10xf32>
    %412 = arith.subf %408, %411 : vector<10x10xf32>
    %413 = math.exp %412 : vector<10x10xf32>
    %cst_317 = arith.constant dense<0.000000e+00> : vector<10xf32>
    %414 = vector.multi_reduction <add>, %413, %cst_317 [1] : vector<10x10xf32> to vector<10xf32>
    %415 = vector.shape_cast %414 : vector<10xf32> to vector<10x1xf32>
    %416 = tpu.reciprocal %415 {approx = true} : vector<10x1xf32> -> vector<10x1xf32>
    %417 = vector.broadcast %416 : vector<10x1xf32> to vector<10x10xf32>
    %418 = arith.mulf %413, %417 : vector<10x10xf32>
    %cst_318 = arith.constant dense<0.000000e+00> : vector<10x32xf32>
    %419 = tpu.matmul %418, %404, %cst_318 {dimension_numbers = #tpu.dot_dimension_numbers<[1], [0], [0], [1], [0, 0, 1, 1], [], []>} : vector<10x10xf32>, vector<10x32xf32>, vector<10x32xf32> -> vector<10x32xf32>
    %420 = arith.addf %380, %419 : vector<10x32xf32>
    %c1_319 = arith.constant 1 : index
    %c0_320 = arith.constant 0 : index
    %c3_321 = arith.constant 3 : index
    %c0_322 = arith.constant 0 : index
    %c0_323 = arith.constant 0 : index
    %421 = vector.load %arg8[%c1_319, %c0_320, %c3_321, %c0_322, %c0_323] : memref<2x2x4x32x8xbf16, #tpu.memory_space<vmem>>, vector<1x1x1x32x8xbf16>
    %422 = vector.shape_cast %421 : vector<1x1x1x32x8xbf16> to vector<32x8xbf16>
    %423 = arith.truncf %299 : vector<10x32xf32> to vector<10x32xbf16>
    %cst_324 = arith.constant dense<0.000000e+00> : vector<10x8xf32>
    %424 = tpu.matmul %423, %422, %cst_324 {dimension_numbers = #tpu.dot_dimension_numbers<[1], [0], [0], [1], [0, 0, 1, 1], [], []>} : vector<10x32xbf16>, vector<32x8xbf16>, vector<10x8xf32> -> vector<10x8xf32>
    %c1_325 = arith.constant 1 : index
    %c0_326 = arith.constant 0 : index
    %c3_327 = arith.constant 3 : index
    %c0_328 = arith.constant 0 : index
    %c0_329 = arith.constant 0 : index
    %425 = vector.load %arg9[%c1_325, %c0_326, %c3_327, %c0_328, %c0_329] : memref<2x2x4x1x8xf32, #tpu.memory_space<vmem>>, vector<1x1x1x1x8xf32>
    %426 = vector.shape_cast %425 : vector<1x1x1x1x8xf32> to vector<1x8xf32>
    %427 = vector.broadcast %426 : vector<1x8xf32> to vector<10x8xf32>
    %428 = arith.addf %424, %427 : vector<10x8xf32>
    %c1_330 = arith.constant 1 : index
    %c1_331 = arith.constant 1 : index
    %c3_332 = arith.constant 3 : index
    %c0_333 = arith.constant 0 : index
    %c0_334 = arith.constant 0 : index
    %429 = vector.load %arg8[%c1_330, %c1_331, %c3_332, %c0_333, %c0_334] : memref<2x2x4x32x8xbf16, #tpu.memory_space<vmem>>, vector<1x1x1x32x8xbf16>
    %430 = vector.shape_cast %429 : vector<1x1x1x32x8xbf16> to vector<32x8xbf16>
    %431 = arith.truncf %299 : vector<10x32xf32> to vector<10x32xbf16>
    %cst_335 = arith.constant dense<0.000000e+00> : vector<10x8xf32>
    %432 = tpu.matmul %431, %430, %cst_335 {dimension_numbers = #tpu.dot_dimension_numbers<[1], [0], [0], [1], [0, 0, 1, 1], [], []>} : vector<10x32xbf16>, vector<32x8xbf16>, vector<10x8xf32> -> vector<10x8xf32>
    %c1_336 = arith.constant 1 : index
    %c1_337 = arith.constant 1 : index
    %c3_338 = arith.constant 3 : index
    %c0_339 = arith.constant 0 : index
    %c0_340 = arith.constant 0 : index
    %433 = vector.load %arg9[%c1_336, %c1_337, %c3_338, %c0_339, %c0_340] : memref<2x2x4x1x8xf32, #tpu.memory_space<vmem>>, vector<1x1x1x1x8xf32>
    %434 = vector.shape_cast %433 : vector<1x1x1x1x8xf32> to vector<1x8xf32>
    %435 = vector.broadcast %434 : vector<1x8xf32> to vector<10x8xf32>
    %436 = arith.addf %432, %435 : vector<10x8xf32>
    %c1_341 = arith.constant 1 : index
    %c3_342 = arith.constant 3 : index
    %c0_343 = arith.constant 0 : index
    %c0_344 = arith.constant 0 : index
    %437 = vector.load %arg10[%c1_341, %c3_342, %c0_343, %c0_344] : memref<2x4x32x32xbf16, #tpu.memory_space<vmem>>, vector<1x1x32x32xbf16>
    %438 = vector.shape_cast %437 : vector<1x1x32x32xbf16> to vector<32x32xbf16>
    %439 = arith.truncf %299 : vector<10x32xf32> to vector<10x32xbf16>
    %cst_345 = arith.constant dense<0.000000e+00> : vector<10x32xf32>
    %440 = tpu.matmul %439, %438, %cst_345 {dimension_numbers = #tpu.dot_dimension_numbers<[1], [0], [0], [1], [0, 0, 1, 1], [], []>} : vector<10x32xbf16>, vector<32x32xbf16>, vector<10x32xf32> -> vector<10x32xf32>
    %c1_346 = arith.constant 1 : index
    %c3_347 = arith.constant 3 : index
    %c0_348 = arith.constant 0 : index
    %c0_349 = arith.constant 0 : index
    %441 = vector.load %arg11[%c1_346, %c3_347, %c0_348, %c0_349] : memref<2x4x1x32xf32, #tpu.memory_space<vmem>>, vector<1x1x1x32xf32>
    %442 = vector.shape_cast %441 : vector<1x1x1x32xf32> to vector<1x32xf32>
    %443 = vector.broadcast %442 : vector<1x32xf32> to vector<10x32xf32>
    %444 = arith.addf %440, %443 : vector<10x32xf32>
    %cst_350 = arith.constant dense<0.000000e+00> : vector<10x10xf32>
    %445 = tpu.matmul %428, %436, %cst_350 {dimension_numbers = #tpu.dot_dimension_numbers<[1], [1], [0], [0], [0, 0, 1, 0], [], []>} : vector<10x8xf32>, vector<10x8xf32>, vector<10x10xf32> -> vector<10x10xf32>
    %cst_351 = arith.constant 0.353553385 : f32
    %446 = vector.broadcast %cst_351 : f32 to vector<10x10xf32>
    %447 = arith.mulf %445, %446 : vector<10x10xf32>
    %448 = arith.addf %447, %0 : vector<10x10xf32>
    %cst_352 = arith.constant dense<0xFF800000> : vector<10xf32>
    %449 = vector.multi_reduction <maximumf>, %448, %cst_352 [1] : vector<10x10xf32> to vector<10xf32>
    %450 = vector.shape_cast %449 : vector<10xf32> to vector<10x1xf32>
    %451 = vector.broadcast %450 : vector<10x1xf32> to vector<10x10xf32>
    %452 = arith.subf %448, %451 : vector<10x10xf32>
    %453 = math.exp %452 : vector<10x10xf32>
    %cst_353 = arith.constant dense<0.000000e+00> : vector<10xf32>
    %454 = vector.multi_reduction <add>, %453, %cst_353 [1] : vector<10x10xf32> to vector<10xf32>
    %455 = vector.shape_cast %454 : vector<10xf32> to vector<10x1xf32>
    %456 = tpu.reciprocal %455 {approx = true} : vector<10x1xf32> -> vector<10x1xf32>
    %457 = vector.broadcast %456 : vector<10x1xf32> to vector<10x10xf32>
    %458 = arith.mulf %453, %457 : vector<10x10xf32>
    %cst_354 = arith.constant dense<0.000000e+00> : vector<10x32xf32>
    %459 = tpu.matmul %458, %444, %cst_354 {dimension_numbers = #tpu.dot_dimension_numbers<[1], [0], [0], [1], [0, 0, 1, 1], [], []>} : vector<10x10xf32>, vector<10x32xf32>, vector<10x32xf32> -> vector<10x32xf32>
    %460 = arith.addf %420, %459 : vector<10x32xf32>
    %461 = arith.addf %273, %460 : vector<10x32xf32>
    %c1_355 = arith.constant 1 : index
    %c0_356 = arith.constant 0 : index
    %c0_357 = arith.constant 0 : index
    %462 = vector.load %arg12[%c1_355, %c0_356, %c0_357] : memref<2x1x32xf32, #tpu.memory_space<vmem>>, vector<1x1x32xf32>
    %463 = vector.shape_cast %462 : vector<1x1x32xf32> to vector<1x32xf32>
    %464 = vector.broadcast %463 : vector<1x32xf32> to vector<10x32xf32>
    %465 = arith.addf %461, %464 : vector<10x32xf32>
    %c1_358 = arith.constant 1 : index
    %c0_359 = arith.constant 0 : index
    %c0_360 = arith.constant 0 : index
    %466 = vector.load %arg13[%c1_358, %c0_359, %c0_360] : memref<2x1x32xf32, #tpu.memory_space<vmem>>, vector<1x1x32xf32>
    %467 = vector.shape_cast %466 : vector<1x1x32xf32> to vector<1x32xf32>
    %c1_361 = arith.constant 1 : index
    %c0_362 = arith.constant 0 : index
    %c0_363 = arith.constant 0 : index
    %468 = vector.load %arg14[%c1_361, %c0_362, %c0_363] : memref<2x1x32xf32, #tpu.memory_space<vmem>>, vector<1x1x32xf32>
    %469 = vector.shape_cast %468 : vector<1x1x32xf32> to vector<1x32xf32>
    %cst_364 = arith.constant dense<0.000000e+00> : vector<10xf32>
    %470 = vector.multi_reduction <add>, %465, %cst_364 [1] : vector<10x32xf32> to vector<10xf32>
    %471 = vector.shape_cast %470 : vector<10xf32> to vector<10x1xf32>
    %cst_365 = arith.constant 3.200000e+01 : f32
    %472 = vector.broadcast %cst_365 : f32 to vector<10x1xf32>
    %473 = arith.divf %471, %472 : vector<10x1xf32>
    %474 = vector.broadcast %473 : vector<10x1xf32> to vector<10x32xf32>
    %475 = arith.subf %465, %474 : vector<10x32xf32>
    %476 = arith.mulf %475, %475 : vector<10x32xf32>
    %cst_366 = arith.constant dense<0.000000e+00> : vector<10xf32>
    %477 = vector.multi_reduction <add>, %476, %cst_366 [1] : vector<10x32xf32> to vector<10xf32>
    %478 = vector.shape_cast %477 : vector<10xf32> to vector<10x1xf32>
    %cst_367 = arith.constant 3.200000e+01 : f32
    %479 = vector.broadcast %cst_367 : f32 to vector<10x1xf32>
    %480 = arith.divf %478, %479 : vector<10x1xf32>
    %481 = vector.broadcast %473 : vector<10x1xf32> to vector<10x32xf32>
    %482 = arith.subf %465, %481 : vector<10x32xf32>
    %cst_368 = arith.constant 9.99999974E-6 : f32
    %483 = vector.broadcast %cst_368 : f32 to vector<10x1xf32>
    %484 = arith.addf %480, %483 : vector<10x1xf32>
    %485 = math.rsqrt %484 : vector<10x1xf32>
    %486 = vector.broadcast %485 : vector<10x1xf32> to vector<10x32xf32>
    %487 = arith.mulf %482, %486 : vector<10x32xf32>
    %488 = vector.broadcast %467 : vector<1x32xf32> to vector<10x32xf32>
    %489 = arith.mulf %487, %488 : vector<10x32xf32>
    %490 = vector.broadcast %469 : vector<1x32xf32> to vector<10x32xf32>
    %491 = arith.addf %489, %490 : vector<10x32xf32>
    %c1_369 = arith.constant 1 : index
    %c0_370 = arith.constant 0 : index
    %c0_371 = arith.constant 0 : index
    %492 = vector.load %arg15[%c1_369, %c0_370, %c0_371] : memref<2x32x128xbf16, #tpu.memory_space<vmem>>, vector<1x32x128xbf16>
    %493 = vector.shape_cast %492 : vector<1x32x128xbf16> to vector<32x128xbf16>
    %494 = arith.truncf %491 : vector<10x32xf32> to vector<10x32xbf16>
    %cst_372 = arith.constant dense<0.000000e+00> : vector<10x128xf32>
    %495 = tpu.matmul %494, %493, %cst_372 {dimension_numbers = #tpu.dot_dimension_numbers<[1], [0], [0], [1], [0, 0, 1, 1], [], []>} : vector<10x32xbf16>, vector<32x128xbf16>, vector<10x128xf32> -> vector<10x128xf32>
    %c1_373 = arith.constant 1 : index
    %c0_374 = arith.constant 0 : index
    %c0_375 = arith.constant 0 : index
    %496 = vector.load %arg16[%c1_373, %c0_374, %c0_375] : memref<2x1x128xf32, #tpu.memory_space<vmem>>, vector<1x1x128xf32>
    %497 = vector.shape_cast %496 : vector<1x1x128xf32> to vector<1x128xf32>
    %498 = vector.broadcast %497 : vector<1x128xf32> to vector<10x128xf32>
    %499 = arith.addf %495, %498 : vector<10x128xf32>
    %cst_376 = arith.constant 1.702000e+00 : f32
    %500 = vector.broadcast %cst_376 : f32 to vector<10x128xf32>
    %501 = arith.mulf %500, %499 : vector<10x128xf32>
    %502 = arith.negf %501 : vector<10x128xf32>
    %503 = math.exp %502 : vector<10x128xf32>
    %cst_377 = arith.constant 1.000000e+00 : f32
    %504 = vector.broadcast %cst_377 : f32 to vector<10x128xf32>
    %505 = arith.addf %504, %503 : vector<10x128xf32>
    %506 = arith.divf %504, %505 : vector<10x128xf32>
    %507 = arith.mulf %499, %506 : vector<10x128xf32>
    %c1_378 = arith.constant 1 : index
    %c0_379 = arith.constant 0 : index
    %c0_380 = arith.constant 0 : index
    %508 = vector.load %arg17[%c1_378, %c0_379, %c0_380] : memref<2x128x32xbf16, #tpu.memory_space<vmem>>, vector<1x128x32xbf16>
    %509 = vector.shape_cast %508 : vector<1x128x32xbf16> to vector<128x32xbf16>
    %510 = arith.truncf %507 : vector<10x128xf32> to vector<10x128xbf16>
    %cst_381 = arith.constant dense<0.000000e+00> : vector<10x32xf32>
    %511 = tpu.matmul %510, %509, %cst_381 {dimension_numbers = #tpu.dot_dimension_numbers<[1], [0], [0], [1], [0, 0, 1, 1], [], []>} : vector<10x128xbf16>, vector<128x32xbf16>, vector<10x32xf32> -> vector<10x32xf32>
    %512 = arith.addf %465, %511 : vector<10x32xf32>
    %c1_382 = arith.constant 1 : index
    %c0_383 = arith.constant 0 : index
    %c0_384 = arith.constant 0 : index
    %513 = vector.load %arg18[%c1_382, %c0_383, %c0_384] : memref<2x1x32xf32, #tpu.memory_space<vmem>>, vector<1x1x32xf32>
    %514 = vector.shape_cast %513 : vector<1x1x32xf32> to vector<1x32xf32>
    %515 = vector.broadcast %514 : vector<1x32xf32> to vector<10x32xf32>
    %516 = arith.addf %512, %515 : vector<10x32xf32>
    %c0_385 = arith.constant 0 : index
    %c0_386 = arith.constant 0 : index
    %517 = vector.load %arg19[%c0_385, %c0_386] : memref<1x32xf32, #tpu.memory_space<vmem>>, vector<1x32xf32>
    %c0_387 = arith.constant 0 : index
    %c0_388 = arith.constant 0 : index
    %518 = vector.load %arg20[%c0_387, %c0_388] : memref<1x32xf32, #tpu.memory_space<vmem>>, vector<1x32xf32>
    %cst_389 = arith.constant dense<0.000000e+00> : vector<10xf32>
    %519 = vector.multi_reduction <add>, %516, %cst_389 [1] : vector<10x32xf32> to vector<10xf32>
    %520 = vector.shape_cast %519 : vector<10xf32> to vector<10x1xf32>
    %cst_390 = arith.constant 3.200000e+01 : f32
    %521 = vector.broadcast %cst_390 : f32 to vector<10x1xf32>
    %522 = arith.divf %520, %521 : vector<10x1xf32>
    %523 = vector.broadcast %522 : vector<10x1xf32> to vector<10x32xf32>
    %524 = arith.subf %516, %523 : vector<10x32xf32>
    %525 = arith.mulf %524, %524 : vector<10x32xf32>
    %cst_391 = arith.constant dense<0.000000e+00> : vector<10xf32>
    %526 = vector.multi_reduction <add>, %525, %cst_391 [1] : vector<10x32xf32> to vector<10xf32>
    %527 = vector.shape_cast %526 : vector<10xf32> to vector<10x1xf32>
    %cst_392 = arith.constant 3.200000e+01 : f32
    %528 = vector.broadcast %cst_392 : f32 to vector<10x1xf32>
    %529 = arith.divf %527, %528 : vector<10x1xf32>
    %530 = vector.broadcast %522 : vector<10x1xf32> to vector<10x32xf32>
    %531 = arith.subf %516, %530 : vector<10x32xf32>
    %cst_393 = arith.constant 9.99999974E-6 : f32
    %532 = vector.broadcast %cst_393 : f32 to vector<10x1xf32>
    %533 = arith.addf %529, %532 : vector<10x1xf32>
    %534 = math.rsqrt %533 : vector<10x1xf32>
    %535 = vector.broadcast %534 : vector<10x1xf32> to vector<10x32xf32>
    %536 = arith.mulf %531, %535 : vector<10x32xf32>
    %537 = vector.broadcast %517 : vector<1x32xf32> to vector<10x32xf32>
    %538 = arith.mulf %536, %537 : vector<10x32xf32>
    %539 = vector.broadcast %518 : vector<1x32xf32> to vector<10x32xf32>
    %540 = arith.addf %538, %539 : vector<10x32xf32>
    %c0_394 = arith.constant 0 : index
    %c0_395 = arith.constant 0 : index
    %541 = vector.load %arg21[%c0_394, %c0_395] : memref<32x16xbf16, #tpu.memory_space<vmem>>, vector<32x16xbf16>
    %542 = arith.truncf %540 : vector<10x32xf32> to vector<10x32xbf16>
    %cst_396 = arith.constant dense<0.000000e+00> : vector<10x16xf32>
    %543 = tpu.matmul %542, %541, %cst_396 {dimension_numbers = #tpu.dot_dimension_numbers<[1], [0], [0], [1], [0, 0, 1, 1], [], []>} : vector<10x32xbf16>, vector<32x16xbf16>, vector<10x16xf32> -> vector<10x16xf32>
    %c0_397 = arith.constant 0 : index
    %c0_398 = arith.constant 0 : index
    %544 = vector.load %arg22[%c0_397, %c0_398] : memref<10x16xf32, #tpu.memory_space<vmem>>, vector<10x16xf32>
    tpu.vector_store %arg22[%c0_397, %c0_398], %543 {strides = array<i32>} : memref<10x16xf32, #tpu.memory_space<vmem>>, vector<10x16xf32>,
    return
  }
}

</mosaic_0001>

<llo_original>
// kernel: tile.9
$region0: #{tile.9}
  %s0 = inlined_call_operand.vmem [shape: f32[2,5,32], index: 0, kind: input, shape index: {}]
  %s1 = inlined_call_operand.vmem [shape: f32[10,32], index: 1, kind: output, shape index: {}]
  %v2 = vld [vmem:[%s0] sm:$0x1f]
  %vm3 = vcmask 261120
  %4 = vst.msk [vmem:[%s1] sm:$0x1f] %vm3, %v2
  %s5 = scalar_lea.vmem %s0, 8
  %v6 = vld [vmem:[%s5] sm:$0x1f]
  %vm7 = vcmask 261120
  %s8 = scalar_lea.vmem %s1, 5
  %9 = vst.msk [vmem:[%s8] sm:$0x1f] %vm7, %v6

// kernel: eq.8
$region0: #{eq.8}
  %s0 = inlined_call_operand.vmem [shape: s32[2,5], index: 0, kind: input, shape index: {}]
  %s1 = inlined_call_operand.vmem [shape: s32[10], index: 1, kind: output, shape index: {}]
  $region1: #{eq.8} parent=0
    #allocation0 [shape = 'u8[4096]{0}', space=vmem, size = 0x1000, scoped, tag = 'scoped mem for output reshape']
    #allocation1 [shape = 'u8[4096]{0}', space=vmem, size = 0x1000, scoped, tag = 'scoped mem for input reshape']
    %s3 = sshll.u32 1, 2
    %s4 = ssub.s32 %s3, 1
    %v5 = vld [vmem:[%s0] sm:%s4]
    %6 = vst [vmem:[#allocation1] sm:%s4] %v5
    %v7 = vld [vmem:[#allocation1] sm:$0x1]
    %vm8 = vcmask 39936
    %9 = vst.msk [vmem:[#allocation0] sm:$0x1] %vm8, %v7
    %s10 = scalar_lea.vmem [#allocation1], 1
    %v11 = vld [vmem:[%s10] sm:$0x1]
    %12 = vrot.lane.b32.xlu0 %v11, 5
    %v13 = vpop.permute.xlu0 %12
    %vm14 = vcmask 80936
    %15 = vst.msk [vmem:[#allocation0] sm:$0x1] %vm14, %v13
    %s17 = sshll.u32 1, 1
    %s18 = ssub.s32 %s17, 1
    %v20 = vld [vmem:[#allocation0] sm:%s18]
    %s21 = sshll.u32 1, 1
    %s22 = ssub.s32 %s21, 1
    %23 = vst [vmem:[%s1] sm:%s22] %v20

// kernel: feature_generator_clip_forward.1
$region0: #{feature_generator_clip_forward.1}
  #allocation0 [shape = 'u32[]', space=smem, size = 0x4, offset = 0x4, fixed_abs, tag = 'smem constant byte address 0x4 - core index']
  #allocation1 [shape = 'u32[144,128]{1,0:T(1,128)}', space=vmem, size = 0x12000, scoped, tag = 'internal scratch']
  %s0 = inlined_call_operand.vmem [shape: f32[10,192], index: 0, kind: input, shape index: {}]
  %s1 = inlined_call_operand.vmem [shape: f32[10,32], index: 1, kind: input, shape index: {}]
  %s2 = inlined_call_operand.vmem [shape: f32[10,10], index: 2, kind: input, shape index: {}]
  %s3 = inlined_call_operand.vmem [shape: bf16[192,32], index: 3, kind: input, shape index: {}]
  %s4 = inlined_call_operand.vmem [shape: f32[1,32], index: 4, kind: input, shape index: {}]
  %s5 = inlined_call_operand.vmem [shape: f32[1,32], index: 5, kind: input, shape index: {}]
  %s6 = inlined_call_operand.vmem [shape: f32[2,1,32], index: 6, kind: input, shape index: {}]
  %s7 = inlined_call_operand.vmem [shape: f32[2,1,32], index: 7, kind: input, shape index: {}]
  %s8 = inlined_call_operand.vmem [shape: bf16[2,2,4,32,8], index: 8, kind: input, shape index: {}]
  %s9 = inlined_call_operand.vmem [shape: f32[2,2,4,1,8], index: 9, kind: input, shape index: {}]
  %s10 = inlined_call_operand.vmem [shape: bf16[2,4,32,32], index: 10, kind: input, shape index: {}]
  %s11 = inlined_call_operand.vmem [shape: f32[2,4,1,32], index: 11, kind: input, shape index: {}]
  %s12 = inlined_call_operand.vmem [shape: f32[2,1,32], index: 12, kind: input, shape index: {}]
  %s13 = inlined_call_operand.vmem [shape: f32[2,1,32], index: 13, kind: input, shape index: {}]
  %s14 = inlined_call_operand.vmem [shape: f32[2,1,32], index: 14, kind: input, shape index: {}]
  %s15 = inlined_call_operand.vmem [shape: bf16[2,32,128], index: 15, kind: input, shape index: {}]
  %s16 = inlined_call_operand.vmem [shape: f32[2,1,128], index: 16, kind: input, shape index: {}]
  %s17 = inlined_call_operand.vmem [shape: bf16[2,128,32], index: 17, kind: input, shape index: {}]
  %s18 = inlined_call_operand.vmem [shape: f32[2,1,32], index: 18, kind: input, shape index: {}]
  %s19 = inlined_call_operand.vmem [shape: f32[1,32], index: 19, kind: input, shape index: {}]
  %s20 = inlined_call_operand.vmem [shape: f32[1,32], index: 20, kind: input, shape index: {}]
  %s21 = inlined_call_operand.vmem [shape: bf16[32,16], index: 21, kind: input, shape index: {}]
  %s22 = inlined_call_operand.vmem [shape: f32[10,16], index: 22, kind: output, shape index: {}]
  %s23 = sld [smem:[#allocation0]]
  $region98: #{feature_generator_clip_forward.1} parent=0
    _
  %s25 = ssub.s32 1, %s23
  %s26 = scalar_select 0, %s25, %s23
  // Predicated region
  $region2: #{feature_generator_clip_forward.1} parent=0 // pred_check
    _
  $region3: #{feature_generator_clip_forward.1} parent=0 // pred_check_branch
    %28 = sbr.rel (0) target = $region5
  $region4: #{feature_generator_clip_forward.1} parent=0 // pred_region
    _
  $region5: #{feature_generator_clip_forward.1} parent=0 // pred_fallthru
    _
  // Predicated region
  $region6: #{feature_generator_clip_forward.1} parent=0 // pred_check
    _
  $region7: #{feature_generator_clip_forward.1} parent=0 // pred_check_branch
    %30 = sbr.rel (0) target = $region9
  $region8: #{feature_generator_clip_forward.1} parent=0 // pred_region
    _
  $region9: #{feature_generator_clip_forward.1} parent=0 // pred_fallthru
    _
  // Predicated region
  $region10: #{feature_generator_clip_forward.1} parent=0 // pred_check
    _
  $region11: #{feature_generator_clip_forward.1} parent=0 // pred_check_branch
    %32 = sbr.rel (0) target = $region13
  $region12: #{feature_generator_clip_forward.1} parent=0 // pred_region
    _
  $region13: #{feature_generator_clip_forward.1} parent=0 // pred_fallthru
    _
  // Predicated region
  $region14: #{feature_generator_clip_forward.1} parent=0 // pred_check
    _
  $region15: #{feature_generator_clip_forward.1} parent=0 // pred_check_branch
    %34 = sbr.rel (0) target = $region17
  $region16: #{feature_generator_clip_forward.1} parent=0 // pred_region
    _
  $region17: #{feature_generator_clip_forward.1} parent=0 // pred_fallthru
    _
  // Predicated region
  $region18: #{feature_generator_clip_forward.1} parent=0 // pred_check
    _
  $region19: #{feature_generator_clip_forward.1} parent=0 // pred_check_branch
    %36 = sbr.rel (0) target = $region21
  $region20: #{feature_generator_clip_forward.1} parent=0 // pred_region
    _
  $region21: #{feature_generator_clip_forward.1} parent=0 // pred_fallthru
    _
  // Predicated region
  $region22: #{feature_generator_clip_forward.1} parent=0 // pred_check
    _
  $region23: #{feature_generator_clip_forward.1} parent=0 // pred_check_branch
    %38 = sbr.rel (0) target = $region25
  $region24: #{feature_generator_clip_forward.1} parent=0 // pred_region
    _
  $region25: #{feature_generator_clip_forward.1} parent=0 // pred_fallthru
    _
  // Predicated region
  $region26: #{feature_generator_clip_forward.1} parent=0 // pred_check
    _
  $region27: #{feature_generator_clip_forward.1} parent=0 // pred_check_branch
    %40 = sbr.rel (0) target = $region29
  $region28: #{feature_generator_clip_forward.1} parent=0 // pred_region
    _
  $region29: #{feature_generator_clip_forward.1} parent=0 // pred_fallthru
    _
  // Predicated region
  $region30: #{feature_generator_clip_forward.1} parent=0 // pred_check
    _
  $region31: #{feature_generator_clip_forward.1} parent=0 // pred_check_branch
    %42 = sbr.rel (0) target = $region33
  $region32: #{feature_generator_clip_forward.1} parent=0 // pred_region
    _
  $region33: #{feature_generator_clip_forward.1} parent=0 // pred_fallthru
    _
  // Predicated region
  $region34: #{feature_generator_clip_forward.1} parent=0 // pred_check
    _
  $region35: #{feature_generator_clip_forward.1} parent=0 // pred_check_branch
    %44 = sbr.rel (0) target = $region37
  $region36: #{feature_generator_clip_forward.1} parent=0 // pred_region
    _
  $region37: #{feature_generator_clip_forward.1} parent=0 // pred_fallthru
    _
  // Predicated region
  $region38: #{feature_generator_clip_forward.1} parent=0 // pred_check
    _
  $region39: #{feature_generator_clip_forward.1} parent=0 // pred_check_branch
    %46 = sbr.rel (0) target = $region41
  $region40: #{feature_generator_clip_forward.1} parent=0 // pred_region
    _
  $region41: #{feature_generator_clip_forward.1} parent=0 // pred_fallthru
    _
  // Predicated region
  $region42: #{feature_generator_clip_forward.1} parent=0 // pred_check
    _
  $region43: #{feature_generator_clip_forward.1} parent=0 // pred_check_branch
    %48 = sbr.rel (0) target = $region45
  $region44: #{feature_generator_clip_forward.1} parent=0 // pred_region
    _
  $region45: #{feature_generator_clip_forward.1} parent=0 // pred_fallthru
    _
  // Predicated region
  $region46: #{feature_generator_clip_forward.1} parent=0 // pred_check
    _
  $region47: #{feature_generator_clip_forward.1} parent=0 // pred_check_branch
    %50 = sbr.rel (0) target = $region49
  $region48: #{feature_generator_clip_forward.1} parent=0 // pred_region
    _
  $region49: #{feature_generator_clip_forward.1} parent=0 // pred_fallthru
    _
  // Predicated region
  $region50: #{feature_generator_clip_forward.1} parent=0 // pred_check
    _
  $region51: #{feature_generator_clip_forward.1} parent=0 // pred_check_branch
    %52 = sbr.rel (0) target = $region53
  $region52: #{feature_generator_clip_forward.1} parent=0 // pred_region
    _
  $region53: #{feature_generator_clip_forward.1} parent=0 // pred_fallthru
    _
  // Predicated region
  $region54: #{feature_generator_clip_forward.1} parent=0 // pred_check
    _
  $region55: #{feature_generator_clip_forward.1} parent=0 // pred_check_branch
    %54 = sbr.rel (0) target = $region57
  $region56: #{feature_generator_clip_forward.1} parent=0 // pred_region
    _
  $region57: #{feature_generator_clip_forward.1} parent=0 // pred_fallthru
    _
  // Predicated region
  $region58: #{feature_generator_clip_forward.1} parent=0 // pred_check
    _
  $region59: #{feature_generator_clip_forward.1} parent=0 // pred_check_branch
    %56 = sbr.rel (0) target = $region61
  $region60: #{feature_generator_clip_forward.1} parent=0 // pred_region
    _
  $region61: #{feature_generator_clip_forward.1} parent=0 // pred_fallthru
    _
  // Predicated region
  $region62: #{feature_generator_clip_forward.1} parent=0 // pred_check
    _
  $region63: #{feature_generator_clip_forward.1} parent=0 // pred_check_branch
    %58 = sbr.rel (0) target = $region65
  $region64: #{feature_generator_clip_forward.1} parent=0 // pred_region
    _
  $region65: #{feature_generator_clip_forward.1} parent=0 // pred_fallthru
    _
  // Predicated region
  $region66: #{feature_generator_clip_forward.1} parent=0 // pred_check
    _
  $region67: #{feature_generator_clip_forward.1} parent=0 // pred_check_branch
    %60 = sbr.rel (0) target = $region69
  $region68: #{feature_generator_clip_forward.1} parent=0 // pred_region
    _
  $region69: #{feature_generator_clip_forward.1} parent=0 // pred_fallthru
    _
  // Predicated region
  $region70: #{feature_generator_clip_forward.1} parent=0 // pred_check
    _
  $region71: #{feature_generator_clip_forward.1} parent=0 // pred_check_branch
    %62 = sbr.rel (0) target = $region73
  $region72: #{feature_generator_clip_forward.1} parent=0 // pred_region
    _
  $region73: #{feature_generator_clip_forward.1} parent=0 // pred_fallthru
    _
  // Predicated region
  $region74: #{feature_generator_clip_forward.1} parent=0 // pred_check
    _
  $region75: #{feature_generator_clip_forward.1} parent=0 // pred_check_branch
    %64 = sbr.rel (0) target = $region77
  $region76: #{feature_generator_clip_forward.1} parent=0 // pred_region
    _
  $region77: #{feature_generator_clip_forward.1} parent=0 // pred_fallthru
    _
  // Predicated region
  $region78: #{feature_generator_clip_forward.1} parent=0 // pred_check
    _
  $region79: #{feature_generator_clip_forward.1} parent=0 // pred_check_branch
    %66 = sbr.rel (0) target = $region81
  $region80: #{feature_generator_clip_forward.1} parent=0 // pred_region
    _
  $region81: #{feature_generator_clip_forward.1} parent=0 // pred_fallthru
    _
  // Predicated region
  $region82: #{feature_generator_clip_forward.1} parent=0 // pred_check
    _
  $region83: #{feature_generator_clip_forward.1} parent=0 // pred_check_branch
    %68 = sbr.rel (0) target = $region85
  $region84: #{feature_generator_clip_forward.1} parent=0 // pred_region
    _
  $region85: #{feature_generator_clip_forward.1} parent=0 // pred_fallthru
    _
  // Predicated region
  $region86: #{feature_generator_clip_forward.1} parent=0 // pred_check
    _
  $region87: #{feature_generator_clip_forward.1} parent=0 // pred_check_branch
    %70 = sbr.rel (0) target = $region89
  $region88: #{feature_generator_clip_forward.1} parent=0 // pred_region
    _
  $region89: #{feature_generator_clip_forward.1} parent=0 // pred_fallthru
    _
  %v72 = vld [vmem:[%s2] sm:$0xff]
  %v73 = vld [vmem:[%s2 + $0x8] sm:$0x3]
  %v74 = vld [vmem:[%s0] sm:$0xff]
  %v75 = vld [vmem:[%s0 + $0x8] sm:$0xff]
  %v76 = vld [vmem:[%s0 + $0x10] sm:$0x3]
  %v77 = vld [vmem:[%s0 + $0x18] sm:$0x3]
  %v78 = vld [vmem:[%s3] sm:$0xf]
  %v79 = vld [vmem:[%s3 + $0x4] sm:$0xf]
  %v80 = vld [vmem:[%s3 + $0x8] sm:$0xf]
  %v81 = vld [vmem:[%s3 + $0xc] sm:$0xf]
  %v82 = vld [vmem:[%s3 + $0x10] sm:$0xf]
  %v83 = vld [vmem:[%s3 + $0x14] sm:$0xf]
  %v84 = vld [vmem:[%s3 + $0x18] sm:$0xf]
  %v85 = vld [vmem:[%s3 + $0x1c] sm:$0xf]
  %v86 = vld [vmem:[%s3 + $0x20] sm:$0xf]
  %v87 = vld [vmem:[%s3 + $0x24] sm:$0xf]
  %v88 = vld [vmem:[%s3 + $0x28] sm:$0xf]
  %v89 = vld [vmem:[%s3 + $0x2c] sm:$0xf]
  %v90 = vld [vmem:[%s3 + $0x30] sm:$0xf]
  %v91 = vld [vmem:[%s3 + $0x34] sm:$0xf]
  %v92 = vld [vmem:[%s3 + $0x38] sm:$0xf]
  %v93 = vld [vmem:[%s3 + $0x3c] sm:$0xf]
  %v94 = vld [vmem:[%s3 + $0x40] sm:$0xf]
  %v95 = vld [vmem:[%s3 + $0x44] sm:$0xf]
  %v96 = vld [vmem:[%s3 + $0x48] sm:$0xf]
  %v97 = vld [vmem:[%s3 + $0x4c] sm:$0xf]
  %v98 = vld [vmem:[%s3 + $0x50] sm:$0xf]
  %v99 = vld [vmem:[%s3 + $0x54] sm:$0xf]
  %v100 = vld [vmem:[%s3 + $0x58] sm:$0xf]
  %v101 = vld [vmem:[%s3 + $0x5c] sm:$0xf]
  %v102 = vpack.c.bf16 %v76, %v74
  %v103 = vpack.c.bf16 %v77, %v75
  %v104 = vld [vmem:[%s1] sm:$0xff]
  %v105 = vld [vmem:[%s1 + $0x8] sm:$0x3]
  %v130 = vunpack.c.l.b16 %v78
  %v131 = vunpack.c.l.b16 %v79
  %v132 = vunpack.c.l.b16 %v80
  %v133 = vunpack.c.l.b16 %v81
  %v134 = vunpack.c.l.b16 %v82
  %v135 = vunpack.c.l.b16 %v83
  %v136 = vunpack.c.l.b16 %v84
  %v137 = vunpack.c.l.b16 %v85
  %v138 = vunpack.c.l.b16 %v86
  %v139 = vunpack.c.l.b16 %v87
  %v140 = vunpack.c.l.b16 %v88
  %v141 = vunpack.c.l.b16 %v89
  %v142 = vunpack.c.l.b16 %v90
  %v143 = vunpack.c.l.b16 %v91
  %v144 = vunpack.c.l.b16 %v92
  %v145 = vunpack.c.l.b16 %v93
  %v146 = vunpack.c.l.b16 %v94
  %v147 = vunpack.c.l.b16 %v95
  %v148 = vunpack.c.l.b16 %v96
  %v149 = vunpack.c.l.b16 %v97
  %v150 = vunpack.c.l.b16 %v98
  %v151 = vunpack.c.l.b16 %v99
  %v152 = vunpack.c.l.b16 %v100
  %v153 = vunpack.c.l.b16 %v101
  %v154 = vpack.c.b16 %v131, %v130
  %v155 = vpack.c.b16 %v133, %v132
  %v156 = vpack.c.b16 %v135, %v134
  %v157 = vpack.c.b16 %v137, %v136
  %v158 = vpack.c.b16 %v139, %v138
  %v159 = vpack.c.b16 %v141, %v140
  %v160 = vpack.c.b16 %v143, %v142
  %v161 = vpack.c.b16 %v145, %v144
  %v162 = vpack.c.b16 %v147, %v146
  %v163 = vpack.c.b16 %v149, %v148
  %v164 = vpack.c.b16 %v151, %v150
  %v165 = vpack.c.b16 %v153, %v152
  %vm178 = vcmask 523264
  %v180 = vsel %vm178, %v103, 0
  %182 = vmatprep.subr.bf16.mxu0 0
  %183 = vmatpush1.bf16.msra.mxu0 %v161
  %184 = vmatprep.subr.bf16.mxu0 0
  %185 = vmatpush1.bf16.msra.mxu0 %v160
  %186 = vmatprep.subr.bf16.mxu0 0
  %187 = vmatpush1.bf16.msra.mxu0 %v159
  %188 = vmatprep.subr.bf16.mxu0 0
  %189 = vmatpush1.bf16.msra.mxu0 %v158
  %190 = vmatprep.subr.bf16.mxu0 0
  %191 = vmatpush1.bf16.msra.mxu0 %v157
  %192 = vmatprep.subr.bf16.mxu0 0
  %193 = vmatpush1.bf16.msra.mxu0 %v156
  %194 = vmatprep.subr.bf16.mxu0 0
  %195 = vmatpush1.bf16.msra.mxu0 %v155
  %196 = vmatprep.subr.bf16.mxu0 0
  %197 = vmatpush1.bf16.msra.mxu0 %v154
  %198 = vmatprep.subr.bf16.mxu0 0
  %199 = vmatpush2.bf16.msra.mxu0 0
  %200 = vmatprep.subr.bf16.mxu0 0
  %201 = vmatpush2.bf16.msra.mxu0 0
  %202 = vmatprep.subr.bf16.mxu0 0
  %203 = vmatpush2.bf16.msra.mxu0 0
  %204 = vmatprep.subr.bf16.mxu0 0
  %205 = vmatpush2.bf16.msra.mxu0 0
  %206 = vmatprep.subr.bf16.mxu0 0
  %207 = vmatpush2.bf16.msra.mxu0 %v165
  %208 = vmatprep.subr.bf16.mxu0 0
  %209 = vmatpush2.bf16.msra.mxu0 %v164
  %210 = vmatprep.subr.bf16.mxu0 0
  %211 = vmatpush2.bf16.msra.mxu0 %v163
  %212 = vmatprep.subr.bf16.mxu0 0
  %213 = vmatpush2.bf16.msra.mxu0 %v162
  %214 = vmatprep.mubr.bf16.mxu0 %v180
  %215 = vmatmul.mubr.bf16.gmra.mxu0 %v102
  %v216 = vpop.f32.mrf.mxu0
  %v217 = vadd.f32 %v104, %v216
  %v218 = vpop.f32.mrf.mxu0
  %v219 = vpop.f32.mrf.mxu0
  %v220 = vadd.f32 %v105, %v219
  %v221 = vpop.f32.mrf.mxu0
  %222 = vdwg.mxu0
  %v223 = vld [vmem:[%s4] sm:$0x1]
  %v224 = vld [vmem:[%s5] sm:$0x1]
  %vm225 = vcmask 261120
  %v226 = vsel %vm225, %v217, 0.0
  %227 = vadd.xlane.f32.xlu0 %v226
  %v228 = vpop.xlane.xlu0 %227
  %vm229 = vcmask 254976
  %v230 = vsel %vm229, %v220, 0.0
  %231 = vadd.xlane.f32.xlu0 %v230
  %v232 = vpop.xlane.xlu0 %231
  %v233 = vrcp.pop 32.0
  %v234 = vmul.f32 %v228, %v233
  %v235 = vmul.f32 %v232, %v233
  %v236 = vsub.f32 %v217, %v234
  %v237 = vsub.f32 %v220, %v235
  %v238 = vmul.f32 %v236, %v236
  %v239 = vmul.f32 %v237, %v237
  %v240 = vsel %vm225, %v238, 0.0
  %241 = vadd.xlane.f32.xlu0 %v240
  %v242 = vpop.xlane.xlu0 %241
  %v243 = vsel %vm229, %v239, 0.0
  %244 = vadd.xlane.f32.xlu0 %v243
  %v245 = vpop.xlane.xlu0 %244
  %v246 = vmul.f32 %v242, %v233
  %v247 = vmul.f32 %v245, %v233
  %v248 = vadd.f32 %v246, 1e-05
  %v249 = vadd.f32 %v247, 1e-05
  %v250 = vrsqrt.pop %v248
  %v251 = vrsqrt.pop %v249
  %v252 = vmul.f32 %v236, %v250
  %v253 = vmul.f32 %v237, %v251
  %v255 = vlaneseq
  %v256 = vshrl.u32 %v255, 7
  %v257 = vsub.s32 0, %v256
  %v258 = vrot.slane %v223, %v257
  %v260 = vmul.f32 %v252, %v258
  %v261 = vmul.f32 %v253, %v258
  %v263 = vlaneseq
  %v264 = vshrl.u32 %v263, 7
  %v265 = vsub.s32 0, %v264
  %v266 = vrot.slane %v224, %v265
  %v268 = vadd.f32 %v260, %v266
  %v269 = vadd.f32 %v261, %v266
  %v270 = vld [vmem:[%s6] sm:$0x1]
  %v271 = vld [vmem:[%s7] sm:$0x1]
  %v272 = vsel %vm225, %v268, 0.0
  %273 = vadd.xlane.f32.xlu0 %v272
  %v274 = vpop.xlane.xlu0 %273
  %v275 = vsel %vm229, %v269, 0.0
  %276 = vadd.xlane.f32.xlu0 %v275
  %v277 = vpop.xlane.xlu0 %276
  %v278 = vmul.f32 %v274, %v233
  %v279 = vmul.f32 %v277, %v233
  %v280 = vsub.f32 %v268, %v278
  %v281 = vsub.f32 %v269, %v279
  %v282 = vmul.f32 %v280, %v280
  %v283 = vmul.f32 %v281, %v281
  %v284 = vsel %vm225, %v282, 0.0
  %285 = vadd.xlane.f32.xlu0 %v284
  %v286 = vpop.xlane.xlu0 %285
  %v287 = vsel %vm229, %v283, 0.0
  %288 = vadd.xlane.f32.xlu0 %v287
  %v289 = vpop.xlane.xlu0 %288
  %v290 = vmul.f32 %v286, %v233
  %v291 = vmul.f32 %v289, %v233
  %v292 = vadd.f32 %v290, 1e-05
  %v293 = vadd.f32 %v291, 1e-05
  %v294 = vrsqrt.pop %v292
  %v295 = vrsqrt.pop %v293
  %v296 = vmul.f32 %v280, %v294
  %v297 = vmul.f32 %v281, %v295
  %v299 = vlaneseq
  %v300 = vshrl.u32 %v299, 7
  %v301 = vsub.s32 0, %v300
  %v302 = vrot.slane %v270, %v301
  %v304 = vmul.f32 %v296, %v302
  %v305 = vmul.f32 %v297, %v302
  %v307 = vlaneseq
  %v308 = vshrl.u32 %v307, 7
  %v309 = vsub.s32 0, %v308
  %v310 = vrot.slane %v271, %v309
  %v312 = vadd.f32 %v304, %v310
  %v313 = vadd.f32 %v305, %v310
  %v314 = vld [vmem:[%s8] sm:$0xf]
  %v315 = vld [vmem:[%s8 + $0x4] sm:$0xf]
  %v316 = vld [vmem:[%s8 + $0x8] sm:$0xf]
  %v317 = vld [vmem:[%s8 + $0xc] sm:$0xf]
  %v318 = vpack.c.bf16 %v313, %v312
  %v319 = vld [vmem:[%s9] sm:$0x1]
  %v321 = vlaneseq
  %v322 = vshrl.u32 %v321, 7
  %v323 = vsub.s32 0, %v322
  %v324 = vrot.slane %v319, %v323
  %v330 = vunpack.c.l.b16 %v314
  %v331 = vunpack.c.l.b16 %v315
  %v332 = vunpack.c.l.b16 %v316
  %v333 = vunpack.c.l.b16 %v317
  %v334 = vpack.c.b16 %v331, %v330
  %v335 = vpack.c.b16 %v333, %v332
  %v339 = vsel %vm225, %v318, 0
  %341 = vmatprep.subr.bf16.mxu0 0
  %342 = vmatpush1.bf16.msra.mxu0 0
  %343 = vmatprep.subr.bf16.mxu0 0
  %344 = vmatpush1.bf16.msra.mxu0 0
  %345 = vmatprep.subr.bf16.mxu0 0
  %346 = vmatpush1.bf16.msra.mxu0 0
  %347 = vmatprep.subr.bf16.mxu0 0
  %348 = vmatpush1.bf16.msra.mxu0 0
  %349 = vmatprep.subr.bf16.mxu0 0
  %350 = vmatpush1.bf16.msra.mxu0 0
  %351 = vmatprep.subr.bf16.mxu0 0
  %352 = vmatpush1.bf16.msra.mxu0 0
  %353 = vmatprep.subr.bf16.mxu0 0
  %354 = vmatpush1.bf16.msra.mxu0 %v335
  %355 = vmatprep.subr.bf16.mxu0 0
  %356 = vmatpush1.bf16.msra.mxu0 %v334
  %357 = vmatprep.subr.bf16.mxu0 0
  %358 = vmatpush2.bf16.msra.mxu0 0
  %359 = vmatprep.subr.bf16.mxu0 0
  %360 = vmatpush2.bf16.msra.mxu0 0
  %361 = vmatprep.subr.bf16.mxu0 0
  %362 = vmatpush2.bf16.msra.mxu0 0
  %363 = vmatprep.subr.bf16.mxu0 0
  %364 = vmatpush2.bf16.msra.mxu0 0
  %365 = vmatprep.subr.bf16.mxu0 0
  %366 = vmatpush2.bf16.msra.mxu0 0
  %367 = vmatprep.subr.bf16.mxu0 0
  %368 = vmatpush2.bf16.msra.mxu0 0
  %369 = vmatprep.subr.bf16.mxu0 0
  %370 = vmatpush2.bf16.msra.mxu0 0
  %371 = vmatprep.subr.bf16.mxu0 0
  %372 = vmatpush2.bf16.msra.mxu0 0
  %373 = vmatprep.mubr.bf16.mxu0 0
  %374 = vmatmul.mubr.bf16.gmra.mxu0 %v339
  %v375 = vpop.f32.mrf.mxu0
  %v376 = vadd.f32 %v324, %v375
  %v377 = vpop.f32.mrf.mxu0
  %v378 = vpop.f32.mrf.mxu0
  %v379 = vadd.f32 %v324, %v378
  %v380 = vpop.f32.mrf.mxu0
  %381 = vdwg.mxu0
  %s382 = scalar_lea.vmem %s8, 64
  %v383 = vld [vmem:[%s382] sm:$0xf]
  %v384 = vld [vmem:[%s382 + $0x4] sm:$0xf]
  %v385 = vld [vmem:[%s382 + $0x8] sm:$0xf]
  %v386 = vld [vmem:[%s382 + $0xc] sm:$0xf]
  %s387 = scalar_lea.vmem %s9, 4
  %v388 = vld [vmem:[%s387] sm:$0x1]
  %v390 = vlaneseq
  %v391 = vshrl.u32 %v390, 7
  %v392 = vsub.s32 0, %v391
  %v393 = vrot.slane %v388, %v392
  %v399 = vunpack.c.l.b16 %v383
  %v400 = vunpack.c.l.b16 %v384
  %v401 = vunpack.c.l.b16 %v385
  %v402 = vunpack.c.l.b16 %v386
  %v403 = vpack.c.b16 %v400, %v399
  %v404 = vpack.c.b16 %v402, %v401
  %407 = vmatprep.subr.bf16.mxu0 0
  %408 = vmatpush1.bf16.msra.mxu0 0
  %409 = vmatprep.subr.bf16.mxu0 0
  %410 = vmatpush1.bf16.msra.mxu0 0
  %411 = vmatprep.subr.bf16.mxu0 0
  %412 = vmatpush1.bf16.msra.mxu0 0
  %413 = vmatprep.subr.bf16.mxu0 0
  %414 = vmatpush1.bf16.msra.mxu0 0
  %415 = vmatprep.subr.bf16.mxu0 0
  %416 = vmatpush1.bf16.msra.mxu0 0
  %417 = vmatprep.subr.bf16.mxu0 0
  %418 = vmatpush1.bf16.msra.mxu0 0
  %419 = vmatprep.subr.bf16.mxu0 0
  %420 = vmatpush1.bf16.msra.mxu0 %v404
  %421 = vmatprep.subr.bf16.mxu0 0
  %422 = vmatpush1.bf16.msra.mxu0 %v403
  %423 = vmatprep.subr.bf16.mxu0 0
  %424 = vmatpush2.bf16.msra.mxu0 0
  %425 = vmatprep.subr.bf16.mxu0 0
  %426 = vmatpush2.bf16.msra.mxu0 0
  %427 = vmatprep.subr.bf16.mxu0 0
  %428 = vmatpush2.bf16.msra.mxu0 0
  %429 = vmatprep.subr.bf16.mxu0 0
  %430 = vmatpush2.bf16.msra.mxu0 0
  %431 = vmatprep.subr.bf16.mxu0 0
  %432 = vmatpush2.bf16.msra.mxu0 0
  %433 = vmatprep.subr.bf16.mxu0 0
  %434 = vmatpush2.bf16.msra.mxu0 0
  %435 = vmatprep.subr.bf16.mxu0 0
  %436 = vmatpush2.bf16.msra.mxu0 0
  %437 = vmatprep.subr.bf16.mxu0 0
  %438 = vmatpush2.bf16.msra.mxu0 0
  %439 = vmatprep.mubr.bf16.mxu0 0
  %440 = vmatmul.mubr.bf16.gmra.mxu0 %v339
  %v441 = vpop.f32.mrf.mxu0
  %v442 = vadd.f32 %v393, %v441
  %v443 = vpop.f32.mrf.mxu0
  %v444 = vpop.f32.mrf.mxu0
  %v445 = vadd.f32 %v393, %v444
  %v446 = vpop.f32.mrf.mxu0
  %447 = vdwg.mxu0
  %v448 = vld [vmem:[%s10] sm:$0xf]
  %v449 = vld [vmem:[%s10 + $0x4] sm:$0xf]
  %v450 = vld [vmem:[%s10 + $0x8] sm:$0xf]
  %v451 = vld [vmem:[%s10 + $0xc] sm:$0xf]
  %v452 = vld [vmem:[%s11] sm:$0x1]
  %v454 = vlaneseq
  %v455 = vshrl.u32 %v454, 7
  %v456 = vsub.s32 0, %v455
  %v457 = vrot.slane %v452, %v456
  %v463 = vunpack.c.l.b16 %v448
  %v464 = vunpack.c.l.b16 %v449
  %v465 = vunpack.c.l.b16 %v450
  %v466 = vunpack.c.l.b16 %v451
  %v467 = vpack.c.b16 %v464, %v463
  %v468 = vpack.c.b16 %v466, %v465
  %471 = vmatprep.subr.bf16.mxu0 0
  %472 = vmatpush1.bf16.msra.mxu0 0
  %473 = vmatprep.subr.bf16.mxu0 0
  %474 = vmatpush1.bf16.msra.mxu0 0
  %475 = vmatprep.subr.bf16.mxu0 0
  %476 = vmatpush1.bf16.msra.mxu0 0
  %477 = vmatprep.subr.bf16.mxu0 0
  %478 = vmatpush1.bf16.msra.mxu0 0
  %479 = vmatprep.subr.bf16.mxu0 0
  %480 = vmatpush1.bf16.msra.mxu0 0
  %481 = vmatprep.subr.bf16.mxu0 0
  %482 = vmatpush1.bf16.msra.mxu0 0
  %483 = vmatprep.subr.bf16.mxu0 0
  %484 = vmatpush1.bf16.msra.mxu0 %v468
  %485 = vmatprep.subr.bf16.mxu0 0
  %486 = vmatpush1.bf16.msra.mxu0 %v467
  %487 = vmatprep.subr.bf16.mxu0 0
  %488 = vmatpush2.bf16.msra.mxu0 0
  %489 = vmatprep.subr.bf16.mxu0 0
  %490 = vmatpush2.bf16.msra.mxu0 0
  %491 = vmatprep.subr.bf16.mxu0 0
  %492 = vmatpush2.bf16.msra.mxu0 0
  %493 = vmatprep.subr.bf16.mxu0 0
  %494 = vmatpush2.bf16.msra.mxu0 0
  %495 = vmatprep.subr.bf16.mxu0 0
  %496 = vmatpush2.bf16.msra.mxu0 0
  %497 = vmatprep.subr.bf16.mxu0 0
  %498 = vmatpush2.bf16.msra.mxu0 0
  %499 = vmatprep.subr.bf16.mxu0 0
  %500 = vmatpush2.bf16.msra.mxu0 0
  %501 = vmatprep.subr.bf16.mxu0 0
  %502 = vmatpush2.bf16.msra.mxu0 0
  %503 = vmatprep.mubr.bf16.mxu0 0
  %504 = vmatmul.mubr.bf16.gmra.mxu0 %v339
  %v505 = vpop.f32.mrf.mxu0
  %v506 = vadd.f32 %v457, %v505
  %v507 = vpop.f32.mrf.mxu0
  %v508 = vpop.f32.mrf.mxu0
  %v509 = vadd.f32 %v457, %v508
  %v510 = vpop.f32.mrf.mxu0
  %511 = vdwg.mxu0
  %vm512 = vcmask 64512
  %v514 = vsel %vm512, %v376, 0
  %v517 = vsel %vm512, %v379, 0
  %v520 = vsel %vm512, %v442, 0
  %v523 = vsel %vm512, %v445, 0
  %525 = vmatprep.subr.mxu0 0.0
  %526 = vmatpush1.xpose.msra.mxu0 0.0
  %527 = vmatprep.subr.mxu0 0.0
  %528 = vmatpush1.xpose.msra.mxu0 0.0
  %529 = vmatprep.subr.mxu0 0.0
  %530 = vmatpush1.xpose.msra.mxu0 0.0
  %531 = vmatprep.subr.mxu0 0.0
  %532 = vmatpush1.xpose.msra.mxu0 0.0
  %533 = vmatprep.subr.mxu0 0.0
  %534 = vmatpush1.xpose.msra.mxu0 0.0
  %535 = vmatprep.subr.mxu0 0.0
  %536 = vmatpush1.xpose.msra.mxu0 0.0
  %537 = vmatprep.subr.mxu0 0.0
  %538 = vmatpush1.xpose.msra.mxu0 0.0
  %539 = vmatprep.subr.mxu0 0.0
  %540 = vmatpush1.xpose.msra.mxu0 0.0
  %541 = vmatprep.subr.mxu0 0.0
  %542 = vmatpush1.xpose.msra.mxu0 0.0
  %543 = vmatprep.subr.mxu0 0.0
  %544 = vmatpush1.xpose.msra.mxu0 0.0
  %545 = vmatprep.subr.mxu0 0.0
  %546 = vmatpush1.xpose.msra.mxu0 0.0
  %547 = vmatprep.subr.mxu0 0.0
  %548 = vmatpush1.xpose.msra.mxu0 0.0
  %549 = vmatprep.subr.mxu0 0.0
  %550 = vmatpush1.xpose.msra.mxu0 0.0
  %551 = vmatprep.subr.mxu0 0.0
  %552 = vmatpush1.xpose.msra.mxu0 0.0
  %553 = vmatprep.subr.mxu0 0.0
  %554 = vmatpush1.xpose.msra.mxu0 %v523
  %555 = vmatprep.subr.mxu0 0.0
  %556 = vmatpush1.xpose.msra.mxu0 %v520
  %557 = vmatprep.subr.mxu0 0.0
  %558 = vmatpush2.xpose.msra.mxu0 0.0
  %559 = vmatprep.subr.mxu0 0.0
  %560 = vmatpush2.xpose.msra.mxu0 0.0
  %561 = vmatprep.subr.mxu0 0.0
  %562 = vmatpush2.xpose.msra.mxu0 0.0
  %563 = vmatprep.subr.mxu0 0.0
  %564 = vmatpush2.xpose.msra.mxu0 0.0
  %565 = vmatprep.subr.mxu0 0.0
  %566 = vmatpush2.xpose.msra.mxu0 0.0
  %567 = vmatprep.subr.mxu0 0.0
  %568 = vmatpush2.xpose.msra.mxu0 0.0
  %569 = vmatprep.subr.mxu0 0.0
  %570 = vmatpush2.xpose.msra.mxu0 0.0
  %571 = vmatprep.subr.mxu0 0.0
  %572 = vmatpush2.xpose.msra.mxu0 0.0
  %573 = vmatprep.subr.mxu0 0.0
  %574 = vmatpush2.xpose.msra.mxu0 0.0
  %575 = vmatprep.subr.mxu0 0.0
  %576 = vmatpush2.xpose.msra.mxu0 0.0
  %577 = vmatprep.subr.mxu0 0.0
  %578 = vmatpush2.xpose.msra.mxu0 0.0
  %579 = vmatprep.subr.mxu0 0.0
  %580 = vmatpush2.xpose.msra.mxu0 0.0
  %581 = vmatprep.subr.mxu0 0.0
  %582 = vmatpush2.xpose.msra.mxu0 0.0
  %583 = vmatprep.subr.mxu0 0.0
  %584 = vmatpush2.xpose.msra.mxu0 0.0
  %585 = vmatprep.subr.mxu0 0.0
  %586 = vmatpush2.xpose.msra.mxu0 0.0
  %587 = vmatprep.subr.mxu0 0.0
  %588 = vmatpush2.xpose.msra.mxu0 0.0
  %589 = vmatprep.mubr.f32.mxu0 0.0
  %590 = vmatmul.mubr.f32.gmra.mxu0 %v514
  %v591 = vpop.f32.mrf.mxu0
  %v592 = vadd.f32 0.0, %v591
  %v593 = vpop.f32.mrf.mxu0
  %594 = vmatprep.mubr.f32.mxu0 0.0
  %595 = vmatmul.mubr.f32.gmra.mxu0 %v517
  %v596 = vpop.f32.mrf.mxu0
  %v597 = vadd.f32 0.0, %v596
  %v598 = vpop.f32.mrf.mxu0
  %599 = vdwg.mxu0
  %v600 = vmul.f32 %v592, 0.35355338
  %v601 = vmul.f32 %v597, 0.35355338
  %v602 = vadd.f32 %v600, %v72
  %v603 = vadd.f32 %v601, %v73
  %vm604 = vcmask 80896
  %v605 = vsel %vm604, %v602, -inf
  %606 = vmax.xlane.f32.xlu0 %v605
  %v607 = vpop.xlane.xlu0 %606
  %vm608 = vcmask 74752
  %v609 = vsel %vm608, %v603, -inf
  %610 = vmax.xlane.f32.xlu0 %v609
  %v611 = vpop.xlane.xlu0 %610
  %v612 = vsub.f32 %v602, %v607
  %v613 = vsub.f32 %v603, %v611
  %v614 = vmul.f32 %v612, 1.442695
  %v615 = vpow.pop %v614
  %v616 = vmul.f32 %v613, 1.442695
  %v617 = vpow.pop %v616
  %v618 = vsel %vm604, %v615, 0.0
  %619 = vadd.xlane.f32.xlu0 %v618
  %v620 = vpop.xlane.xlu0 %619
  %v621 = vsel %vm608, %v617, 0.0
  %622 = vadd.xlane.f32.xlu0 %v621
  %v623 = vpop.xlane.xlu0 %622
  %v624 = vrcp.pop %v620
  %v625 = vrcp.pop %v623
  %v626 = vmul.f32 %v615, %v624
  %v627 = vmul.f32 %v617, %v625
  %s628 = scalar_lea.vmem %s8, 16
  %v629 = vld [vmem:[%s628] sm:$0xf]
  %v630 = vld [vmem:[%s628 + $0x4] sm:$0xf]
  %v631 = vld [vmem:[%s628 + $0x8] sm:$0xf]
  %v632 = vld [vmem:[%s628 + $0xc] sm:$0xf]
  %s633 = scalar_lea.vmem %s9, 1
  %v634 = vld [vmem:[%s633] sm:$0x1]
  %v636 = vlaneseq
  %v637 = vshrl.u32 %v636, 7
  %v638 = vsub.s32 0, %v637
  %v639 = vrot.slane %v634, %v638
  %v645 = vunpack.c.l.b16 %v629
  %v646 = vunpack.c.l.b16 %v630
  %v647 = vunpack.c.l.b16 %v631
  %v648 = vunpack.c.l.b16 %v632
  %v649 = vpack.c.b16 %v646, %v645
  %v650 = vpack.c.b16 %v648, %v647
  %653 = vmatprep.subr.bf16.mxu0 0
  %654 = vmatpush1.bf16.msra.mxu0 0
  %655 = vmatprep.subr.bf16.mxu0 0
  %656 = vmatpush1.bf16.msra.mxu0 0
  %657 = vmatprep.subr.bf16.mxu0 0
  %658 = vmatpush1.bf16.msra.mxu0 0
  %659 = vmatprep.subr.bf16.mxu0 0
  %660 = vmatpush1.bf16.msra.mxu0 0
  %661 = vmatprep.subr.bf16.mxu0 0
  %662 = vmatpush1.bf16.msra.mxu0 0
  %663 = vmatprep.subr.bf16.mxu0 0
  %664 = vmatpush1.bf16.msra.mxu0 0
  %665 = vmatprep.subr.bf16.mxu0 0
  %666 = vmatpush1.bf16.msra.mxu0 %v650
  %667 = vmatprep.subr.bf16.mxu0 0
  %668 = vmatpush1.bf16.msra.mxu0 %v649
  %669 = vmatprep.subr.bf16.mxu0 0
  %670 = vmatpush2.bf16.msra.mxu0 0
  %671 = vmatprep.subr.bf16.mxu0 0
  %672 = vmatpush2.bf16.msra.mxu0 0
  %673 = vmatprep.subr.bf16.mxu0 0
  %674 = vmatpush2.bf16.msra.mxu0 0
  %675 = vmatprep.subr.bf16.mxu0 0
  %676 = vmatpush2.bf16.msra.mxu0 0
  %677 = vmatprep.subr.bf16.mxu0 0
  %678 = vmatpush2.bf16.msra.mxu0 0
  %679 = vmatprep.subr.bf16.mxu0 0
  %680 = vmatpush2.bf16.msra.mxu0 0
  %681 = vmatprep.subr.bf16.mxu0 0
  %682 = vmatpush2.bf16.msra.mxu0 0
  %683 = vmatprep.subr.bf16.mxu0 0
  %684 = vmatpush2.bf16.msra.mxu0 0
  %685 = vmatprep.mubr.bf16.mxu0 0
  %686 = vmatmul.mubr.bf16.gmra.mxu0 %v339
  %v687 = vpop.f32.mrf.mxu0
  %v688 = vadd.f32 %v639, %v687
  %v689 = vpop.f32.mrf.mxu0
  %v690 = vpop.f32.mrf.mxu0
  %v691 = vadd.f32 %v639, %v690
  %v692 = vpop.f32.mrf.mxu0
  %693 = vdwg.mxu0
  %s694 = scalar_lea.vmem %s8, 80
  %v695 = vld [vmem:[%s694] sm:$0xf]
  %v696 = vld [vmem:[%s694 + $0x4] sm:$0xf]
  %v697 = vld [vmem:[%s694 + $0x8] sm:$0xf]
  %v698 = vld [vmem:[%s694 + $0xc] sm:$0xf]
  %s699 = scalar_lea.vmem %s9, 5
  %v700 = vld [vmem:[%s699] sm:$0x1]
  %v702 = vlaneseq
  %v703 = vshrl.u32 %v702, 7
  %v704 = vsub.s32 0, %v703
  %v705 = vrot.slane %v700, %v704
  %v711 = vunpack.c.l.b16 %v695
  %v712 = vunpack.c.l.b16 %v696
  %v713 = vunpack.c.l.b16 %v697
  %v714 = vunpack.c.l.b16 %v698
  %v715 = vpack.c.b16 %v712, %v711
  %v716 = vpack.c.b16 %v714, %v713
  %719 = vmatprep.subr.bf16.mxu0 0
  %720 = vmatpush1.bf16.msra.mxu0 0
  %721 = vmatprep.subr.bf16.mxu0 0
  %722 = vmatpush1.bf16.msra.mxu0 0
  %723 = vmatprep.subr.bf16.mxu0 0
  %724 = vmatpush1.bf16.msra.mxu0 0
  %725 = vmatprep.subr.bf16.mxu0 0
  %726 = vmatpush1.bf16.msra.mxu0 0
  %727 = vmatprep.subr.bf16.mxu0 0
  %728 = vmatpush1.bf16.msra.mxu0 0
  %729 = vmatprep.subr.bf16.mxu0 0
  %730 = vmatpush1.bf16.msra.mxu0 0
  %731 = vmatprep.subr.bf16.mxu0 0
  %732 = vmatpush1.bf16.msra.mxu0 %v716
  %733 = vmatprep.subr.bf16.mxu0 0
  %734 = vmatpush1.bf16.msra.mxu0 %v715
  %735 = vmatprep.subr.bf16.mxu0 0
  %736 = vmatpush2.bf16.msra.mxu0 0
  %737 = vmatprep.subr.bf16.mxu0 0
  %738 = vmatpush2.bf16.msra.mxu0 0
  %739 = vmatprep.subr.bf16.mxu0 0
  %740 = vmatpush2.bf16.msra.mxu0 0
  %741 = vmatprep.subr.bf16.mxu0 0
  %742 = vmatpush2.bf16.msra.mxu0 0
  %743 = vmatprep.subr.bf16.mxu0 0
  %744 = vmatpush2.bf16.msra.mxu0 0
  %745 = vmatprep.subr.bf16.mxu0 0
  %746 = vmatpush2.bf16.msra.mxu0 0
  %747 = vmatprep.subr.bf16.mxu0 0
  %748 = vmatpush2.bf16.msra.mxu0 0
  %749 = vmatprep.subr.bf16.mxu0 0
  %750 = vmatpush2.bf16.msra.mxu0 0
  %751 = vmatprep.mubr.bf16.mxu0 0
  %752 = vmatmul.mubr.bf16.gmra.mxu0 %v339
  %v753 = vpop.f32.mrf.mxu0
  %v754 = vadd.f32 %v705, %v753
  %v755 = vpop.f32.mrf.mxu0
  %v756 = vpop.f32.mrf.mxu0
  %v757 = vadd.f32 %v705, %v756
  %v758 = vpop.f32.mrf.mxu0
  %759 = vdwg.mxu0
  %s760 = scalar_lea.vmem %s10, 16
  %v761 = vld [vmem:[%s760] sm:$0xf]
  %v762 = vld [vmem:[%s760 + $0x4] sm:$0xf]
  %v763 = vld [vmem:[%s760 + $0x8] sm:$0xf]
  %v764 = vld [vmem:[%s760 + $0xc] sm:$0xf]
  %s765 = scalar_lea.vmem %s11, 1
  %v766 = vld [vmem:[%s765] sm:$0x1]
  %v768 = vlaneseq
  %v769 = vshrl.u32 %v768, 7
  %v770 = vsub.s32 0, %v769
  %v771 = vrot.slane %v766, %v770
  %v777 = vunpack.c.l.b16 %v761
  %v778 = vunpack.c.l.b16 %v762
  %v779 = vunpack.c.l.b16 %v763
  %v780 = vunpack.c.l.b16 %v764
  %v781 = vpack.c.b16 %v778, %v777
  %v782 = vpack.c.b16 %v780, %v779
  %785 = vmatprep.subr.bf16.mxu0 0
  %786 = vmatpush1.bf16.msra.mxu0 0
  %787 = vmatprep.subr.bf16.mxu0 0
  %788 = vmatpush1.bf16.msra.mxu0 0
  %789 = vmatprep.subr.bf16.mxu0 0
  %790 = vmatpush1.bf16.msra.mxu0 0
  %791 = vmatprep.subr.bf16.mxu0 0
  %792 = vmatpush1.bf16.msra.mxu0 0
  %793 = vmatprep.subr.bf16.mxu0 0
  %794 = vmatpush1.bf16.msra.mxu0 0
  %795 = vmatprep.subr.bf16.mxu0 0
  %796 = vmatpush1.bf16.msra.mxu0 0
  %797 = vmatprep.subr.bf16.mxu0 0
  %798 = vmatpush1.bf16.msra.mxu0 %v782
  %799 = vmatprep.subr.bf16.mxu0 0
  %800 = vmatpush1.bf16.msra.mxu0 %v781
  %801 = vmatprep.subr.bf16.mxu0 0
  %802 = vmatpush2.bf16.msra.mxu0 0
  %803 = vmatprep.subr.bf16.mxu0 0
  %804 = vmatpush2.bf16.msra.mxu0 0
  %805 = vmatprep.subr.bf16.mxu0 0
  %806 = vmatpush2.bf16.msra.mxu0 0
  %807 = vmatprep.subr.bf16.mxu0 0
  %808 = vmatpush2.bf16.msra.mxu0 0
  %809 = vmatprep.subr.bf16.mxu0 0
  %810 = vmatpush2.bf16.msra.mxu0 0
  %811 = vmatprep.subr.bf16.mxu0 0
  %812 = vmatpush2.bf16.msra.mxu0 0
  %813 = vmatprep.subr.bf16.mxu0 0
  %814 = vmatpush2.bf16.msra.mxu0 0
  %815 = vmatprep.subr.bf16.mxu0 0
  %816 = vmatpush2.bf16.msra.mxu0 0
  %817 = vmatprep.mubr.bf16.mxu0 0
  %818 = vmatmul.mubr.bf16.gmra.mxu0 %v339
  %v819 = vpop.f32.mrf.mxu0
  %v820 = vadd.f32 %v771, %v819
  %v821 = vpop.f32.mrf.mxu0
  %v822 = vpop.f32.mrf.mxu0
  %v823 = vadd.f32 %v771, %v822
  %v824 = vpop.f32.mrf.mxu0
  %825 = vdwg.mxu0
  %v827 = vsel %vm512, %v688, 0
  %v830 = vsel %vm512, %v691, 0
  %v833 = vsel %vm512, %v754, 0
  %v836 = vsel %vm512, %v757, 0
  %838 = vmatprep.subr.mxu0 0.0
  %839 = vmatpush1.xpose.msra.mxu0 0.0
  %840 = vmatprep.subr.mxu0 0.0
  %841 = vmatpush1.xpose.msra.mxu0 0.0
  %842 = vmatprep.subr.mxu0 0.0
  %843 = vmatpush1.xpose.msra.mxu0 0.0
  %844 = vmatprep.subr.mxu0 0.0
  %845 = vmatpush1.xpose.msra.mxu0 0.0
  %846 = vmatprep.subr.mxu0 0.0
  %847 = vmatpush1.xpose.msra.mxu0 0.0
  %848 = vmatprep.subr.mxu0 0.0
  %849 = vmatpush1.xpose.msra.mxu0 0.0
  %850 = vmatprep.subr.mxu0 0.0
  %851 = vmatpush1.xpose.msra.mxu0 0.0
  %852 = vmatprep.subr.mxu0 0.0
  %853 = vmatpush1.xpose.msra.mxu0 0.0
  %854 = vmatprep.subr.mxu0 0.0
  %855 = vmatpush1.xpose.msra.mxu0 0.0
  %856 = vmatprep.subr.mxu0 0.0
  %857 = vmatpush1.xpose.msra.mxu0 0.0
  %858 = vmatprep.subr.mxu0 0.0
  %859 = vmatpush1.xpose.msra.mxu0 0.0
  %860 = vmatprep.subr.mxu0 0.0
  %861 = vmatpush1.xpose.msra.mxu0 0.0
  %862 = vmatprep.subr.mxu0 0.0
  %863 = vmatpush1.xpose.msra.mxu0 0.0
  %864 = vmatprep.subr.mxu0 0.0
  %865 = vmatpush1.xpose.msra.mxu0 0.0
  %866 = vmatprep.subr.mxu0 0.0
  %867 = vmatpush1.xpose.msra.mxu0 %v836
  %868 = vmatprep.subr.mxu0 0.0
  %869 = vmatpush1.xpose.msra.mxu0 %v833
  %870 = vmatprep.subr.mxu0 0.0
  %871 = vmatpush2.xpose.msra.mxu0 0.0
  %872 = vmatprep.subr.mxu0 0.0
  %873 = vmatpush2.xpose.msra.mxu0 0.0
  %874 = vmatprep.subr.mxu0 0.0
  %875 = vmatpush2.xpose.msra.mxu0 0.0
  %876 = vmatprep.subr.mxu0 0.0
  %877 = vmatpush2.xpose.msra.mxu0 0.0
  %878 = vmatprep.subr.mxu0 0.0
  %879 = vmatpush2.xpose.msra.mxu0 0.0
  %880 = vmatprep.subr.mxu0 0.0
  %881 = vmatpush2.xpose.msra.mxu0 0.0
  %882 = vmatprep.subr.mxu0 0.0
  %883 = vmatpush2.xpose.msra.mxu0 0.0
  %884 = vmatprep.subr.mxu0 0.0
  %885 = vmatpush2.xpose.msra.mxu0 0.0
  %886 = vmatprep.subr.mxu0 0.0
  %887 = vmatpush2.xpose.msra.mxu0 0.0
  %888 = vmatprep.subr.mxu0 0.0
  %889 = vmatpush2.xpose.msra.mxu0 0.0
  %890 = vmatprep.subr.mxu0 0.0
  %891 = vmatpush2.xpose.msra.mxu0 0.0
  %892 = vmatprep.subr.mxu0 0.0
  %893 = vmatpush2.xpose.msra.mxu0 0.0
  %894 = vmatprep.subr.mxu0 0.0
  %895 = vmatpush2.xpose.msra.mxu0 0.0
  %896 = vmatprep.subr.mxu0 0.0
  %897 = vmatpush2.xpose.msra.mxu0 0.0
  %898 = vmatprep.subr.mxu0 0.0
  %899 = vmatpush2.xpose.msra.mxu0 0.0
  %900 = vmatprep.subr.mxu0 0.0
  %901 = vmatpush2.xpose.msra.mxu0 0.0
  %902 = vmatprep.mubr.f32.mxu0 0.0
  %903 = vmatmul.mubr.f32.gmra.mxu0 %v827
  %v904 = vpop.f32.mrf.mxu0
  %v905 = vadd.f32 0.0, %v904
  %v906 = vpop.f32.mrf.mxu0
  %907 = vmatprep.mubr.f32.mxu0 0.0
  %908 = vmatmul.mubr.f32.gmra.mxu0 %v830
  %v909 = vpop.f32.mrf.mxu0
  %v910 = vadd.f32 0.0, %v909
  %v911 = vpop.f32.mrf.mxu0
  %912 = vdwg.mxu0
  %v913 = vmul.f32 %v905, 0.35355338
  %v914 = vmul.f32 %v910, 0.35355338
  %v915 = vadd.f32 %v913, %v72
  %v916 = vadd.f32 %v914, %v73
  %v917 = vsel %vm604, %v915, -inf
  %918 = vmax.xlane.f32.xlu0 %v917
  %v919 = vpop.xlane.xlu0 %918
  %v920 = vsel %vm608, %v916, -inf
  %921 = vmax.xlane.f32.xlu0 %v920
  %v922 = vpop.xlane.xlu0 %921
  %v923 = vsub.f32 %v915, %v919
  %v924 = vsub.f32 %v916, %v922
  %v925 = vmul.f32 %v923, 1.442695
  %v926 = vpow.pop %v925
  %v927 = vmul.f32 %v924, 1.442695
  %v928 = vpow.pop %v927
  %v929 = vsel %vm604, %v926, 0.0
  %930 = vadd.xlane.f32.xlu0 %v929
  %v931 = vpop.xlane.xlu0 %930
  %v932 = vsel %vm608, %v928, 0.0
  %933 = vadd.xlane.f32.xlu0 %v932
  %v934 = vpop.xlane.xlu0 %933
  %v935 = vrcp.pop %v931
  %v936 = vrcp.pop %v934
  %v937 = vmul.f32 %v926, %v935
  %v938 = vmul.f32 %v928, %v936
  %v940 = vsel %vm604, %v937, 0
  %v943 = vsel %vm604, %v938, 0
  %vm945 = vcmask 1041408
  %v947 = vsel %vm945, %v823, 0
  %949 = vmatprep.subr.mxu0 0.0
  %950 = vmatpush1.msra.mxu0 0.0
  %951 = vmatprep.subr.mxu0 0.0
  %952 = vmatpush1.msra.mxu0 0.0
  %953 = vmatprep.subr.mxu0 0.0
  %954 = vmatpush1.msra.mxu0 0.0
  %955 = vmatprep.subr.mxu0 0.0
  %956 = vmatpush1.msra.mxu0 0.0
  %957 = vmatprep.subr.mxu0 0.0
  %958 = vmatpush1.msra.mxu0 0.0
  %959 = vmatprep.subr.mxu0 0.0
  %960 = vmatpush1.msra.mxu0 0.0
  %961 = vmatprep.subr.mxu0 0.0
  %962 = vmatpush1.msra.mxu0 0.0
  %963 = vmatprep.subr.mxu0 0.0
  %964 = vmatpush1.msra.mxu0 0.0
  %965 = vmatprep.subr.mxu0 0.0
  %966 = vmatpush1.msra.mxu0 0.0
  %967 = vmatprep.subr.mxu0 0.0
  %968 = vmatpush1.msra.mxu0 0.0
  %969 = vmatprep.subr.mxu0 0.0
  %970 = vmatpush1.msra.mxu0 0.0
  %971 = vmatprep.subr.mxu0 0.0
  %972 = vmatpush1.msra.mxu0 0.0
  %973 = vmatprep.subr.mxu0 0.0
  %974 = vmatpush1.msra.mxu0 0.0
  %975 = vmatprep.subr.mxu0 0.0
  %976 = vmatpush1.msra.mxu0 0.0
  %977 = vmatprep.subr.mxu0 0.0
  %978 = vmatpush1.msra.mxu0 %v947
  %979 = vmatprep.subr.mxu0 0.0
  %980 = vmatpush1.msra.mxu0 %v820
  %981 = vmatprep.subr.mxu0 0.0
  %982 = vmatpush2.msra.mxu0 0.0
  %983 = vmatprep.subr.mxu0 0.0
  %984 = vmatpush2.msra.mxu0 0.0
  %985 = vmatprep.subr.mxu0 0.0
  %986 = vmatpush2.msra.mxu0 0.0
  %987 = vmatprep.subr.mxu0 0.0
  %988 = vmatpush2.msra.mxu0 0.0
  %989 = vmatprep.subr.mxu0 0.0
  %990 = vmatpush2.msra.mxu0 0.0
  %991 = vmatprep.subr.mxu0 0.0
  %992 = vmatpush2.msra.mxu0 0.0
  %993 = vmatprep.subr.mxu0 0.0
  %994 = vmatpush2.msra.mxu0 0.0
  %995 = vmatprep.subr.mxu0 0.0
  %996 = vmatpush2.msra.mxu0 0.0
  %997 = vmatprep.subr.mxu0 0.0
  %998 = vmatpush2.msra.mxu0 0.0
  %999 = vmatprep.subr.mxu0 0.0
  %1000 = vmatpush2.msra.mxu0 0.0
  %1001 = vmatprep.subr.mxu0 0.0
  %1002 = vmatpush2.msra.mxu0 0.0
  %1003 = vmatprep.subr.mxu0 0.0
  %1004 = vmatpush2.msra.mxu0 0.0
  %1005 = vmatprep.subr.mxu0 0.0
  %1006 = vmatpush2.msra.mxu0 0.0
  %1007 = vmatprep.subr.mxu0 0.0
  %1008 = vmatpush2.msra.mxu0 0.0
  %1009 = vmatprep.subr.mxu0 0.0
  %1010 = vmatpush2.msra.mxu0 0.0
  %1011 = vmatprep.subr.mxu0 0.0
  %1012 = vmatpush2.msra.mxu0 0.0
  %1013 = vmatprep.mubr.f32.mxu0 0.0
  %1014 = vmatmul.mubr.f32.gmra.mxu0 %v940
  %v1015 = vpop.f32.mrf.mxu0
  %v1016 = vadd.f32 0.0, %v1015
  %v1017 = vpop.f32.mrf.mxu0
  %1018 = vmatprep.mubr.f32.mxu0 0.0
  %1019 = vmatmul.mubr.f32.gmra.mxu0 %v943
  %v1020 = vpop.f32.mrf.mxu0
  %v1021 = vadd.f32 0.0, %v1020
  %v1022 = vpop.f32.mrf.mxu0
  %1023 = vdwg.mxu0
  %v1025 = vsel %vm604, %v626, 0
  %v1028 = vsel %vm604, %v627, 0
  %v1031 = vsel %vm945, %v509, 0
  %1033 = vmatprep.subr.mxu0 0.0
  %1034 = vmatpush1.msra.mxu0 0.0
  %1035 = vmatprep.subr.mxu0 0.0
  %1036 = vmatpush1.msra.mxu0 0.0
  %1037 = vmatprep.subr.mxu0 0.0
  %1038 = vmatpush1.msra.mxu0 0.0
  %1039 = vmatprep.subr.mxu0 0.0
  %1040 = vmatpush1.msra.mxu0 0.0
  %1041 = vmatprep.subr.mxu0 0.0
  %1042 = vmatpush1.msra.mxu0 0.0
  %1043 = vmatprep.subr.mxu0 0.0
  %1044 = vmatpush1.msra.mxu0 0.0
  %1045 = vmatprep.subr.mxu0 0.0
  %1046 = vmatpush1.msra.mxu0 0.0
  %1047 = vmatprep.subr.mxu0 0.0
  %1048 = vmatpush1.msra.mxu0 0.0
  %1049 = vmatprep.subr.mxu0 0.0
  %1050 = vmatpush1.msra.mxu0 0.0
  %1051 = vmatprep.subr.mxu0 0.0
  %1052 = vmatpush1.msra.mxu0 0.0
  %1053 = vmatprep.subr.mxu0 0.0
  %1054 = vmatpush1.msra.mxu0 0.0
  %1055 = vmatprep.subr.mxu0 0.0
  %1056 = vmatpush1.msra.mxu0 0.0
  %1057 = vmatprep.subr.mxu0 0.0
  %1058 = vmatpush1.msra.mxu0 0.0
  %1059 = vmatprep.subr.mxu0 0.0
  %1060 = vmatpush1.msra.mxu0 0.0
  %1061 = vmatprep.subr.mxu0 0.0
  %1062 = vmatpush1.msra.mxu0 %v1031
  %1063 = vmatprep.subr.mxu0 0.0
  %1064 = vmatpush1.msra.mxu0 %v506
  %1065 = vmatprep.subr.mxu0 0.0
  %1066 = vmatpush2.msra.mxu0 0.0
  %1067 = vmatprep.subr.mxu0 0.0
  %1068 = vmatpush2.msra.mxu0 0.0
  %1069 = vmatprep.subr.mxu0 0.0
  %1070 = vmatpush2.msra.mxu0 0.0
  %1071 = vmatprep.subr.mxu0 0.0
  %1072 = vmatpush2.msra.mxu0 0.0
  %1073 = vmatprep.subr.mxu0 0.0
  %1074 = vmatpush2.msra.mxu0 0.0
  %1075 = vmatprep.subr.mxu0 0.0
  %1076 = vmatpush2.msra.mxu0 0.0
  %1077 = vmatprep.subr.mxu0 0.0
  %1078 = vmatpush2.msra.mxu0 0.0
  %1079 = vmatprep.subr.mxu0 0.0
  %1080 = vmatpush2.msra.mxu0 0.0
  %1081 = vmatprep.subr.mxu0 0.0
  %1082 = vmatpush2.msra.mxu0 0.0
  %1083 = vmatprep.subr.mxu0 0.0
  %1084 = vmatpush2.msra.mxu0 0.0
  %1085 = vmatprep.subr.mxu0 0.0
  %1086 = vmatpush2.msra.mxu0 0.0
  %1087 = vmatprep.subr.mxu0 0.0
  %1088 = vmatpush2.msra.mxu0 0.0
  %1089 = vmatprep.subr.mxu0 0.0
  %1090 = vmatpush2.msra.mxu0 0.0
  %1091 = vmatprep.subr.mxu0 0.0
  %1092 = vmatpush2.msra.mxu0 0.0
  %1093 = vmatprep.subr.mxu0 0.0
  %1094 = vmatpush2.msra.mxu0 0.0
  %1095 = vmatprep.subr.mxu0 0.0
  %1096 = vmatpush2.msra.mxu0 0.0
  %1097 = vmatprep.mubr.f32.mxu0 0.0
  %1098 = vmatmul.mubr.f32.gmra.mxu0 %v1025
  %v1099 = vpop.f32.mrf.mxu0
  %v1100 = vadd.f32 %v1016, %v1099
  %v1101 = vpop.f32.mrf.mxu0
  %1102 = vmatprep.mubr.f32.mxu0 0.0
  %1103 = vmatmul.mubr.f32.gmra.mxu0 %v1028
  %v1104 = vpop.f32.mrf.mxu0
  %v1105 = vadd.f32 %v1021, %v1104
  %v1106 = vpop.f32.mrf.mxu0
  %1107 = vdwg.mxu0
  %s1108 = scalar_lea.vmem %s8, 32
  %v1109 = vld [vmem:[%s1108] sm:$0xf]
  %v1110 = vld [vmem:[%s1108 + $0x4] sm:$0xf]
  %v1111 = vld [vmem:[%s1108 + $0x8] sm:$0xf]
  %v1112 = vld [vmem:[%s1108 + $0xc] sm:$0xf]
  %s1113 = scalar_lea.vmem %s9, 2
  %v1114 = vld [vmem:[%s1113] sm:$0x1]
  %v1116 = vlaneseq
  %v1117 = vshrl.u32 %v1116, 7
  %v1118 = vsub.s32 0, %v1117
  %v1119 = vrot.slane %v1114, %v1118
  %v1125 = vunpack.c.l.b16 %v1109
  %v1126 = vunpack.c.l.b16 %v1110
  %v1127 = vunpack.c.l.b16 %v1111
  %v1128 = vunpack.c.l.b16 %v1112
  %v1129 = vpack.c.b16 %v1126, %v1125
  %v1130 = vpack.c.b16 %v1128, %v1127
  %1133 = vmatprep.subr.bf16.mxu0 0
  %1134 = vmatpush1.bf16.msra.mxu0 0
  %1135 = vmatprep.subr.bf16.mxu0 0
  %1136 = vmatpush1.bf16.msra.mxu0 0
  %1137 = vmatprep.subr.bf16.mxu0 0
  %1138 = vmatpush1.bf16.msra.mxu0 0
  %1139 = vmatprep.subr.bf16.mxu0 0
  %1140 = vmatpush1.bf16.msra.mxu0 0
  %1141 = vmatprep.subr.bf16.mxu0 0
  %1142 = vmatpush1.bf16.msra.mxu0 0
  %1143 = vmatprep.subr.bf16.mxu0 0
  %1144 = vmatpush1.bf16.msra.mxu0 0
  %1145 = vmatprep.subr.bf16.mxu0 0
  %1146 = vmatpush1.bf16.msra.mxu0 %v1130
  %1147 = vmatprep.subr.bf16.mxu0 0
  %1148 = vmatpush1.bf16.msra.mxu0 %v1129
  %1149 = vmatprep.subr.bf16.mxu0 0
  %1150 = vmatpush2.bf16.msra.mxu0 0
  %1151 = vmatprep.subr.bf16.mxu0 0
  %1152 = vmatpush2.bf16.msra.mxu0 0
  %1153 = vmatprep.subr.bf16.mxu0 0
  %1154 = vmatpush2.bf16.msra.mxu0 0
  %1155 = vmatprep.subr.bf16.mxu0 0
  %1156 = vmatpush2.bf16.msra.mxu0 0
  %1157 = vmatprep.subr.bf16.mxu0 0
  %1158 = vmatpush2.bf16.msra.mxu0 0
  %1159 = vmatprep.subr.bf16.mxu0 0
  %1160 = vmatpush2.bf16.msra.mxu0 0
  %1161 = vmatprep.subr.bf16.mxu0 0
  %1162 = vmatpush2.bf16.msra.mxu0 0
  %1163 = vmatprep.subr.bf16.mxu0 0
  %1164 = vmatpush2.bf16.msra.mxu0 0
  %1165 = vmatprep.mubr.bf16.mxu0 0
  %1166 = vmatmul.mubr.bf16.gmra.mxu0 %v339
  %v1167 = vpop.f32.mrf.mxu0
  %v1168 = vadd.f32 %v1119, %v1167
  %v1169 = vpop.f32.mrf.mxu0
  %v1170 = vpop.f32.mrf.mxu0
  %v1171 = vadd.f32 %v1119, %v1170
  %v1172 = vpop.f32.mrf.mxu0
  %1173 = vdwg.mxu0
  %s1174 = scalar_lea.vmem %s8, 96
  %v1175 = vld [vmem:[%s1174] sm:$0xf]
  %v1176 = vld [vmem:[%s1174 + $0x4] sm:$0xf]
  %v1177 = vld [vmem:[%s1174 + $0x8] sm:$0xf]
  %v1178 = vld [vmem:[%s1174 + $0xc] sm:$0xf]
  %s1179 = scalar_lea.vmem %s9, 6
  %v1180 = vld [vmem:[%s1179] sm:$0x1]
  %v1182 = vlaneseq
  %v1183 = vshrl.u32 %v1182, 7
  %v1184 = vsub.s32 0, %v1183
  %v1185 = vrot.slane %v1180, %v1184
  %v1191 = vunpack.c.l.b16 %v1175
  %v1192 = vunpack.c.l.b16 %v1176
  %v1193 = vunpack.c.l.b16 %v1177
  %v1194 = vunpack.c.l.b16 %v1178
  %v1195 = vpack.c.b16 %v1192, %v1191
  %v1196 = vpack.c.b16 %v1194, %v1193
  %1199 = vmatprep.subr.bf16.mxu0 0
  %1200 = vmatpush1.bf16.msra.mxu0 0
  %1201 = vmatprep.subr.bf16.mxu0 0
  %1202 = vmatpush1.bf16.msra.mxu0 0
  %1203 = vmatprep.subr.bf16.mxu0 0
  %1204 = vmatpush1.bf16.msra.mxu0 0
  %1205 = vmatprep.subr.bf16.mxu0 0
  %1206 = vmatpush1.bf16.msra.mxu0 0
  %1207 = vmatprep.subr.bf16.mxu0 0
  %1208 = vmatpush1.bf16.msra.mxu0 0
  %1209 = vmatprep.subr.bf16.mxu0 0
  %1210 = vmatpush1.bf16.msra.mxu0 0
  %1211 = vmatprep.subr.bf16.mxu0 0
  %1212 = vmatpush1.bf16.msra.mxu0 %v1196
  %1213 = vmatprep.subr.bf16.mxu0 0
  %1214 = vmatpush1.bf16.msra.mxu0 %v1195
  %1215 = vmatprep.subr.bf16.mxu0 0
  %1216 = vmatpush2.bf16.msra.mxu0 0
  %1217 = vmatprep.subr.bf16.mxu0 0
  %1218 = vmatpush2.bf16.msra.mxu0 0
  %1219 = vmatprep.subr.bf16.mxu0 0
  %1220 = vmatpush2.bf16.msra.mxu0 0
  %1221 = vmatprep.subr.bf16.mxu0 0
  %1222 = vmatpush2.bf16.msra.mxu0 0
  %1223 = vmatprep.subr.bf16.mxu0 0
  %1224 = vmatpush2.bf16.msra.mxu0 0
  %1225 = vmatprep.subr.bf16.mxu0 0
  %1226 = vmatpush2.bf16.msra.mxu0 0
  %1227 = vmatprep.subr.bf16.mxu0 0
  %1228 = vmatpush2.bf16.msra.mxu0 0
  %1229 = vmatprep.subr.bf16.mxu0 0
  %1230 = vmatpush2.bf16.msra.mxu0 0
  %1231 = vmatprep.mubr.bf16.mxu0 0
  %1232 = vmatmul.mubr.bf16.gmra.mxu0 %v339
  %v1233 = vpop.f32.mrf.mxu0
  %v1234 = vadd.f32 %v1185, %v1233
  %v1235 = vpop.f32.mrf.mxu0
  %v1236 = vpop.f32.mrf.mxu0
  %v1237 = vadd.f32 %v1185, %v1236
  %v1238 = vpop.f32.mrf.mxu0
  %1239 = vdwg.mxu0
  %s1240 = scalar_lea.vmem %s10, 32
  %v1241 = vld [vmem:[%s1240] sm:$0xf]
  %v1242 = vld [vmem:[%s1240 + $0x4] sm:$0xf]
  %v1243 = vld [vmem:[%s1240 + $0x8] sm:$0xf]
  %v1244 = vld [vmem:[%s1240 + $0xc] sm:$0xf]
  %s1245 = scalar_lea.vmem %s11, 2
  %v1246 = vld [vmem:[%s1245] sm:$0x1]
  %v1248 = vlaneseq
  %v1249 = vshrl.u32 %v1248, 7
  %v1250 = vsub.s32 0, %v1249
  %v1251 = vrot.slane %v1246, %v1250
  %v1257 = vunpack.c.l.b16 %v1241
  %v1258 = vunpack.c.l.b16 %v1242
  %v1259 = vunpack.c.l.b16 %v1243
  %v1260 = vunpack.c.l.b16 %v1244
  %v1261 = vpack.c.b16 %v1258, %v1257
  %v1262 = vpack.c.b16 %v1260, %v1259
  %1265 = vmatprep.subr.bf16.mxu0 0
  %1266 = vmatpush1.bf16.msra.mxu0 0
  %1267 = vmatprep.subr.bf16.mxu0 0
  %1268 = vmatpush1.bf16.msra.mxu0 0
  %1269 = vmatprep.subr.bf16.mxu0 0
  %1270 = vmatpush1.bf16.msra.mxu0 0
  %1271 = vmatprep.subr.bf16.mxu0 0
  %1272 = vmatpush1.bf16.msra.mxu0 0
  %1273 = vmatprep.subr.bf16.mxu0 0
  %1274 = vmatpush1.bf16.msra.mxu0 0
  %1275 = vmatprep.subr.bf16.mxu0 0
  %1276 = vmatpush1.bf16.msra.mxu0 0
  %1277 = vmatprep.subr.bf16.mxu0 0
  %1278 = vmatpush1.bf16.msra.mxu0 %v1262
  %1279 = vmatprep.subr.bf16.mxu0 0
  %1280 = vmatpush1.bf16.msra.mxu0 %v1261
  %1281 = vmatprep.subr.bf16.mxu0 0
  %1282 = vmatpush2.bf16.msra.mxu0 0
  %1283 = vmatprep.subr.bf16.mxu0 0
  %1284 = vmatpush2.bf16.msra.mxu0 0
  %1285 = vmatprep.subr.bf16.mxu0 0
  %1286 = vmatpush2.bf16.msra.mxu0 0
  %1287 = vmatprep.subr.bf16.mxu0 0
  %1288 = vmatpush2.bf16.msra.mxu0 0
  %1289 = vmatprep.subr.bf16.mxu0 0
  %1290 = vmatpush2.bf16.msra.mxu0 0
  %1291 = vmatprep.subr.bf16.mxu0 0
  %1292 = vmatpush2.bf16.msra.mxu0 0
  %1293 = vmatprep.subr.bf16.mxu0 0
  %1294 = vmatpush2.bf16.msra.mxu0 0
  %1295 = vmatprep.subr.bf16.mxu0 0
  %1296 = vmatpush2.bf16.msra.mxu0 0
  %1297 = vmatprep.mubr.bf16.mxu0 0
  %1298 = vmatmul.mubr.bf16.gmra.mxu0 %v339
  %v1299 = vpop.f32.mrf.mxu0
  %v1300 = vadd.f32 %v1251, %v1299
  %v1301 = vpop.f32.mrf.mxu0
  %v1302 = vpop.f32.mrf.mxu0
  %v1303 = vadd.f32 %v1251, %v1302
  %v1304 = vpop.f32.mrf.mxu0
  %1305 = vdwg.mxu0
  %v1307 = vsel %vm512, %v1168, 0
  %v1310 = vsel %vm512, %v1171, 0
  %v1313 = vsel %vm512, %v1234, 0
  %v1316 = vsel %vm512, %v1237, 0
  %1318 = vmatprep.subr.mxu0 0.0
  %1319 = vmatpush1.xpose.msra.mxu0 0.0
  %1320 = vmatprep.subr.mxu0 0.0
  %1321 = vmatpush1.xpose.msra.mxu0 0.0
  %1322 = vmatprep.subr.mxu0 0.0
  %1323 = vmatpush1.xpose.msra.mxu0 0.0
  %1324 = vmatprep.subr.mxu0 0.0
  %1325 = vmatpush1.xpose.msra.mxu0 0.0
  %1326 = vmatprep.subr.mxu0 0.0
  %1327 = vmatpush1.xpose.msra.mxu0 0.0
  %1328 = vmatprep.subr.mxu0 0.0
  %1329 = vmatpush1.xpose.msra.mxu0 0.0
  %1330 = vmatprep.subr.mxu0 0.0
  %1331 = vmatpush1.xpose.msra.mxu0 0.0
  %1332 = vmatprep.subr.mxu0 0.0
  %1333 = vmatpush1.xpose.msra.mxu0 0.0
  %1334 = vmatprep.subr.mxu0 0.0
  %1335 = vmatpush1.xpose.msra.mxu0 0.0
  %1336 = vmatprep.subr.mxu0 0.0
  %1337 = vmatpush1.xpose.msra.mxu0 0.0
  %1338 = vmatprep.subr.mxu0 0.0
  %1339 = vmatpush1.xpose.msra.mxu0 0.0
  %1340 = vmatprep.subr.mxu0 0.0
  %1341 = vmatpush1.xpose.msra.mxu0 0.0
  %1342 = vmatprep.subr.mxu0 0.0
  %1343 = vmatpush1.xpose.msra.mxu0 0.0
  %1344 = vmatprep.subr.mxu0 0.0
  %1345 = vmatpush1.xpose.msra.mxu0 0.0
  %1346 = vmatprep.subr.mxu0 0.0
  %1347 = vmatpush1.xpose.msra.mxu0 %v1316
  %1348 = vmatprep.subr.mxu0 0.0
  %1349 = vmatpush1.xpose.msra.mxu0 %v1313
  %1350 = vmatprep.subr.mxu0 0.0
  %1351 = vmatpush2.xpose.msra.mxu0 0.0
  %1352 = vmatprep.subr.mxu0 0.0
  %1353 = vmatpush2.xpose.msra.mxu0 0.0
  %1354 = vmatprep.subr.mxu0 0.0
  %1355 = vmatpush2.xpose.msra.mxu0 0.0
  %1356 = vmatprep.subr.mxu0 0.0
  %1357 = vmatpush2.xpose.msra.mxu0 0.0
  %1358 = vmatprep.subr.mxu0 0.0
  %1359 = vmatpush2.xpose.msra.mxu0 0.0
  %1360 = vmatprep.subr.mxu0 0.0
  %1361 = vmatpush2.xpose.msra.mxu0 0.0
  %1362 = vmatprep.subr.mxu0 0.0
  %1363 = vmatpush2.xpose.msra.mxu0 0.0
  %1364 = vmatprep.subr.mxu0 0.0
  %1365 = vmatpush2.xpose.msra.mxu0 0.0
  %1366 = vmatprep.subr.mxu0 0.0
  %1367 = vmatpush2.xpose.msra.mxu0 0.0
  %1368 = vmatprep.subr.mxu0 0.0
  %1369 = vmatpush2.xpose.msra.mxu0 0.0
  %1370 = vmatprep.subr.mxu0 0.0
  %1371 = vmatpush2.xpose.msra.mxu0 0.0
  %1372 = vmatprep.subr.mxu0 0.0
  %1373 = vmatpush2.xpose.msra.mxu0 0.0
  %1374 = vmatprep.subr.mxu0 0.0
  %1375 = vmatpush2.xpose.msra.mxu0 0.0
  %1376 = vmatprep.subr.mxu0 0.0
  %1377 = vmatpush2.xpose.msra.mxu0 0.0
  %1378 = vmatprep.subr.mxu0 0.0
  %1379 = vmatpush2.xpose.msra.mxu0 0.0
  %1380 = vmatprep.subr.mxu0 0.0
  %1381 = vmatpush2.xpose.msra.mxu0 0.0
  %1382 = vmatprep.mubr.f32.mxu0 0.0
  %1383 = vmatmul.mubr.f32.gmra.mxu0 %v1307
  %v1384 = vpop.f32.mrf.mxu0
  %v1385 = vadd.f32 0.0, %v1384
  %v1386 = vpop.f32.mrf.mxu0
  %1387 = vmatprep.mubr.f32.mxu0 0.0
  %1388 = vmatmul.mubr.f32.gmra.mxu0 %v1310
  %v1389 = vpop.f32.mrf.mxu0
  %v1390 = vadd.f32 0.0, %v1389
  %v1391 = vpop.f32.mrf.mxu0
  %1392 = vdwg.mxu0
  %v1393 = vmul.f32 %v1385, 0.35355338
  %v1394 = vmul.f32 %v1390, 0.35355338
  %v1395 = vadd.f32 %v1393, %v72
  %v1396 = vadd.f32 %v1394, %v73
  %v1397 = vsel %vm604, %v1395, -inf
  %1398 = vmax.xlane.f32.xlu0 %v1397
  %v1399 = vpop.xlane.xlu0 %1398
  %v1400 = vsel %vm608, %v1396, -inf
  %1401 = vmax.xlane.f32.xlu0 %v1400
  %v1402 = vpop.xlane.xlu0 %1401
  %v1403 = vsub.f32 %v1395, %v1399
  %v1404 = vsub.f32 %v1396, %v1402
  %v1405 = vmul.f32 %v1403, 1.442695
  %v1406 = vpow.pop %v1405
  %v1407 = vmul.f32 %v1404, 1.442695
  %v1408 = vpow.pop %v1407
  %v1409 = vsel %vm604, %v1406, 0.0
  %1410 = vadd.xlane.f32.xlu0 %v1409
  %v1411 = vpop.xlane.xlu0 %1410
  %v1412 = vsel %vm608, %v1408, 0.0
  %1413 = vadd.xlane.f32.xlu0 %v1412
  %v1414 = vpop.xlane.xlu0 %1413
  %v1415 = vrcp.pop %v1411
  %v1416 = vrcp.pop %v1414
  %v1417 = vmul.f32 %v1406, %v1415
  %v1418 = vmul.f32 %v1408, %v1416
  %v1420 = vsel %vm604, %v1417, 0
  %v1423 = vsel %vm604, %v1418, 0
  %v1426 = vsel %vm945, %v1303, 0
  %1428 = vmatprep.subr.mxu0 0.0
  %1429 = vmatpush1.msra.mxu0 0.0
  %1430 = vmatprep.subr.mxu0 0.0
  %1431 = vmatpush1.msra.mxu0 0.0
  %1432 = vmatprep.subr.mxu0 0.0
  %1433 = vmatpush1.msra.mxu0 0.0
  %1434 = vmatprep.subr.mxu0 0.0
  %1435 = vmatpush1.msra.mxu0 0.0
  %1436 = vmatprep.subr.mxu0 0.0
  %1437 = vmatpush1.msra.mxu0 0.0
  %1438 = vmatprep.subr.mxu0 0.0
  %1439 = vmatpush1.msra.mxu0 0.0
  %1440 = vmatprep.subr.mxu0 0.0
  %1441 = vmatpush1.msra.mxu0 0.0
  %1442 = vmatprep.subr.mxu0 0.0
  %1443 = vmatpush1.msra.mxu0 0.0
  %1444 = vmatprep.subr.mxu0 0.0
  %1445 = vmatpush1.msra.mxu0 0.0
  %1446 = vmatprep.subr.mxu0 0.0
  %1447 = vmatpush1.msra.mxu0 0.0
  %1448 = vmatprep.subr.mxu0 0.0
  %1449 = vmatpush1.msra.mxu0 0.0
  %1450 = vmatprep.subr.mxu0 0.0
  %1451 = vmatpush1.msra.mxu0 0.0
  %1452 = vmatprep.subr.mxu0 0.0
  %1453 = vmatpush1.msra.mxu0 0.0
  %1454 = vmatprep.subr.mxu0 0.0
  %1455 = vmatpush1.msra.mxu0 0.0
  %1456 = vmatprep.subr.mxu0 0.0
  %1457 = vmatpush1.msra.mxu0 %v1426
  %1458 = vmatprep.subr.mxu0 0.0
  %1459 = vmatpush1.msra.mxu0 %v1300
  %1460 = vmatprep.subr.mxu0 0.0
  %1461 = vmatpush2.msra.mxu0 0.0
  %1462 = vmatprep.subr.mxu0 0.0
  %1463 = vmatpush2.msra.mxu0 0.0
  %1464 = vmatprep.subr.mxu0 0.0
  %1465 = vmatpush2.msra.mxu0 0.0
  %1466 = vmatprep.subr.mxu0 0.0
  %1467 = vmatpush2.msra.mxu0 0.0
  %1468 = vmatprep.subr.mxu0 0.0
  %1469 = vmatpush2.msra.mxu0 0.0
  %1470 = vmatprep.subr.mxu0 0.0
  %1471 = vmatpush2.msra.mxu0 0.0
  %1472 = vmatprep.subr.mxu0 0.0
  %1473 = vmatpush2.msra.mxu0 0.0
  %1474 = vmatprep.subr.mxu0 0.0
  %1475 = vmatpush2.msra.mxu0 0.0
  %1476 = vmatprep.subr.mxu0 0.0
  %1477 = vmatpush2.msra.mxu0 0.0
  %1478 = vmatprep.subr.mxu0 0.0
  %1479 = vmatpush2.msra.mxu0 0.0
  %1480 = vmatprep.subr.mxu0 0.0
  %1481 = vmatpush2.msra.mxu0 0.0
  %1482 = vmatprep.subr.mxu0 0.0
  %1483 = vmatpush2.msra.mxu0 0.0
  %1484 = vmatprep.subr.mxu0 0.0
  %1485 = vmatpush2.msra.mxu0 0.0
  %1486 = vmatprep.subr.mxu0 0.0
  %1487 = vmatpush2.msra.mxu0 0.0
  %1488 = vmatprep.subr.mxu0 0.0
  %1489 = vmatpush2.msra.mxu0 0.0
  %1490 = vmatprep.subr.mxu0 0.0
  %1491 = vmatpush2.msra.mxu0 0.0
  %1492 = vmatprep.mubr.f32.mxu0 0.0
  %1493 = vmatmul.mubr.f32.gmra.mxu0 %v1420
  %v1494 = vpop.f32.mrf.mxu0
  %v1495 = vadd.f32 0.0, %v1494
  %v1496 = vpop.f32.mrf.mxu0
  %1497 = vmatprep.mubr.f32.mxu0 0.0
  %1498 = vmatmul.mubr.f32.gmra.mxu0 %v1423
  %v1499 = vpop.f32.mrf.mxu0
  %v1500 = vadd.f32 0.0, %v1499
  %v1501 = vpop.f32.mrf.mxu0
  %1502 = vdwg.mxu0
  %v1503 = vadd.f32 %v1100, %v1495
  %v1504 = vadd.f32 %v1105, %v1500
  %s1505 = scalar_lea.vmem %s8, 48
  %v1506 = vld [vmem:[%s1505] sm:$0xf]
  %v1507 = vld [vmem:[%s1505 + $0x4] sm:$0xf]
  %v1508 = vld [vmem:[%s1505 + $0x8] sm:$0xf]
  %v1509 = vld [vmem:[%s1505 + $0xc] sm:$0xf]
  %s1510 = scalar_lea.vmem %s9, 3
  %v1511 = vld [vmem:[%s1510] sm:$0x1]
  %v1513 = vlaneseq
  %v1514 = vshrl.u32 %v1513, 7
  %v1515 = vsub.s32 0, %v1514
  %v1516 = vrot.slane %v1511, %v1515
  %v1522 = vunpack.c.l.b16 %v1506
  %v1523 = vunpack.c.l.b16 %v1507
  %v1524 = vunpack.c.l.b16 %v1508
  %v1525 = vunpack.c.l.b16 %v1509
  %v1526 = vpack.c.b16 %v1523, %v1522
  %v1527 = vpack.c.b16 %v1525, %v1524
  %1530 = vmatprep.subr.bf16.mxu0 0
  %1531 = vmatpush1.bf16.msra.mxu0 0
  %1532 = vmatprep.subr.bf16.mxu0 0
  %1533 = vmatpush1.bf16.msra.mxu0 0
  %1534 = vmatprep.subr.bf16.mxu0 0
  %1535 = vmatpush1.bf16.msra.mxu0 0
  %1536 = vmatprep.subr.bf16.mxu0 0
  %1537 = vmatpush1.bf16.msra.mxu0 0
  %1538 = vmatprep.subr.bf16.mxu0 0
  %1539 = vmatpush1.bf16.msra.mxu0 0
  %1540 = vmatprep.subr.bf16.mxu0 0
  %1541 = vmatpush1.bf16.msra.mxu0 0
  %1542 = vmatprep.subr.bf16.mxu0 0
  %1543 = vmatpush1.bf16.msra.mxu0 %v1527
  %1544 = vmatprep.subr.bf16.mxu0 0
  %1545 = vmatpush1.bf16.msra.mxu0 %v1526
  %1546 = vmatprep.subr.bf16.mxu0 0
  %1547 = vmatpush2.bf16.msra.mxu0 0
  %1548 = vmatprep.subr.bf16.mxu0 0
  %1549 = vmatpush2.bf16.msra.mxu0 0
  %1550 = vmatprep.subr.bf16.mxu0 0
  %1551 = vmatpush2.bf16.msra.mxu0 0
  %1552 = vmatprep.subr.bf16.mxu0 0
  %1553 = vmatpush2.bf16.msra.mxu0 0
  %1554 = vmatprep.subr.bf16.mxu0 0
  %1555 = vmatpush2.bf16.msra.mxu0 0
  %1556 = vmatprep.subr.bf16.mxu0 0
  %1557 = vmatpush2.bf16.msra.mxu0 0
  %1558 = vmatprep.subr.bf16.mxu0 0
  %1559 = vmatpush2.bf16.msra.mxu0 0
  %1560 = vmatprep.subr.bf16.mxu0 0
  %1561 = vmatpush2.bf16.msra.mxu0 0
  %1562 = vmatprep.mubr.bf16.mxu0 0
  %1563 = vmatmul.mubr.bf16.gmra.mxu0 %v339
  %v1564 = vpop.f32.mrf.mxu0
  %v1565 = vadd.f32 %v1516, %v1564
  %v1566 = vpop.f32.mrf.mxu0
  %v1567 = vpop.f32.mrf.mxu0
  %v1568 = vadd.f32 %v1516, %v1567
  %v1569 = vpop.f32.mrf.mxu0
  %1570 = vdwg.mxu0
  %s1571 = scalar_lea.vmem %s8, 112
  %v1572 = vld [vmem:[%s1571] sm:$0xf]
  %v1573 = vld [vmem:[%s1571 + $0x4] sm:$0xf]
  %v1574 = vld [vmem:[%s1571 + $0x8] sm:$0xf]
  %v1575 = vld [vmem:[%s1571 + $0xc] sm:$0xf]
  %s1576 = scalar_lea.vmem %s9, 7
  %v1577 = vld [vmem:[%s1576] sm:$0x1]
  %v1579 = vlaneseq
  %v1580 = vshrl.u32 %v1579, 7
  %v1581 = vsub.s32 0, %v1580
  %v1582 = vrot.slane %v1577, %v1581
  %v1588 = vunpack.c.l.b16 %v1572
  %v1589 = vunpack.c.l.b16 %v1573
  %v1590 = vunpack.c.l.b16 %v1574
  %v1591 = vunpack.c.l.b16 %v1575
  %v1592 = vpack.c.b16 %v1589, %v1588
  %v1593 = vpack.c.b16 %v1591, %v1590
  %1596 = vmatprep.subr.bf16.mxu0 0
  %1597 = vmatpush1.bf16.msra.mxu0 0
  %1598 = vmatprep.subr.bf16.mxu0 0
  %1599 = vmatpush1.bf16.msra.mxu0 0
  %1600 = vmatprep.subr.bf16.mxu0 0
  %1601 = vmatpush1.bf16.msra.mxu0 0
  %1602 = vmatprep.subr.bf16.mxu0 0
  %1603 = vmatpush1.bf16.msra.mxu0 0
  %1604 = vmatprep.subr.bf16.mxu0 0
  %1605 = vmatpush1.bf16.msra.mxu0 0
  %1606 = vmatprep.subr.bf16.mxu0 0
  %1607 = vmatpush1.bf16.msra.mxu0 0
  %1608 = vmatprep.subr.bf16.mxu0 0
  %1609 = vmatpush1.bf16.msra.mxu0 %v1593
  %1610 = vmatprep.subr.bf16.mxu0 0
  %1611 = vmatpush1.bf16.msra.mxu0 %v1592
  %1612 = vmatprep.subr.bf16.mxu0 0
  %1613 = vmatpush2.bf16.msra.mxu0 0
  %1614 = vmatprep.subr.bf16.mxu0 0
  %1615 = vmatpush2.bf16.msra.mxu0 0
  %1616 = vmatprep.subr.bf16.mxu0 0
  %1617 = vmatpush2.bf16.msra.mxu0 0
  %1618 = vmatprep.subr.bf16.mxu0 0
  %1619 = vmatpush2.bf16.msra.mxu0 0
  %1620 = vmatprep.subr.bf16.mxu0 0
  %1621 = vmatpush2.bf16.msra.mxu0 0
  %1622 = vmatprep.subr.bf16.mxu0 0
  %1623 = vmatpush2.bf16.msra.mxu0 0
  %1624 = vmatprep.subr.bf16.mxu0 0
  %1625 = vmatpush2.bf16.msra.mxu0 0
  %1626 = vmatprep.subr.bf16.mxu0 0
  %1627 = vmatpush2.bf16.msra.mxu0 0
  %1628 = vmatprep.mubr.bf16.mxu0 0
  %1629 = vmatmul.mubr.bf16.gmra.mxu0 %v339
  %v1630 = vpop.f32.mrf.mxu0
  %v1631 = vadd.f32 %v1582, %v1630
  %v1632 = vpop.f32.mrf.mxu0
  %v1633 = vpop.f32.mrf.mxu0
  %v1634 = vadd.f32 %v1582, %v1633
  %v1635 = vpop.f32.mrf.mxu0
  %1636 = vdwg.mxu0
  %s1637 = scalar_lea.vmem %s10, 48
  %v1638 = vld [vmem:[%s1637] sm:$0xf]
  %v1639 = vld [vmem:[%s1637 + $0x4] sm:$0xf]
  %v1640 = vld [vmem:[%s1637 + $0x8] sm:$0xf]
  %v1641 = vld [vmem:[%s1637 + $0xc] sm:$0xf]
  %s1642 = scalar_lea.vmem %s11, 3
  %v1643 = vld [vmem:[%s1642] sm:$0x1]
  %v1645 = vlaneseq
  %v1646 = vshrl.u32 %v1645, 7
  %v1647 = vsub.s32 0, %v1646
  %v1648 = vrot.slane %v1643, %v1647
  %v1654 = vunpack.c.l.b16 %v1638
  %v1655 = vunpack.c.l.b16 %v1639
  %v1656 = vunpack.c.l.b16 %v1640
  %v1657 = vunpack.c.l.b16 %v1641
  %v1658 = vpack.c.b16 %v1655, %v1654
  %v1659 = vpack.c.b16 %v1657, %v1656
  %1662 = vmatprep.subr.bf16.mxu0 0
  %1663 = vmatpush1.bf16.msra.mxu0 0
  %1664 = vmatprep.subr.bf16.mxu0 0
  %1665 = vmatpush1.bf16.msra.mxu0 0
  %1666 = vmatprep.subr.bf16.mxu0 0
  %1667 = vmatpush1.bf16.msra.mxu0 0
  %1668 = vmatprep.subr.bf16.mxu0 0
  %1669 = vmatpush1.bf16.msra.mxu0 0
  %1670 = vmatprep.subr.bf16.mxu0 0
  %1671 = vmatpush1.bf16.msra.mxu0 0
  %1672 = vmatprep.subr.bf16.mxu0 0
  %1673 = vmatpush1.bf16.msra.mxu0 0
  %1674 = vmatprep.subr.bf16.mxu0 0
  %1675 = vmatpush1.bf16.msra.mxu0 %v1659
  %1676 = vmatprep.subr.bf16.mxu0 0
  %1677 = vmatpush1.bf16.msra.mxu0 %v1658
  %1678 = vmatprep.subr.bf16.mxu0 0
  %1679 = vmatpush2.bf16.msra.mxu0 0
  %1680 = vmatprep.subr.bf16.mxu0 0
  %1681 = vmatpush2.bf16.msra.mxu0 0
  %1682 = vmatprep.subr.bf16.mxu0 0
  %1683 = vmatpush2.bf16.msra.mxu0 0
  %1684 = vmatprep.subr.bf16.mxu0 0
  %1685 = vmatpush2.bf16.msra.mxu0 0
  %1686 = vmatprep.subr.bf16.mxu0 0
  %1687 = vmatpush2.bf16.msra.mxu0 0
  %1688 = vmatprep.subr.bf16.mxu0 0
  %1689 = vmatpush2.bf16.msra.mxu0 0
  %1690 = vmatprep.subr.bf16.mxu0 0
  %1691 = vmatpush2.bf16.msra.mxu0 0
  %1692 = vmatprep.subr.bf16.mxu0 0
  %1693 = vmatpush2.bf16.msra.mxu0 0
  %1694 = vmatprep.mubr.bf16.mxu0 0
  %1695 = vmatmul.mubr.bf16.gmra.mxu0 %v339
  %v1696 = vpop.f32.mrf.mxu0
  %v1697 = vadd.f32 %v1648, %v1696
  %v1698 = vpop.f32.mrf.mxu0
  %v1699 = vpop.f32.mrf.mxu0
  %v1700 = vadd.f32 %v1648, %v1699
  %v1701 = vpop.f32.mrf.mxu0
  %1702 = vdwg.mxu0
  %v1704 = vsel %vm512, %v1565, 0
  %v1707 = vsel %vm512, %v1568, 0
  %v1710 = vsel %vm512, %v1631, 0
  %v1713 = vsel %vm512, %v1634, 0
  %1715 = vmatprep.subr.mxu0 0.0
  %1716 = vmatpush1.xpose.msra.mxu0 0.0
  %1717 = vmatprep.subr.mxu0 0.0
  %1718 = vmatpush1.xpose.msra.mxu0 0.0
  %1719 = vmatprep.subr.mxu0 0.0
  %1720 = vmatpush1.xpose.msra.mxu0 0.0
  %1721 = vmatprep.subr.mxu0 0.0
  %1722 = vmatpush1.xpose.msra.mxu0 0.0
  %1723 = vmatprep.subr.mxu0 0.0
  %1724 = vmatpush1.xpose.msra.mxu0 0.0
  %1725 = vmatprep.subr.mxu0 0.0
  %1726 = vmatpush1.xpose.msra.mxu0 0.0
  %1727 = vmatprep.subr.mxu0 0.0
  %1728 = vmatpush1.xpose.msra.mxu0 0.0
  %1729 = vmatprep.subr.mxu0 0.0
  %1730 = vmatpush1.xpose.msra.mxu0 0.0
  %1731 = vmatprep.subr.mxu0 0.0
  %1732 = vmatpush1.xpose.msra.mxu0 0.0
  %1733 = vmatprep.subr.mxu0 0.0
  %1734 = vmatpush1.xpose.msra.mxu0 0.0
  %1735 = vmatprep.subr.mxu0 0.0
  %1736 = vmatpush1.xpose.msra.mxu0 0.0
  %1737 = vmatprep.subr.mxu0 0.0
  %1738 = vmatpush1.xpose.msra.mxu0 0.0
  %1739 = vmatprep.subr.mxu0 0.0
  %1740 = vmatpush1.xpose.msra.mxu0 0.0
  %1741 = vmatprep.subr.mxu0 0.0
  %1742 = vmatpush1.xpose.msra.mxu0 0.0
  %1743 = vmatprep.subr.mxu0 0.0
  %1744 = vmatpush1.xpose.msra.mxu0 %v1713
  %1745 = vmatprep.subr.mxu0 0.0
  %1746 = vmatpush1.xpose.msra.mxu0 %v1710
  %1747 = vmatprep.subr.mxu0 0.0
  %1748 = vmatpush2.xpose.msra.mxu0 0.0
  %1749 = vmatprep.subr.mxu0 0.0
  %1750 = vmatpush2.xpose.msra.mxu0 0.0
  %1751 = vmatprep.subr.mxu0 0.0
  %1752 = vmatpush2.xpose.msra.mxu0 0.0
  %1753 = vmatprep.subr.mxu0 0.0
  %1754 = vmatpush2.xpose.msra.mxu0 0.0
  %1755 = vmatprep.subr.mxu0 0.0
  %1756 = vmatpush2.xpose.msra.mxu0 0.0
  %1757 = vmatprep.subr.mxu0 0.0
  %1758 = vmatpush2.xpose.msra.mxu0 0.0
  %1759 = vmatprep.subr.mxu0 0.0
  %1760 = vmatpush2.xpose.msra.mxu0 0.0
  %1761 = vmatprep.subr.mxu0 0.0
  %1762 = vmatpush2.xpose.msra.mxu0 0.0
  %1763 = vmatprep.subr.mxu0 0.0
  %1764 = vmatpush2.xpose.msra.mxu0 0.0
  %1765 = vmatprep.subr.mxu0 0.0
  %1766 = vmatpush2.xpose.msra.mxu0 0.0
  %1767 = vmatprep.subr.mxu0 0.0
  %1768 = vmatpush2.xpose.msra.mxu0 0.0
  %1769 = vmatprep.subr.mxu0 0.0
  %1770 = vmatpush2.xpose.msra.mxu0 0.0
  %1771 = vmatprep.subr.mxu0 0.0
  %1772 = vmatpush2.xpose.msra.mxu0 0.0
  %1773 = vmatprep.subr.mxu0 0.0
  %1774 = vmatpush2.xpose.msra.mxu0 0.0
  %1775 = vmatprep.subr.mxu0 0.0
  %1776 = vmatpush2.xpose.msra.mxu0 0.0
  %1777 = vmatprep.subr.mxu0 0.0
  %1778 = vmatpush2.xpose.msra.mxu0 0.0
  %1779 = vmatprep.mubr.f32.mxu0 0.0
  %1780 = vmatmul.mubr.f32.gmra.mxu0 %v1704
  %v1781 = vpop.f32.mrf.mxu0
  %v1782 = vadd.f32 0.0, %v1781
  %v1783 = vpop.f32.mrf.mxu0
  %1784 = vmatprep.mubr.f32.mxu0 0.0
  %1785 = vmatmul.mubr.f32.gmra.mxu0 %v1707
  %v1786 = vpop.f32.mrf.mxu0
  %v1787 = vadd.f32 0.0, %v1786
  %v1788 = vpop.f32.mrf.mxu0
  %1789 = vdwg.mxu0
  %v1790 = vmul.f32 %v1782, 0.35355338
  %v1791 = vmul.f32 %v1787, 0.35355338
  %v1792 = vadd.f32 %v1790, %v72
  %v1793 = vadd.f32 %v1791, %v73
  %v1794 = vsel %vm604, %v1792, -inf
  %1795 = vmax.xlane.f32.xlu0 %v1794
  %v1796 = vpop.xlane.xlu0 %1795
  %v1797 = vsel %vm608, %v1793, -inf
  %1798 = vmax.xlane.f32.xlu0 %v1797
  %v1799 = vpop.xlane.xlu0 %1798
  %v1800 = vsub.f32 %v1792, %v1796
  %v1801 = vsub.f32 %v1793, %v1799
  %v1802 = vmul.f32 %v1800, 1.442695
  %v1803 = vpow.pop %v1802
  %v1804 = vmul.f32 %v1801, 1.442695
  %v1805 = vpow.pop %v1804
  %v1806 = vsel %vm604, %v1803, 0.0
  %1807 = vadd.xlane.f32.xlu0 %v1806
  %v1808 = vpop.xlane.xlu0 %1807
  %v1809 = vsel %vm608, %v1805, 0.0
  %1810 = vadd.xlane.f32.xlu0 %v1809
  %v1811 = vpop.xlane.xlu0 %1810
  %v1812 = vrcp.pop %v1808
  %v1813 = vrcp.pop %v1811
  %v1814 = vmul.f32 %v1803, %v1812
  %v1815 = vmul.f32 %v1805, %v1813
  %v1817 = vsel %vm604, %v1814, 0
  %v1820 = vsel %vm604, %v1815, 0
  %v1823 = vsel %vm945, %v1700, 0
  %1825 = vmatprep.subr.mxu0 0.0
  %1826 = vmatpush1.msra.mxu0 0.0
  %1827 = vmatprep.subr.mxu0 0.0
  %1828 = vmatpush1.msra.mxu0 0.0
  %1829 = vmatprep.subr.mxu0 0.0
  %1830 = vmatpush1.msra.mxu0 0.0
  %1831 = vmatprep.subr.mxu0 0.0
  %1832 = vmatpush1.msra.mxu0 0.0
  %1833 = vmatprep.subr.mxu0 0.0
  %1834 = vmatpush1.msra.mxu0 0.0
  %1835 = vmatprep.subr.mxu0 0.0
  %1836 = vmatpush1.msra.mxu0 0.0
  %1837 = vmatprep.subr.mxu0 0.0
  %1838 = vmatpush1.msra.mxu0 0.0
  %1839 = vmatprep.subr.mxu0 0.0
  %1840 = vmatpush1.msra.mxu0 0.0
  %1841 = vmatprep.subr.mxu0 0.0
  %1842 = vmatpush1.msra.mxu0 0.0
  %1843 = vmatprep.subr.mxu0 0.0
  %1844 = vmatpush1.msra.mxu0 0.0
  %1845 = vmatprep.subr.mxu0 0.0
  %1846 = vmatpush1.msra.mxu0 0.0
  %1847 = vmatprep.subr.mxu0 0.0
  %1848 = vmatpush1.msra.mxu0 0.0
  %1849 = vmatprep.subr.mxu0 0.0
  %1850 = vmatpush1.msra.mxu0 0.0
  %1851 = vmatprep.subr.mxu0 0.0
  %1852 = vmatpush1.msra.mxu0 0.0
  %1853 = vmatprep.subr.mxu0 0.0
  %1854 = vmatpush1.msra.mxu0 %v1823
  %1855 = vmatprep.subr.mxu0 0.0
  %1856 = vmatpush1.msra.mxu0 %v1697
  %1857 = vmatprep.subr.mxu0 0.0
  %1858 = vmatpush2.msra.mxu0 0.0
  %1859 = vmatprep.subr.mxu0 0.0
  %1860 = vmatpush2.msra.mxu0 0.0
  %1861 = vmatprep.subr.mxu0 0.0
  %1862 = vmatpush2.msra.mxu0 0.0
  %1863 = vmatprep.subr.mxu0 0.0
  %1864 = vmatpush2.msra.mxu0 0.0
  %1865 = vmatprep.subr.mxu0 0.0
  %1866 = vmatpush2.msra.mxu0 0.0
  %1867 = vmatprep.subr.mxu0 0.0
  %1868 = vmatpush2.msra.mxu0 0.0
  %1869 = vmatprep.subr.mxu0 0.0
  %1870 = vmatpush2.msra.mxu0 0.0
  %1871 = vmatprep.subr.mxu0 0.0
  %1872 = vmatpush2.msra.mxu0 0.0
  %1873 = vmatprep.subr.mxu0 0.0
  %1874 = vmatpush2.msra.mxu0 0.0
  %1875 = vmatprep.subr.mxu0 0.0
  %1876 = vmatpush2.msra.mxu0 0.0
  %1877 = vmatprep.subr.mxu0 0.0
  %1878 = vmatpush2.msra.mxu0 0.0
  %1879 = vmatprep.subr.mxu0 0.0
  %1880 = vmatpush2.msra.mxu0 0.0
  %1881 = vmatprep.subr.mxu0 0.0
  %1882 = vmatpush2.msra.mxu0 0.0
  %1883 = vmatprep.subr.mxu0 0.0
  %1884 = vmatpush2.msra.mxu0 0.0
  %1885 = vmatprep.subr.mxu0 0.0
  %1886 = vmatpush2.msra.mxu0 0.0
  %1887 = vmatprep.subr.mxu0 0.0
  %1888 = vmatpush2.msra.mxu0 0.0
  %1889 = vmatprep.mubr.f32.mxu0 0.0
  %1890 = vmatmul.mubr.f32.gmra.mxu0 %v1817
  %v1891 = vpop.f32.mrf.mxu0
  %v1892 = vadd.f32 0.0, %v1891
  %v1893 = vpop.f32.mrf.mxu0
  %1894 = vmatprep.mubr.f32.mxu0 0.0
  %1895 = vmatmul.mubr.f32.gmra.mxu0 %v1820
  %v1896 = vpop.f32.mrf.mxu0
  %v1897 = vadd.f32 0.0, %v1896
  %v1898 = vpop.f32.mrf.mxu0
  %1899 = vdwg.mxu0
  %v1900 = vadd.f32 %v1503, %v1892
  %v1901 = vadd.f32 %v1504, %v1897
  %v1902 = vadd.f32 %v268, %v1900
  %v1903 = vadd.f32 %v269, %v1901
  %v1904 = vld [vmem:[%s12] sm:$0x1]
  %v1906 = vlaneseq
  %v1907 = vshrl.u32 %v1906, 7
  %v1908 = vsub.s32 0, %v1907
  %v1909 = vrot.slane %v1904, %v1908
  %v1911 = vadd.f32 %v1902, %v1909
  %v1912 = vadd.f32 %v1903, %v1909
  %v1913 = vld [vmem:[%s13] sm:$0x1]
  %v1914 = vld [vmem:[%s14] sm:$0x1]
  %v1915 = vsel %vm225, %v1911, 0.0
  %1916 = vadd.xlane.f32.xlu0 %v1915
  %v1917 = vpop.xlane.xlu0 %1916
  %v1918 = vsel %vm229, %v1912, 0.0
  %1919 = vadd.xlane.f32.xlu0 %v1918
  %v1920 = vpop.xlane.xlu0 %1919
  %v1921 = vmul.f32 %v1917, %v233
  %v1922 = vmul.f32 %v1920, %v233
  %v1923 = vsub.f32 %v1911, %v1921
  %v1924 = vsub.f32 %v1912, %v1922
  %v1925 = vmul.f32 %v1923, %v1923
  %v1926 = vmul.f32 %v1924, %v1924
  %v1927 = vsel %vm225, %v1925, 0.0
  %1928 = vadd.xlane.f32.xlu0 %v1927
  %v1929 = vpop.xlane.xlu0 %1928
  %v1930 = vsel %vm229, %v1926, 0.0
  %1931 = vadd.xlane.f32.xlu0 %v1930
  %v1932 = vpop.xlane.xlu0 %1931
  %v1933 = vmul.f32 %v1929, %v233
  %v1934 = vmul.f32 %v1932, %v233
  %v1935 = vadd.f32 %v1933, 1e-05
  %v1936 = vadd.f32 %v1934, 1e-05
  %v1937 = vrsqrt.pop %v1935
  %v1938 = vrsqrt.pop %v1936
  %v1939 = vmul.f32 %v1923, %v1937
  %v1940 = vmul.f32 %v1924, %v1938
  %v1942 = vlaneseq
  %v1943 = vshrl.u32 %v1942, 7
  %v1944 = vsub.s32 0, %v1943
  %v1945 = vrot.slane %v1913, %v1944
  %v1947 = vmul.f32 %v1939, %v1945
  %v1948 = vmul.f32 %v1940, %v1945
  %v1950 = vlaneseq
  %v1951 = vshrl.u32 %v1950, 7
  %v1952 = vsub.s32 0, %v1951
  %v1953 = vrot.slane %v1914, %v1952
  %v1955 = vadd.f32 %v1947, %v1953
  %v1956 = vadd.f32 %v1948, %v1953
  %v1957 = vld [vmem:[%s15] sm:$0xf]
  %v1958 = vld [vmem:[%s15 + $0x4] sm:$0xf]
  %v1959 = vld [vmem:[%s15 + $0x8] sm:$0xf]
  %v1960 = vld [vmem:[%s15 + $0xc] sm:$0xf]
  %v1961 = vpack.c.bf16 %v1956, %v1955
  %v1962 = vld [vmem:[%s16] sm:$0x1]
  %v1964 = vlaneseq
  %v1965 = vshrl.u32 %v1964, 7
  %v1966 = vsub.s32 0, %v1965
  %v1967 = vrot.slane %v1962, %v1966
  %v1973 = vunpack.c.l.b16 %v1957
  %v1974 = vunpack.c.l.b16 %v1958
  %v1975 = vunpack.c.l.b16 %v1959
  %v1976 = vunpack.c.l.b16 %v1960
  %v1977 = vpack.c.b16 %v1974, %v1973
  %v1978 = vpack.c.b16 %v1976, %v1975
  %v1982 = vsel %vm225, %v1961, 0
  %1984 = vmatprep.subr.bf16.mxu0 0
  %1985 = vmatpush1.bf16.msra.mxu0 0
  %1986 = vmatprep.subr.bf16.mxu0 0
  %1987 = vmatpush1.bf16.msra.mxu0 0
  %1988 = vmatprep.subr.bf16.mxu0 0
  %1989 = vmatpush1.bf16.msra.mxu0 0
  %1990 = vmatprep.subr.bf16.mxu0 0
  %1991 = vmatpush1.bf16.msra.mxu0 0
  %1992 = vmatprep.subr.bf16.mxu0 0
  %1993 = vmatpush1.bf16.msra.mxu0 0
  %1994 = vmatprep.subr.bf16.mxu0 0
  %1995 = vmatpush1.bf16.msra.mxu0 0
  %1996 = vmatprep.subr.bf16.mxu0 0
  %1997 = vmatpush1.bf16.msra.mxu0 %v1978
  %1998 = vmatprep.subr.bf16.mxu0 0
  %1999 = vmatpush1.bf16.msra.mxu0 %v1977
  %2000 = vmatprep.subr.bf16.mxu0 0
  %2001 = vmatpush2.bf16.msra.mxu0 0
  %2002 = vmatprep.subr.bf16.mxu0 0
  %2003 = vmatpush2.bf16.msra.mxu0 0
  %2004 = vmatprep.subr.bf16.mxu0 0
  %2005 = vmatpush2.bf16.msra.mxu0 0
  %2006 = vmatprep.subr.bf16.mxu0 0
  %2007 = vmatpush2.bf16.msra.mxu0 0
  %2008 = vmatprep.subr.bf16.mxu0 0
  %2009 = vmatpush2.bf16.msra.mxu0 0
  %2010 = vmatprep.subr.bf16.mxu0 0
  %2011 = vmatpush2.bf16.msra.mxu0 0
  %2012 = vmatprep.subr.bf16.mxu0 0
  %2013 = vmatpush2.bf16.msra.mxu0 0
  %2014 = vmatprep.subr.bf16.mxu0 0
  %2015 = vmatpush2.bf16.msra.mxu0 0
  %2016 = vmatprep.mubr.bf16.mxu0 0
  %2017 = vmatmul.mubr.bf16.gmra.mxu0 %v1982
  %v2018 = vpop.f32.mrf.mxu0
  %v2019 = vadd.f32 %v1967, %v2018
  %v2020 = vpop.f32.mrf.mxu0
  %v2021 = vpop.f32.mrf.mxu0
  %v2022 = vadd.f32 %v1967, %v2021
  %v2023 = vpop.f32.mrf.mxu0
  %2024 = vdwg.mxu0
  %v2025 = vmul.f32 %v2019, 1.702
  %v2026 = vmul.f32 %v2022, 1.702
  %v2027 = vxor.u32 %v2025, 2147483648
  %v2028 = vxor.u32 %v2026, 2147483648
  %v2029 = vmul.f32 %v2027, 1.442695
  %v2030 = vpow.pop %v2029
  %v2031 = vmul.f32 %v2028, 1.442695
  %v2032 = vpow.pop %v2031
  %v2033 = vadd.f32 %v2030, 1.0
  %v2034 = vadd.f32 %v2032, 1.0
  %v2035 = vrcp.pop %v2033
  %v2036 = vmul.f32 1.0, %v2035
  %v2037 = vrcp.pop %v2034
  %v2038 = vmul.f32 1.0, %v2037
  %v2039 = vmul.f32 %v2019, %v2036
  %v2040 = vmul.f32 %v2022, %v2038
  %v2041 = vld [vmem:[%s17] sm:$0xf]
  %v2042 = vld [vmem:[%s17 + $0x4] sm:$0xf]
  %v2043 = vld [vmem:[%s17 + $0x8] sm:$0xf]
  %v2044 = vld [vmem:[%s17 + $0xc] sm:$0xf]
  %v2045 = vld [vmem:[%s17 + $0x10] sm:$0xf]
  %v2046 = vld [vmem:[%s17 + $0x14] sm:$0xf]
  %v2047 = vld [vmem:[%s17 + $0x18] sm:$0xf]
  %v2048 = vld [vmem:[%s17 + $0x1c] sm:$0xf]
  %v2049 = vld [vmem:[%s17 + $0x20] sm:$0xf]
  %v2050 = vld [vmem:[%s17 + $0x24] sm:$0xf]
  %v2051 = vld [vmem:[%s17 + $0x28] sm:$0xf]
  %v2052 = vld [vmem:[%s17 + $0x2c] sm:$0xf]
  %v2053 = vld [vmem:[%s17 + $0x30] sm:$0xf]
  %v2054 = vld [vmem:[%s17 + $0x34] sm:$0xf]
  %v2055 = vld [vmem:[%s17 + $0x38] sm:$0xf]
  %v2056 = vld [vmem:[%s17 + $0x3c] sm:$0xf]
  %v2057 = vpack.c.bf16 %v2040, %v2039
  %v2074 = vunpack.c.l.b16 %v2041
  %v2075 = vunpack.c.l.b16 %v2042
  %v2076 = vunpack.c.l.b16 %v2043
  %v2077 = vunpack.c.l.b16 %v2044
  %v2078 = vunpack.c.l.b16 %v2045
  %v2079 = vunpack.c.l.b16 %v2046
  %v2080 = vunpack.c.l.b16 %v2047
  %v2081 = vunpack.c.l.b16 %v2048
  %v2082 = vunpack.c.l.b16 %v2049
  %v2083 = vunpack.c.l.b16 %v2050
  %v2084 = vunpack.c.l.b16 %v2051
  %v2085 = vunpack.c.l.b16 %v2052
  %v2086 = vunpack.c.l.b16 %v2053
  %v2087 = vunpack.c.l.b16 %v2054
  %v2088 = vunpack.c.l.b16 %v2055
  %v2089 = vunpack.c.l.b16 %v2056
  %v2090 = vpack.c.b16 %v2075, %v2074
  %v2091 = vpack.c.b16 %v2077, %v2076
  %v2092 = vpack.c.b16 %v2079, %v2078
  %v2093 = vpack.c.b16 %v2081, %v2080
  %v2094 = vpack.c.b16 %v2083, %v2082
  %v2095 = vpack.c.b16 %v2085, %v2084
  %v2096 = vpack.c.b16 %v2087, %v2086
  %v2097 = vpack.c.b16 %v2089, %v2088
  %2106 = vmatprep.subr.bf16.mxu0 0
  %2107 = vmatpush1.bf16.msra.mxu0 %v2097
  %2108 = vmatprep.subr.bf16.mxu0 0
  %2109 = vmatpush1.bf16.msra.mxu0 %v2096
  %2110 = vmatprep.subr.bf16.mxu0 0
  %2111 = vmatpush1.bf16.msra.mxu0 %v2095
  %2112 = vmatprep.subr.bf16.mxu0 0
  %2113 = vmatpush1.bf16.msra.mxu0 %v2094
  %2114 = vmatprep.subr.bf16.mxu0 0
  %2115 = vmatpush1.bf16.msra.mxu0 %v2093
  %2116 = vmatprep.subr.bf16.mxu0 0
  %2117 = vmatpush1.bf16.msra.mxu0 %v2092
  %2118 = vmatprep.subr.bf16.mxu0 0
  %2119 = vmatpush1.bf16.msra.mxu0 %v2091
  %2120 = vmatprep.subr.bf16.mxu0 0
  %2121 = vmatpush1.bf16.msra.mxu0 %v2090
  %2122 = vmatprep.subr.bf16.mxu0 0
  %2123 = vmatpush2.bf16.msra.mxu0 0
  %2124 = vmatprep.subr.bf16.mxu0 0
  %2125 = vmatpush2.bf16.msra.mxu0 0
  %2126 = vmatprep.subr.bf16.mxu0 0
  %2127 = vmatpush2.bf16.msra.mxu0 0
  %2128 = vmatprep.subr.bf16.mxu0 0
  %2129 = vmatpush2.bf16.msra.mxu0 0
  %2130 = vmatprep.subr.bf16.mxu0 0
  %2131 = vmatpush2.bf16.msra.mxu0 0
  %2132 = vmatprep.subr.bf16.mxu0 0
  %2133 = vmatpush2.bf16.msra.mxu0 0
  %2134 = vmatprep.subr.bf16.mxu0 0
  %2135 = vmatpush2.bf16.msra.mxu0 0
  %2136 = vmatprep.subr.bf16.mxu0 0
  %2137 = vmatpush2.bf16.msra.mxu0 0
  %2138 = vmatprep.mubr.bf16.mxu0 0
  %2139 = vmatmul.mubr.bf16.gmra.mxu0 %v2057
  %v2140 = vpop.f32.mrf.mxu0
  %v2141 = vadd.f32 0.0, %v2140
  %v2142 = vpop.f32.mrf.mxu0
  %v2143 = vpop.f32.mrf.mxu0
  %v2144 = vadd.f32 0.0, %v2143
  %v2145 = vpop.f32.mrf.mxu0
  %2146 = vdwg.mxu0
  %v2147 = vadd.f32 %v1911, %v2141
  %v2148 = vadd.f32 %v1912, %v2144
  %v2149 = vld [vmem:[%s18] sm:$0x1]
  %v2151 = vlaneseq
  %v2152 = vshrl.u32 %v2151, 7
  %v2153 = vsub.s32 0, %v2152
  %v2154 = vrot.slane %v2149, %v2153
  %v2156 = vadd.f32 %v2147, %v2154
  %v2157 = vadd.f32 %v2148, %v2154
  %s2158 = scalar_lea.vmem %s6, 1
  %v2159 = vld [vmem:[%s2158] sm:$0x1]
  %s2160 = scalar_lea.vmem %s7, 1
  %v2161 = vld [vmem:[%s2160] sm:$0x1]
  %v2162 = vsel %vm225, %v2156, 0.0
  %2163 = vadd.xlane.f32.xlu0 %v2162
  %v2164 = vpop.xlane.xlu0 %2163
  %v2165 = vsel %vm229, %v2157, 0.0
  %2166 = vadd.xlane.f32.xlu0 %v2165
  %v2167 = vpop.xlane.xlu0 %2166
  %v2168 = vmul.f32 %v2164, %v233
  %v2169 = vmul.f32 %v2167, %v233
  %v2170 = vsub.f32 %v2156, %v2168
  %v2171 = vsub.f32 %v2157, %v2169
  %v2172 = vmul.f32 %v2170, %v2170
  %v2173 = vmul.f32 %v2171, %v2171
  %v2174 = vsel %vm225, %v2172, 0.0
  %2175 = vadd.xlane.f32.xlu0 %v2174
  %v2176 = vpop.xlane.xlu0 %2175
  %v2177 = vsel %vm229, %v2173, 0.0
  %2178 = vadd.xlane.f32.xlu0 %v2177
  %v2179 = vpop.xlane.xlu0 %2178
  %v2180 = vmul.f32 %v2176, %v233
  %v2181 = vmul.f32 %v2179, %v233
  %v2182 = vadd.f32 %v2180, 1e-05
  %v2183 = vadd.f32 %v2181, 1e-05
  %v2184 = vrsqrt.pop %v2182
  %v2185 = vrsqrt.pop %v2183
  %v2186 = vmul.f32 %v2170, %v2184
  %v2187 = vmul.f32 %v2171, %v2185
  %v2189 = vlaneseq
  %v2190 = vshrl.u32 %v2189, 7
  %v2191 = vsub.s32 0, %v2190
  %v2192 = vrot.slane %v2159, %v2191
  %v2194 = vmul.f32 %v2186, %v2192
  %v2195 = vmul.f32 %v2187, %v2192
  %v2197 = vlaneseq
  %v2198 = vshrl.u32 %v2197, 7
  %v2199 = vsub.s32 0, %v2198
  %v2200 = vrot.slane %v2161, %v2199
  %v2202 = vadd.f32 %v2194, %v2200
  %v2203 = vadd.f32 %v2195, %v2200
  %s2204 = scalar_lea.vmem %s8, 128
  %v2205 = vld [vmem:[%s2204] sm:$0xf]
  %v2206 = vld [vmem:[%s2204 + $0x4] sm:$0xf]
  %v2207 = vld [vmem:[%s2204 + $0x8] sm:$0xf]
  %v2208 = vld [vmem:[%s2204 + $0xc] sm:$0xf]
  %v2209 = vpack.c.bf16 %v2203, %v2202
  %s2210 = scalar_lea.vmem %s9, 8
  %v2211 = vld [vmem:[%s2210] sm:$0x1]
  %v2213 = vlaneseq
  %v2214 = vshrl.u32 %v2213, 7
  %v2215 = vsub.s32 0, %v2214
  %v2216 = vrot.slane %v2211, %v2215
  %v2222 = vunpack.c.l.b16 %v2205
  %v2223 = vunpack.c.l.b16 %v2206
  %v2224 = vunpack.c.l.b16 %v2207
  %v2225 = vunpack.c.l.b16 %v2208
  %v2226 = vpack.c.b16 %v2223, %v2222
  %v2227 = vpack.c.b16 %v2225, %v2224
  %v2231 = vsel %vm225, %v2209, 0
  %2233 = vmatprep.subr.bf16.mxu0 0
  %2234 = vmatpush1.bf16.msra.mxu0 0
  %2235 = vmatprep.subr.bf16.mxu0 0
  %2236 = vmatpush1.bf16.msra.mxu0 0
  %2237 = vmatprep.subr.bf16.mxu0 0
  %2238 = vmatpush1.bf16.msra.mxu0 0
  %2239 = vmatprep.subr.bf16.mxu0 0
  %2240 = vmatpush1.bf16.msra.mxu0 0
  %2241 = vmatprep.subr.bf16.mxu0 0
  %2242 = vmatpush1.bf16.msra.mxu0 0
  %2243 = vmatprep.subr.bf16.mxu0 0
  %2244 = vmatpush1.bf16.msra.mxu0 0
  %2245 = vmatprep.subr.bf16.mxu0 0
  %2246 = vmatpush1.bf16.msra.mxu0 %v2227
  %2247 = vmatprep.subr.bf16.mxu0 0
  %2248 = vmatpush1.bf16.msra.mxu0 %v2226
  %2249 = vmatprep.subr.bf16.mxu0 0
  %2250 = vmatpush2.bf16.msra.mxu0 0
  %2251 = vmatprep.subr.bf16.mxu0 0
  %2252 = vmatpush2.bf16.msra.mxu0 0
  %2253 = vmatprep.subr.bf16.mxu0 0
  %2254 = vmatpush2.bf16.msra.mxu0 0
  %2255 = vmatprep.subr.bf16.mxu0 0
  %2256 = vmatpush2.bf16.msra.mxu0 0
  %2257 = vmatprep.subr.bf16.mxu0 0
  %2258 = vmatpush2.bf16.msra.mxu0 0
  %2259 = vmatprep.subr.bf16.mxu0 0
  %2260 = vmatpush2.bf16.msra.mxu0 0
  %2261 = vmatprep.subr.bf16.mxu0 0
  %2262 = vmatpush2.bf16.msra.mxu0 0
  %2263 = vmatprep.subr.bf16.mxu0 0
  %2264 = vmatpush2.bf16.msra.mxu0 0
  %2265 = vmatprep.mubr.bf16.mxu0 0
  %2266 = vmatmul.mubr.bf16.gmra.mxu0 %v2231
  %v2267 = vpop.f32.mrf.mxu0
  %v2268 = vadd.f32 %v2216, %v2267
  %v2269 = vpop.f32.mrf.mxu0
  %v2270 = vpop.f32.mrf.mxu0
  %v2271 = vadd.f32 %v2216, %v2270
  %v2272 = vpop.f32.mrf.mxu0
  %2273 = vdwg.mxu0
  %s2274 = scalar_lea.vmem %s8, 192
  %v2275 = vld [vmem:[%s2274] sm:$0xf]
  %v2276 = vld [vmem:[%s2274 + $0x4] sm:$0xf]
  %v2277 = vld [vmem:[%s2274 + $0x8] sm:$0xf]
  %v2278 = vld [vmem:[%s2274 + $0xc] sm:$0xf]
  %s2279 = scalar_lea.vmem %s9, 12
  %v2280 = vld [vmem:[%s2279] sm:$0x1]
  %v2282 = vlaneseq
  %v2283 = vshrl.u32 %v2282, 7
  %v2284 = vsub.s32 0, %v2283
  %v2285 = vrot.slane %v2280, %v2284
  %v2291 = vunpack.c.l.b16 %v2275
  %v2292 = vunpack.c.l.b16 %v2276
  %v2293 = vunpack.c.l.b16 %v2277
  %v2294 = vunpack.c.l.b16 %v2278
  %v2295 = vpack.c.b16 %v2292, %v2291
  %v2296 = vpack.c.b16 %v2294, %v2293
  %2299 = vmatprep.subr.bf16.mxu0 0
  %2300 = vmatpush1.bf16.msra.mxu0 0
  %2301 = vmatprep.subr.bf16.mxu0 0
  %2302 = vmatpush1.bf16.msra.mxu0 0
  %2303 = vmatprep.subr.bf16.mxu0 0
  %2304 = vmatpush1.bf16.msra.mxu0 0
  %2305 = vmatprep.subr.bf16.mxu0 0
  %2306 = vmatpush1.bf16.msra.mxu0 0
  %2307 = vmatprep.subr.bf16.mxu0 0
  %2308 = vmatpush1.bf16.msra.mxu0 0
  %2309 = vmatprep.subr.bf16.mxu0 0
  %2310 = vmatpush1.bf16.msra.mxu0 0
  %2311 = vmatprep.subr.bf16.mxu0 0
  %2312 = vmatpush1.bf16.msra.mxu0 %v2296
  %2313 = vmatprep.subr.bf16.mxu0 0
  %2314 = vmatpush1.bf16.msra.mxu0 %v2295
  %2315 = vmatprep.subr.bf16.mxu0 0
  %2316 = vmatpush2.bf16.msra.mxu0 0
  %2317 = vmatprep.subr.bf16.mxu0 0
  %2318 = vmatpush2.bf16.msra.mxu0 0
  %2319 = vmatprep.subr.bf16.mxu0 0
  %2320 = vmatpush2.bf16.msra.mxu0 0
  %2321 = vmatprep.subr.bf16.mxu0 0
  %2322 = vmatpush2.bf16.msra.mxu0 0
  %2323 = vmatprep.subr.bf16.mxu0 0
  %2324 = vmatpush2.bf16.msra.mxu0 0
  %2325 = vmatprep.subr.bf16.mxu0 0
  %2326 = vmatpush2.bf16.msra.mxu0 0
  %2327 = vmatprep.subr.bf16.mxu0 0
  %2328 = vmatpush2.bf16.msra.mxu0 0
  %2329 = vmatprep.subr.bf16.mxu0 0
  %2330 = vmatpush2.bf16.msra.mxu0 0
  %2331 = vmatprep.mubr.bf16.mxu0 0
  %2332 = vmatmul.mubr.bf16.gmra.mxu0 %v2231
  %v2333 = vpop.f32.mrf.mxu0
  %v2334 = vadd.f32 %v2285, %v2333
  %v2335 = vpop.f32.mrf.mxu0
  %v2336 = vpop.f32.mrf.mxu0
  %v2337 = vadd.f32 %v2285, %v2336
  %v2338 = vpop.f32.mrf.mxu0
  %2339 = vdwg.mxu0
  %s2340 = scalar_lea.vmem %s10, 64
  %v2341 = vld [vmem:[%s2340] sm:$0xf]
  %v2342 = vld [vmem:[%s2340 + $0x4] sm:$0xf]
  %v2343 = vld [vmem:[%s2340 + $0x8] sm:$0xf]
  %v2344 = vld [vmem:[%s2340 + $0xc] sm:$0xf]
  %s2345 = scalar_lea.vmem %s11, 4
  %v2346 = vld [vmem:[%s2345] sm:$0x1]
  %v2348 = vlaneseq
  %v2349 = vshrl.u32 %v2348, 7
  %v2350 = vsub.s32 0, %v2349
  %v2351 = vrot.slane %v2346, %v2350
  %v2357 = vunpack.c.l.b16 %v2341
  %v2358 = vunpack.c.l.b16 %v2342
  %v2359 = vunpack.c.l.b16 %v2343
  %v2360 = vunpack.c.l.b16 %v2344
  %v2361 = vpack.c.b16 %v2358, %v2357
  %v2362 = vpack.c.b16 %v2360, %v2359
  %2365 = vmatprep.subr.bf16.mxu0 0
  %2366 = vmatpush1.bf16.msra.mxu0 0
  %2367 = vmatprep.subr.bf16.mxu0 0
  %2368 = vmatpush1.bf16.msra.mxu0 0
  %2369 = vmatprep.subr.bf16.mxu0 0
  %2370 = vmatpush1.bf16.msra.mxu0 0
  %2371 = vmatprep.subr.bf16.mxu0 0
  %2372 = vmatpush1.bf16.msra.mxu0 0
  %2373 = vmatprep.subr.bf16.mxu0 0
  %2374 = vmatpush1.bf16.msra.mxu0 0
  %2375 = vmatprep.subr.bf16.mxu0 0
  %2376 = vmatpush1.bf16.msra.mxu0 0
  %2377 = vmatprep.subr.bf16.mxu0 0
  %2378 = vmatpush1.bf16.msra.mxu0 %v2362
  %2379 = vmatprep.subr.bf16.mxu0 0
  %2380 = vmatpush1.bf16.msra.mxu0 %v2361
  %2381 = vmatprep.subr.bf16.mxu0 0
  %2382 = vmatpush2.bf16.msra.mxu0 0
  %2383 = vmatprep.subr.bf16.mxu0 0
  %2384 = vmatpush2.bf16.msra.mxu0 0
  %2385 = vmatprep.subr.bf16.mxu0 0
  %2386 = vmatpush2.bf16.msra.mxu0 0
  %2387 = vmatprep.subr.bf16.mxu0 0
  %2388 = vmatpush2.bf16.msra.mxu0 0
  %2389 = vmatprep.subr.bf16.mxu0 0
  %2390 = vmatpush2.bf16.msra.mxu0 0
  %2391 = vmatprep.subr.bf16.mxu0 0
  %2392 = vmatpush2.bf16.msra.mxu0 0
  %2393 = vmatprep.subr.bf16.mxu0 0
  %2394 = vmatpush2.bf16.msra.mxu0 0
  %2395 = vmatprep.subr.bf16.mxu0 0
  %2396 = vmatpush2.bf16.msra.mxu0 0
  %2397 = vmatprep.mubr.bf16.mxu0 0
  %2398 = vmatmul.mubr.bf16.gmra.mxu0 %v2231
  %v2399 = vpop.f32.mrf.mxu0
  %v2400 = vadd.f32 %v2351, %v2399
  %v2401 = vpop.f32.mrf.mxu0
  %v2402 = vpop.f32.mrf.mxu0
  %v2403 = vadd.f32 %v2351, %v2402
  %v2404 = vpop.f32.mrf.mxu0
  %2405 = vdwg.mxu0
  %v2407 = vsel %vm512, %v2268, 0
  %v2410 = vsel %vm512, %v2271, 0
  %v2413 = vsel %vm512, %v2334, 0
  %v2416 = vsel %vm512, %v2337, 0
  %2418 = vmatprep.subr.mxu0 0.0
  %2419 = vmatpush1.xpose.msra.mxu0 0.0
  %2420 = vmatprep.subr.mxu0 0.0
  %2421 = vmatpush1.xpose.msra.mxu0 0.0
  %2422 = vmatprep.subr.mxu0 0.0
  %2423 = vmatpush1.xpose.msra.mxu0 0.0
  %2424 = vmatprep.subr.mxu0 0.0
  %2425 = vmatpush1.xpose.msra.mxu0 0.0
  %2426 = vmatprep.subr.mxu0 0.0
  %2427 = vmatpush1.xpose.msra.mxu0 0.0
  %2428 = vmatprep.subr.mxu0 0.0
  %2429 = vmatpush1.xpose.msra.mxu0 0.0
  %2430 = vmatprep.subr.mxu0 0.0
  %2431 = vmatpush1.xpose.msra.mxu0 0.0
  %2432 = vmatprep.subr.mxu0 0.0
  %2433 = vmatpush1.xpose.msra.mxu0 0.0
  %2434 = vmatprep.subr.mxu0 0.0
  %2435 = vmatpush1.xpose.msra.mxu0 0.0
  %2436 = vmatprep.subr.mxu0 0.0
  %2437 = vmatpush1.xpose.msra.mxu0 0.0
  %2438 = vmatprep.subr.mxu0 0.0
  %2439 = vmatpush1.xpose.msra.mxu0 0.0
  %2440 = vmatprep.subr.mxu0 0.0
  %2441 = vmatpush1.xpose.msra.mxu0 0.0
  %2442 = vmatprep.subr.mxu0 0.0
  %2443 = vmatpush1.xpose.msra.mxu0 0.0
  %2444 = vmatprep.subr.mxu0 0.0
  %2445 = vmatpush1.xpose.msra.mxu0 0.0
  %2446 = vmatprep.subr.mxu0 0.0
  %2447 = vmatpush1.xpose.msra.mxu0 %v2416
  %2448 = vmatprep.subr.mxu0 0.0
  %2449 = vmatpush1.xpose.msra.mxu0 %v2413
  %2450 = vmatprep.subr.mxu0 0.0
  %2451 = vmatpush2.xpose.msra.mxu0 0.0
  %2452 = vmatprep.subr.mxu0 0.0
  %2453 = vmatpush2.xpose.msra.mxu0 0.0
  %2454 = vmatprep.subr.mxu0 0.0
  %2455 = vmatpush2.xpose.msra.mxu0 0.0
  %2456 = vmatprep.subr.mxu0 0.0
  %2457 = vmatpush2.xpose.msra.mxu0 0.0
  %2458 = vmatprep.subr.mxu0 0.0
  %2459 = vmatpush2.xpose.msra.mxu0 0.0
  %2460 = vmatprep.subr.mxu0 0.0
  %2461 = vmatpush2.xpose.msra.mxu0 0.0
  %2462 = vmatprep.subr.mxu0 0.0
  %2463 = vmatpush2.xpose.msra.mxu0 0.0
  %2464 = vmatprep.subr.mxu0 0.0
  %2465 = vmatpush2.xpose.msra.mxu0 0.0
  %2466 = vmatprep.subr.mxu0 0.0
  %2467 = vmatpush2.xpose.msra.mxu0 0.0
  %2468 = vmatprep.subr.mxu0 0.0
  %2469 = vmatpush2.xpose.msra.mxu0 0.0
  %2470 = vmatprep.subr.mxu0 0.0
  %2471 = vmatpush2.xpose.msra.mxu0 0.0
  %2472 = vmatprep.subr.mxu0 0.0
  %2473 = vmatpush2.xpose.msra.mxu0 0.0
  %2474 = vmatprep.subr.mxu0 0.0
  %2475 = vmatpush2.xpose.msra.mxu0 0.0
  %2476 = vmatprep.subr.mxu0 0.0
  %2477 = vmatpush2.xpose.msra.mxu0 0.0
  %2478 = vmatprep.subr.mxu0 0.0
  %2479 = vmatpush2.xpose.msra.mxu0 0.0
  %2480 = vmatprep.subr.mxu0 0.0
  %2481 = vmatpush2.xpose.msra.mxu0 0.0
  %2482 = vmatprep.mubr.f32.mxu0 0.0
  %2483 = vmatmul.mubr.f32.gmra.mxu0 %v2407
  %v2484 = vpop.f32.mrf.mxu0
  %v2485 = vadd.f32 0.0, %v2484
  %v2486 = vpop.f32.mrf.mxu0
  %2487 = vmatprep.mubr.f32.mxu0 0.0
  %2488 = vmatmul.mubr.f32.gmra.mxu0 %v2410
  %v2489 = vpop.f32.mrf.mxu0
  %v2490 = vadd.f32 0.0, %v2489
  %v2491 = vpop.f32.mrf.mxu0
  %2492 = vdwg.mxu0
  %v2493 = vmul.f32 %v2485, 0.35355338
  %v2494 = vmul.f32 %v2490, 0.35355338
  %v2495 = vadd.f32 %v2493, %v72
  %v2496 = vadd.f32 %v2494, %v73
  %v2497 = vsel %vm604, %v2495, -inf
  %2498 = vmax.xlane.f32.xlu0 %v2497
  %v2499 = vpop.xlane.xlu0 %2498
  %v2500 = vsel %vm608, %v2496, -inf
  %2501 = vmax.xlane.f32.xlu0 %v2500
  %v2502 = vpop.xlane.xlu0 %2501
  %v2503 = vsub.f32 %v2495, %v2499
  %v2504 = vsub.f32 %v2496, %v2502
  %v2505 = vmul.f32 %v2503, 1.442695
  %v2506 = vpow.pop %v2505
  %v2507 = vmul.f32 %v2504, 1.442695
  %v2508 = vpow.pop %v2507
  %v2509 = vsel %vm604, %v2506, 0.0
  %2510 = vadd.xlane.f32.xlu0 %v2509
  %v2511 = vpop.xlane.xlu0 %2510
  %v2512 = vsel %vm608, %v2508, 0.0
  %2513 = vadd.xlane.f32.xlu0 %v2512
  %v2514 = vpop.xlane.xlu0 %2513
  %v2515 = vrcp.pop %v2511
  %v2516 = vrcp.pop %v2514
  %v2517 = vmul.f32 %v2506, %v2515
  %v2518 = vmul.f32 %v2508, %v2516
  %s2519 = scalar_lea.vmem %s8, 144
  %v2520 = vld [vmem:[%s2519] sm:$0xf]
  %v2521 = vld [vmem:[%s2519 + $0x4] sm:$0xf]
  %v2522 = vld [vmem:[%s2519 + $0x8] sm:$0xf]
  %v2523 = vld [vmem:[%s2519 + $0xc] sm:$0xf]
  %s2524 = scalar_lea.vmem %s9, 9
  %v2525 = vld [vmem:[%s2524] sm:$0x1]
  %v2527 = vlaneseq
  %v2528 = vshrl.u32 %v2527, 7
  %v2529 = vsub.s32 0, %v2528
  %v2530 = vrot.slane %v2525, %v2529
  %v2536 = vunpack.c.l.b16 %v2520
  %v2537 = vunpack.c.l.b16 %v2521
  %v2538 = vunpack.c.l.b16 %v2522
  %v2539 = vunpack.c.l.b16 %v2523
  %v2540 = vpack.c.b16 %v2537, %v2536
  %v2541 = vpack.c.b16 %v2539, %v2538
  %2544 = vmatprep.subr.bf16.mxu0 0
  %2545 = vmatpush1.bf16.msra.mxu0 0
  %2546 = vmatprep.subr.bf16.mxu0 0
  %2547 = vmatpush1.bf16.msra.mxu0 0
  %2548 = vmatprep.subr.bf16.mxu0 0
  %2549 = vmatpush1.bf16.msra.mxu0 0
  %2550 = vmatprep.subr.bf16.mxu0 0
  %2551 = vmatpush1.bf16.msra.mxu0 0
  %2552 = vmatprep.subr.bf16.mxu0 0
  %2553 = vmatpush1.bf16.msra.mxu0 0
  %2554 = vmatprep.subr.bf16.mxu0 0
  %2555 = vmatpush1.bf16.msra.mxu0 0
  %2556 = vmatprep.subr.bf16.mxu0 0
  %2557 = vmatpush1.bf16.msra.mxu0 %v2541
  %2558 = vmatprep.subr.bf16.mxu0 0
  %2559 = vmatpush1.bf16.msra.mxu0 %v2540
  %2560 = vmatprep.subr.bf16.mxu0 0
  %2561 = vmatpush2.bf16.msra.mxu0 0
  %2562 = vmatprep.subr.bf16.mxu0 0
  %2563 = vmatpush2.bf16.msra.mxu0 0
  %2564 = vmatprep.subr.bf16.mxu0 0
  %2565 = vmatpush2.bf16.msra.mxu0 0
  %2566 = vmatprep.subr.bf16.mxu0 0
  %2567 = vmatpush2.bf16.msra.mxu0 0
  %2568 = vmatprep.subr.bf16.mxu0 0
  %2569 = vmatpush2.bf16.msra.mxu0 0
  %2570 = vmatprep.subr.bf16.mxu0 0
  %2571 = vmatpush2.bf16.msra.mxu0 0
  %2572 = vmatprep.subr.bf16.mxu0 0
  %2573 = vmatpush2.bf16.msra.mxu0 0
  %2574 = vmatprep.subr.bf16.mxu0 0
  %2575 = vmatpush2.bf16.msra.mxu0 0
  %2576 = vmatprep.mubr.bf16.mxu0 0
  %2577 = vmatmul.mubr.bf16.gmra.mxu0 %v2231
  %v2578 = vpop.f32.mrf.mxu0
  %v2579 = vadd.f32 %v2530, %v2578
  %v2580 = vpop.f32.mrf.mxu0
  %v2581 = vpop.f32.mrf.mxu0
  %v2582 = vadd.f32 %v2530, %v2581
  %v2583 = vpop.f32.mrf.mxu0
  %2584 = vdwg.mxu0
  %s2585 = scalar_lea.vmem %s8, 208
  %v2586 = vld [vmem:[%s2585] sm:$0xf]
  %v2587 = vld [vmem:[%s2585 + $0x4] sm:$0xf]
  %v2588 = vld [vmem:[%s2585 + $0x8] sm:$0xf]
  %v2589 = vld [vmem:[%s2585 + $0xc] sm:$0xf]
  %s2590 = scalar_lea.vmem %s9, 13
  %v2591 = vld [vmem:[%s2590] sm:$0x1]
  %v2593 = vlaneseq
  %v2594 = vshrl.u32 %v2593, 7
  %v2595 = vsub.s32 0, %v2594
  %v2596 = vrot.slane %v2591, %v2595
  %v2602 = vunpack.c.l.b16 %v2586
  %v2603 = vunpack.c.l.b16 %v2587
  %v2604 = vunpack.c.l.b16 %v2588
  %v2605 = vunpack.c.l.b16 %v2589
  %v2606 = vpack.c.b16 %v2603, %v2602
  %v2607 = vpack.c.b16 %v2605, %v2604
  %2610 = vmatprep.subr.bf16.mxu0 0
  %2611 = vmatpush1.bf16.msra.mxu0 0
  %2612 = vmatprep.subr.bf16.mxu0 0
  %2613 = vmatpush1.bf16.msra.mxu0 0
  %2614 = vmatprep.subr.bf16.mxu0 0
  %2615 = vmatpush1.bf16.msra.mxu0 0
  %2616 = vmatprep.subr.bf16.mxu0 0
  %2617 = vmatpush1.bf16.msra.mxu0 0
  %2618 = vmatprep.subr.bf16.mxu0 0
  %2619 = vmatpush1.bf16.msra.mxu0 0
  %2620 = vmatprep.subr.bf16.mxu0 0
  %2621 = vmatpush1.bf16.msra.mxu0 0
  %2622 = vmatprep.subr.bf16.mxu0 0
  %2623 = vmatpush1.bf16.msra.mxu0 %v2607
  %2624 = vmatprep.subr.bf16.mxu0 0
  %2625 = vmatpush1.bf16.msra.mxu0 %v2606
  %2626 = vmatprep.subr.bf16.mxu0 0
  %2627 = vmatpush2.bf16.msra.mxu0 0
  %2628 = vmatprep.subr.bf16.mxu0 0
  %2629 = vmatpush2.bf16.msra.mxu0 0
  %2630 = vmatprep.subr.bf16.mxu0 0
  %2631 = vmatpush2.bf16.msra.mxu0 0
  %2632 = vmatprep.subr.bf16.mxu0 0
  %2633 = vmatpush2.bf16.msra.mxu0 0
  %2634 = vmatprep.subr.bf16.mxu0 0
  %2635 = vmatpush2.bf16.msra.mxu0 0
  %2636 = vmatprep.subr.bf16.mxu0 0
  %2637 = vmatpush2.bf16.msra.mxu0 0
  %2638 = vmatprep.subr.bf16.mxu0 0
  %2639 = vmatpush2.bf16.msra.mxu0 0
  %2640 = vmatprep.subr.bf16.mxu0 0
  %2641 = vmatpush2.bf16.msra.mxu0 0
  %2642 = vmatprep.mubr.bf16.mxu0 0
  %2643 = vmatmul.mubr.bf16.gmra.mxu0 %v2231
  %v2644 = vpop.f32.mrf.mxu0
  %v2645 = vadd.f32 %v2596, %v2644
  %v2646 = vpop.f32.mrf.mxu0
  %v2647 = vpop.f32.mrf.mxu0
  %v2648 = vadd.f32 %v2596, %v2647
  %v2649 = vpop.f32.mrf.mxu0
  %2650 = vdwg.mxu0
  %s2651 = scalar_lea.vmem %s10, 80
  %v2652 = vld [vmem:[%s2651] sm:$0xf]
  %v2653 = vld [vmem:[%s2651 + $0x4] sm:$0xf]
  %v2654 = vld [vmem:[%s2651 + $0x8] sm:$0xf]
  %v2655 = vld [vmem:[%s2651 + $0xc] sm:$0xf]
  %s2656 = scalar_lea.vmem %s11, 5
  %v2657 = vld [vmem:[%s2656] sm:$0x1]
  %v2659 = vlaneseq
  %v2660 = vshrl.u32 %v2659, 7
  %v2661 = vsub.s32 0, %v2660
  %v2662 = vrot.slane %v2657, %v2661
  %v2668 = vunpack.c.l.b16 %v2652
  %v2669 = vunpack.c.l.b16 %v2653
  %v2670 = vunpack.c.l.b16 %v2654
  %v2671 = vunpack.c.l.b16 %v2655
  %v2672 = vpack.c.b16 %v2669, %v2668
  %v2673 = vpack.c.b16 %v2671, %v2670
  %2676 = vmatprep.subr.bf16.mxu0 0
  %2677 = vmatpush1.bf16.msra.mxu0 0
  %2678 = vmatprep.subr.bf16.mxu0 0
  %2679 = vmatpush1.bf16.msra.mxu0 0
  %2680 = vmatprep.subr.bf16.mxu0 0
  %2681 = vmatpush1.bf16.msra.mxu0 0
  %2682 = vmatprep.subr.bf16.mxu0 0
  %2683 = vmatpush1.bf16.msra.mxu0 0
  %2684 = vmatprep.subr.bf16.mxu0 0
  %2685 = vmatpush1.bf16.msra.mxu0 0
  %2686 = vmatprep.subr.bf16.mxu0 0
  %2687 = vmatpush1.bf16.msra.mxu0 0
  %2688 = vmatprep.subr.bf16.mxu0 0
  %2689 = vmatpush1.bf16.msra.mxu0 %v2673
  %2690 = vmatprep.subr.bf16.mxu0 0
  %2691 = vmatpush1.bf16.msra.mxu0 %v2672
  %2692 = vmatprep.subr.bf16.mxu0 0
  %2693 = vmatpush2.bf16.msra.mxu0 0
  %2694 = vmatprep.subr.bf16.mxu0 0
  %2695 = vmatpush2.bf16.msra.mxu0 0
  %2696 = vmatprep.subr.bf16.mxu0 0
  %2697 = vmatpush2.bf16.msra.mxu0 0
  %2698 = vmatprep.subr.bf16.mxu0 0
  %2699 = vmatpush2.bf16.msra.mxu0 0
  %2700 = vmatprep.subr.bf16.mxu0 0
  %2701 = vmatpush2.bf16.msra.mxu0 0
  %2702 = vmatprep.subr.bf16.mxu0 0
  %2703 = vmatpush2.bf16.msra.mxu0 0
  %2704 = vmatprep.subr.bf16.mxu0 0
  %2705 = vmatpush2.bf16.msra.mxu0 0
  %2706 = vmatprep.subr.bf16.mxu0 0
  %2707 = vmatpush2.bf16.msra.mxu0 0
  %2708 = vmatprep.mubr.bf16.mxu0 0
  %2709 = vmatmul.mubr.bf16.gmra.mxu0 %v2231
  %v2710 = vpop.f32.mrf.mxu0
  %v2711 = vadd.f32 %v2662, %v2710
  %v2712 = vpop.f32.mrf.mxu0
  %v2713 = vpop.f32.mrf.mxu0
  %v2714 = vadd.f32 %v2662, %v2713
  %v2715 = vpop.f32.mrf.mxu0
  %2716 = vdwg.mxu0
  %v2718 = vsel %vm512, %v2579, 0
  %v2721 = vsel %vm512, %v2582, 0
  %v2724 = vsel %vm512, %v2645, 0
  %v2727 = vsel %vm512, %v2648, 0
  %2729 = vmatprep.subr.mxu0 0.0
  %2730 = vmatpush1.xpose.msra.mxu0 0.0
  %2731 = vmatprep.subr.mxu0 0.0
  %2732 = vmatpush1.xpose.msra.mxu0 0.0
  %2733 = vmatprep.subr.mxu0 0.0
  %2734 = vmatpush1.xpose.msra.mxu0 0.0
  %2735 = vmatprep.subr.mxu0 0.0
  %2736 = vmatpush1.xpose.msra.mxu0 0.0
  %2737 = vmatprep.subr.mxu0 0.0
  %2738 = vmatpush1.xpose.msra.mxu0 0.0
  %2739 = vmatprep.subr.mxu0 0.0
  %2740 = vmatpush1.xpose.msra.mxu0 0.0
  %2741 = vmatprep.subr.mxu0 0.0
  %2742 = vmatpush1.xpose.msra.mxu0 0.0
  %2743 = vmatprep.subr.mxu0 0.0
  %2744 = vmatpush1.xpose.msra.mxu0 0.0
  %2745 = vmatprep.subr.mxu0 0.0
  %2746 = vmatpush1.xpose.msra.mxu0 0.0
  %2747 = vmatprep.subr.mxu0 0.0
  %2748 = vmatpush1.xpose.msra.mxu0 0.0
  %2749 = vmatprep.subr.mxu0 0.0
  %2750 = vmatpush1.xpose.msra.mxu0 0.0
  %2751 = vmatprep.subr.mxu0 0.0
  %2752 = vmatpush1.xpose.msra.mxu0 0.0
  %2753 = vmatprep.subr.mxu0 0.0
  %2754 = vmatpush1.xpose.msra.mxu0 0.0
  %2755 = vmatprep.subr.mxu0 0.0
  %2756 = vmatpush1.xpose.msra.mxu0 0.0
  %2757 = vmatprep.subr.mxu0 0.0
  %2758 = vmatpush1.xpose.msra.mxu0 %v2727
  %2759 = vmatprep.subr.mxu0 0.0
  %2760 = vmatpush1.xpose.msra.mxu0 %v2724
  %2761 = vmatprep.subr.mxu0 0.0
  %2762 = vmatpush2.xpose.msra.mxu0 0.0
  %2763 = vmatprep.subr.mxu0 0.0
  %2764 = vmatpush2.xpose.msra.mxu0 0.0
  %2765 = vmatprep.subr.mxu0 0.0
  %2766 = vmatpush2.xpose.msra.mxu0 0.0
  %2767 = vmatprep.subr.mxu0 0.0
  %2768 = vmatpush2.xpose.msra.mxu0 0.0
  %2769 = vmatprep.subr.mxu0 0.0
  %2770 = vmatpush2.xpose.msra.mxu0 0.0
  %2771 = vmatprep.subr.mxu0 0.0
  %2772 = vmatpush2.xpose.msra.mxu0 0.0
  %2773 = vmatprep.subr.mxu0 0.0
  %2774 = vmatpush2.xpose.msra.mxu0 0.0
  %2775 = vmatprep.subr.mxu0 0.0
  %2776 = vmatpush2.xpose.msra.mxu0 0.0
  %2777 = vmatprep.subr.mxu0 0.0
  %2778 = vmatpush2.xpose.msra.mxu0 0.0
  %2779 = vmatprep.subr.mxu0 0.0
  %2780 = vmatpush2.xpose.msra.mxu0 0.0
  %2781 = vmatprep.subr.mxu0 0.0
  %2782 = vmatpush2.xpose.msra.mxu0 0.0
  %2783 = vmatprep.subr.mxu0 0.0
  %2784 = vmatpush2.xpose.msra.mxu0 0.0
  %2785 = vmatprep.subr.mxu0 0.0
  %2786 = vmatpush2.xpose.msra.mxu0 0.0
  %2787 = vmatprep.subr.mxu0 0.0
  %2788 = vmatpush2.xpose.msra.mxu0 0.0
  %2789 = vmatprep.subr.mxu0 0.0
  %2790 = vmatpush2.xpose.msra.mxu0 0.0
  %2791 = vmatprep.subr.mxu0 0.0
  %2792 = vmatpush2.xpose.msra.mxu0 0.0
  %2793 = vmatprep.mubr.f32.mxu0 0.0
  %2794 = vmatmul.mubr.f32.gmra.mxu0 %v2718
  %v2795 = vpop.f32.mrf.mxu0
  %v2796 = vadd.f32 0.0, %v2795
  %v2797 = vpop.f32.mrf.mxu0
  %2798 = vmatprep.mubr.f32.mxu0 0.0
  %2799 = vmatmul.mubr.f32.gmra.mxu0 %v2721
  %v2800 = vpop.f32.mrf.mxu0
  %v2801 = vadd.f32 0.0, %v2800
  %v2802 = vpop.f32.mrf.mxu0
  %2803 = vdwg.mxu0
  %v2804 = vmul.f32 %v2796, 0.35355338
  %v2805 = vmul.f32 %v2801, 0.35355338
  %v2806 = vadd.f32 %v2804, %v72
  %v2807 = vadd.f32 %v2805, %v73
  %v2808 = vsel %vm604, %v2806, -inf
  %2809 = vmax.xlane.f32.xlu0 %v2808
  %v2810 = vpop.xlane.xlu0 %2809
  %v2811 = vsel %vm608, %v2807, -inf
  %2812 = vmax.xlane.f32.xlu0 %v2811
  %v2813 = vpop.xlane.xlu0 %2812
  %v2814 = vsub.f32 %v2806, %v2810
  %v2815 = vsub.f32 %v2807, %v2813
  %v2816 = vmul.f32 %v2814, 1.442695
  %v2817 = vpow.pop %v2816
  %v2818 = vmul.f32 %v2815, 1.442695
  %v2819 = vpow.pop %v2818
  %v2820 = vsel %vm604, %v2817, 0.0
  %2821 = vadd.xlane.f32.xlu0 %v2820
  %v2822 = vpop.xlane.xlu0 %2821
  %v2823 = vsel %vm608, %v2819, 0.0
  %2824 = vadd.xlane.f32.xlu0 %v2823
  %v2825 = vpop.xlane.xlu0 %2824
  %v2826 = vrcp.pop %v2822
  %v2827 = vrcp.pop %v2825
  %v2828 = vmul.f32 %v2817, %v2826
  %v2829 = vmul.f32 %v2819, %v2827
  %v2831 = vsel %vm604, %v2828, 0
  %v2834 = vsel %vm604, %v2829, 0
  %v2837 = vsel %vm945, %v2714, 0
  %2839 = vmatprep.subr.mxu0 0.0
  %2840 = vmatpush1.msra.mxu0 0.0
  %2841 = vmatprep.subr.mxu0 0.0
  %2842 = vmatpush1.msra.mxu0 0.0
  %2843 = vmatprep.subr.mxu0 0.0
  %2844 = vmatpush1.msra.mxu0 0.0
  %2845 = vmatprep.subr.mxu0 0.0
  %2846 = vmatpush1.msra.mxu0 0.0
  %2847 = vmatprep.subr.mxu0 0.0
  %2848 = vmatpush1.msra.mxu0 0.0
  %2849 = vmatprep.subr.mxu0 0.0
  %2850 = vmatpush1.msra.mxu0 0.0
  %2851 = vmatprep.subr.mxu0 0.0
  %2852 = vmatpush1.msra.mxu0 0.0
  %2853 = vmatprep.subr.mxu0 0.0
  %2854 = vmatpush1.msra.mxu0 0.0
  %2855 = vmatprep.subr.mxu0 0.0
  %2856 = vmatpush1.msra.mxu0 0.0
  %2857 = vmatprep.subr.mxu0 0.0
  %2858 = vmatpush1.msra.mxu0 0.0
  %2859 = vmatprep.subr.mxu0 0.0
  %2860 = vmatpush1.msra.mxu0 0.0
  %2861 = vmatprep.subr.mxu0 0.0
  %2862 = vmatpush1.msra.mxu0 0.0
  %2863 = vmatprep.subr.mxu0 0.0
  %2864 = vmatpush1.msra.mxu0 0.0
  %2865 = vmatprep.subr.mxu0 0.0
  %2866 = vmatpush1.msra.mxu0 0.0
  %2867 = vmatprep.subr.mxu0 0.0
  %2868 = vmatpush1.msra.mxu0 %v2837
  %2869 = vmatprep.subr.mxu0 0.0
  %2870 = vmatpush1.msra.mxu0 %v2711
  %2871 = vmatprep.subr.mxu0 0.0
  %2872 = vmatpush2.msra.mxu0 0.0
  %2873 = vmatprep.subr.mxu0 0.0
  %2874 = vmatpush2.msra.mxu0 0.0
  %2875 = vmatprep.subr.mxu0 0.0
  %2876 = vmatpush2.msra.mxu0 0.0
  %2877 = vmatprep.subr.mxu0 0.0
  %2878 = vmatpush2.msra.mxu0 0.0
  %2879 = vmatprep.subr.mxu0 0.0
  %2880 = vmatpush2.msra.mxu0 0.0
  %2881 = vmatprep.subr.mxu0 0.0
  %2882 = vmatpush2.msra.mxu0 0.0
  %2883 = vmatprep.subr.mxu0 0.0
  %2884 = vmatpush2.msra.mxu0 0.0
  %2885 = vmatprep.subr.mxu0 0.0
  %2886 = vmatpush2.msra.mxu0 0.0
  %2887 = vmatprep.subr.mxu0 0.0
  %2888 = vmatpush2.msra.mxu0 0.0
  %2889 = vmatprep.subr.mxu0 0.0
  %2890 = vmatpush2.msra.mxu0 0.0
  %2891 = vmatprep.subr.mxu0 0.0
  %2892 = vmatpush2.msra.mxu0 0.0
  %2893 = vmatprep.subr.mxu0 0.0
  %2894 = vmatpush2.msra.mxu0 0.0
  %2895 = vmatprep.subr.mxu0 0.0
  %2896 = vmatpush2.msra.mxu0 0.0
  %2897 = vmatprep.subr.mxu0 0.0
  %2898 = vmatpush2.msra.mxu0 0.0
  %2899 = vmatprep.subr.mxu0 0.0
  %2900 = vmatpush2.msra.mxu0 0.0
  %2901 = vmatprep.subr.mxu0 0.0
  %2902 = vmatpush2.msra.mxu0 0.0
  %2903 = vmatprep.mubr.f32.mxu0 0.0
  %2904 = vmatmul.mubr.f32.gmra.mxu0 %v2831
  %v2905 = vpop.f32.mrf.mxu0
  %v2906 = vadd.f32 0.0, %v2905
  %v2907 = vpop.f32.mrf.mxu0
  %2908 = vmatprep.mubr.f32.mxu0 0.0
  %2909 = vmatmul.mubr.f32.gmra.mxu0 %v2834
  %v2910 = vpop.f32.mrf.mxu0
  %v2911 = vadd.f32 0.0, %v2910
  %v2912 = vpop.f32.mrf.mxu0
  %2913 = vdwg.mxu0
  %v2915 = vsel %vm604, %v2517, 0
  %v2918 = vsel %vm604, %v2518, 0
  %v2921 = vsel %vm945, %v2403, 0
  %2923 = vmatprep.subr.mxu0 0.0
  %2924 = vmatpush1.msra.mxu0 0.0
  %2925 = vmatprep.subr.mxu0 0.0
  %2926 = vmatpush1.msra.mxu0 0.0
  %2927 = vmatprep.subr.mxu0 0.0
  %2928 = vmatpush1.msra.mxu0 0.0
  %2929 = vmatprep.subr.mxu0 0.0
  %2930 = vmatpush1.msra.mxu0 0.0
  %2931 = vmatprep.subr.mxu0 0.0
  %2932 = vmatpush1.msra.mxu0 0.0
  %2933 = vmatprep.subr.mxu0 0.0
  %2934 = vmatpush1.msra.mxu0 0.0
  %2935 = vmatprep.subr.mxu0 0.0
  %2936 = vmatpush1.msra.mxu0 0.0
  %2937 = vmatprep.subr.mxu0 0.0
  %2938 = vmatpush1.msra.mxu0 0.0
  %2939 = vmatprep.subr.mxu0 0.0
  %2940 = vmatpush1.msra.mxu0 0.0
  %2941 = vmatprep.subr.mxu0 0.0
  %2942 = vmatpush1.msra.mxu0 0.0
  %2943 = vmatprep.subr.mxu0 0.0
  %2944 = vmatpush1.msra.mxu0 0.0
  %2945 = vmatprep.subr.mxu0 0.0
  %2946 = vmatpush1.msra.mxu0 0.0
  %2947 = vmatprep.subr.mxu0 0.0
  %2948 = vmatpush1.msra.mxu0 0.0
  %2949 = vmatprep.subr.mxu0 0.0
  %2950 = vmatpush1.msra.mxu0 0.0
  %2951 = vmatprep.subr.mxu0 0.0
  %2952 = vmatpush1.msra.mxu0 %v2921
  %2953 = vmatprep.subr.mxu0 0.0
  %2954 = vmatpush1.msra.mxu0 %v2400
  %2955 = vmatprep.subr.mxu0 0.0
  %2956 = vmatpush2.msra.mxu0 0.0
  %2957 = vmatprep.subr.mxu0 0.0
  %2958 = vmatpush2.msra.mxu0 0.0
  %2959 = vmatprep.subr.mxu0 0.0
  %2960 = vmatpush2.msra.mxu0 0.0
  %2961 = vmatprep.subr.mxu0 0.0
  %2962 = vmatpush2.msra.mxu0 0.0
  %2963 = vmatprep.subr.mxu0 0.0
  %2964 = vmatpush2.msra.mxu0 0.0
  %2965 = vmatprep.subr.mxu0 0.0
  %2966 = vmatpush2.msra.mxu0 0.0
  %2967 = vmatprep.subr.mxu0 0.0
  %2968 = vmatpush2.msra.mxu0 0.0
  %2969 = vmatprep.subr.mxu0 0.0
  %2970 = vmatpush2.msra.mxu0 0.0
  %2971 = vmatprep.subr.mxu0 0.0
  %2972 = vmatpush2.msra.mxu0 0.0
  %2973 = vmatprep.subr.mxu0 0.0
  %2974 = vmatpush2.msra.mxu0 0.0
  %2975 = vmatprep.subr.mxu0 0.0
  %2976 = vmatpush2.msra.mxu0 0.0
  %2977 = vmatprep.subr.mxu0 0.0
  %2978 = vmatpush2.msra.mxu0 0.0
  %2979 = vmatprep.subr.mxu0 0.0
  %2980 = vmatpush2.msra.mxu0 0.0
  %2981 = vmatprep.subr.mxu0 0.0
  %2982 = vmatpush2.msra.mxu0 0.0
  %2983 = vmatprep.subr.mxu0 0.0
  %2984 = vmatpush2.msra.mxu0 0.0
  %2985 = vmatprep.subr.mxu0 0.0
  %2986 = vmatpush2.msra.mxu0 0.0
  %2987 = vmatprep.mubr.f32.mxu0 0.0
  %2988 = vmatmul.mubr.f32.gmra.mxu0 %v2915
  %v2989 = vpop.f32.mrf.mxu0
  %v2990 = vadd.f32 %v2906, %v2989
  %v2991 = vpop.f32.mrf.mxu0
  %2992 = vmatprep.mubr.f32.mxu0 0.0
  %2993 = vmatmul.mubr.f32.gmra.mxu0 %v2918
  %v2994 = vpop.f32.mrf.mxu0
  %v2995 = vadd.f32 %v2911, %v2994
  %v2996 = vpop.f32.mrf.mxu0
  %2997 = vdwg.mxu0
  %s2998 = scalar_lea.vmem %s8, 160
  %v2999 = vld [vmem:[%s2998] sm:$0xf]
  %v3000 = vld [vmem:[%s2998 + $0x4] sm:$0xf]
  %v3001 = vld [vmem:[%s2998 + $0x8] sm:$0xf]
  %v3002 = vld [vmem:[%s2998 + $0xc] sm:$0xf]
  %s3003 = scalar_lea.vmem %s9, 10
  %v3004 = vld [vmem:[%s3003] sm:$0x1]
  %v3006 = vlaneseq
  %v3007 = vshrl.u32 %v3006, 7
  %v3008 = vsub.s32 0, %v3007
  %v3009 = vrot.slane %v3004, %v3008
  %v3015 = vunpack.c.l.b16 %v2999
  %v3016 = vunpack.c.l.b16 %v3000
  %v3017 = vunpack.c.l.b16 %v3001
  %v3018 = vunpack.c.l.b16 %v3002
  %v3019 = vpack.c.b16 %v3016, %v3015
  %v3020 = vpack.c.b16 %v3018, %v3017
  %3023 = vmatprep.subr.bf16.mxu0 0
  %3024 = vmatpush1.bf16.msra.mxu0 0
  %3025 = vmatprep.subr.bf16.mxu0 0
  %3026 = vmatpush1.bf16.msra.mxu0 0
  %3027 = vmatprep.subr.bf16.mxu0 0
  %3028 = vmatpush1.bf16.msra.mxu0 0
  %3029 = vmatprep.subr.bf16.mxu0 0
  %3030 = vmatpush1.bf16.msra.mxu0 0
  %3031 = vmatprep.subr.bf16.mxu0 0
  %3032 = vmatpush1.bf16.msra.mxu0 0
  %3033 = vmatprep.subr.bf16.mxu0 0
  %3034 = vmatpush1.bf16.msra.mxu0 0
  %3035 = vmatprep.subr.bf16.mxu0 0
  %3036 = vmatpush1.bf16.msra.mxu0 %v3020
  %3037 = vmatprep.subr.bf16.mxu0 0
  %3038 = vmatpush1.bf16.msra.mxu0 %v3019
  %3039 = vmatprep.subr.bf16.mxu0 0
  %3040 = vmatpush2.bf16.msra.mxu0 0
  %3041 = vmatprep.subr.bf16.mxu0 0
  %3042 = vmatpush2.bf16.msra.mxu0 0
  %3043 = vmatprep.subr.bf16.mxu0 0
  %3044 = vmatpush2.bf16.msra.mxu0 0
  %3045 = vmatprep.subr.bf16.mxu0 0
  %3046 = vmatpush2.bf16.msra.mxu0 0
  %3047 = vmatprep.subr.bf16.mxu0 0
  %3048 = vmatpush2.bf16.msra.mxu0 0
  %3049 = vmatprep.subr.bf16.mxu0 0
  %3050 = vmatpush2.bf16.msra.mxu0 0
  %3051 = vmatprep.subr.bf16.mxu0 0
  %3052 = vmatpush2.bf16.msra.mxu0 0
  %3053 = vmatprep.subr.bf16.mxu0 0
  %3054 = vmatpush2.bf16.msra.mxu0 0
  %3055 = vmatprep.mubr.bf16.mxu0 0
  %3056 = vmatmul.mubr.bf16.gmra.mxu0 %v2231
  %v3057 = vpop.f32.mrf.mxu0
  %v3058 = vadd.f32 %v3009, %v3057
  %v3059 = vpop.f32.mrf.mxu0
  %v3060 = vpop.f32.mrf.mxu0
  %v3061 = vadd.f32 %v3009, %v3060
  %v3062 = vpop.f32.mrf.mxu0
  %3063 = vdwg.mxu0
  %s3064 = scalar_lea.vmem %s8, 224
  %v3065 = vld [vmem:[%s3064] sm:$0xf]
  %v3066 = vld [vmem:[%s3064 + $0x4] sm:$0xf]
  %v3067 = vld [vmem:[%s3064 + $0x8] sm:$0xf]
  %v3068 = vld [vmem:[%s3064 + $0xc] sm:$0xf]
  %s3069 = scalar_lea.vmem %s9, 14
  %v3070 = vld [vmem:[%s3069] sm:$0x1]
  %v3072 = vlaneseq
  %v3073 = vshrl.u32 %v3072, 7
  %v3074 = vsub.s32 0, %v3073
  %v3075 = vrot.slane %v3070, %v3074
  %v3081 = vunpack.c.l.b16 %v3065
  %v3082 = vunpack.c.l.b16 %v3066
  %v3083 = vunpack.c.l.b16 %v3067
  %v3084 = vunpack.c.l.b16 %v3068
  %v3085 = vpack.c.b16 %v3082, %v3081
  %v3086 = vpack.c.b16 %v3084, %v3083
  %3089 = vmatprep.subr.bf16.mxu0 0
  %3090 = vmatpush1.bf16.msra.mxu0 0
  %3091 = vmatprep.subr.bf16.mxu0 0
  %3092 = vmatpush1.bf16.msra.mxu0 0
  %3093 = vmatprep.subr.bf16.mxu0 0
  %3094 = vmatpush1.bf16.msra.mxu0 0
  %3095 = vmatprep.subr.bf16.mxu0 0
  %3096 = vmatpush1.bf16.msra.mxu0 0
  %3097 = vmatprep.subr.bf16.mxu0 0
  %3098 = vmatpush1.bf16.msra.mxu0 0
  %3099 = vmatprep.subr.bf16.mxu0 0
  %3100 = vmatpush1.bf16.msra.mxu0 0
  %3101 = vmatprep.subr.bf16.mxu0 0
  %3102 = vmatpush1.bf16.msra.mxu0 %v3086
  %3103 = vmatprep.subr.bf16.mxu0 0
  %3104 = vmatpush1.bf16.msra.mxu0 %v3085
  %3105 = vmatprep.subr.bf16.mxu0 0
  %3106 = vmatpush2.bf16.msra.mxu0 0
  %3107 = vmatprep.subr.bf16.mxu0 0
  %3108 = vmatpush2.bf16.msra.mxu0 0
  %3109 = vmatprep.subr.bf16.mxu0 0
  %3110 = vmatpush2.bf16.msra.mxu0 0
  %3111 = vmatprep.subr.bf16.mxu0 0
  %3112 = vmatpush2.bf16.msra.mxu0 0
  %3113 = vmatprep.subr.bf16.mxu0 0
  %3114 = vmatpush2.bf16.msra.mxu0 0
  %3115 = vmatprep.subr.bf16.mxu0 0
  %3116 = vmatpush2.bf16.msra.mxu0 0
  %3117 = vmatprep.subr.bf16.mxu0 0
  %3118 = vmatpush2.bf16.msra.mxu0 0
  %3119 = vmatprep.subr.bf16.mxu0 0
  %3120 = vmatpush2.bf16.msra.mxu0 0
  %3121 = vmatprep.mubr.bf16.mxu0 0
  %3122 = vmatmul.mubr.bf16.gmra.mxu0 %v2231
  %v3123 = vpop.f32.mrf.mxu0
  %v3124 = vadd.f32 %v3075, %v3123
  %v3125 = vpop.f32.mrf.mxu0
  %v3126 = vpop.f32.mrf.mxu0
  %v3127 = vadd.f32 %v3075, %v3126
  %v3128 = vpop.f32.mrf.mxu0
  %3129 = vdwg.mxu0
  %s3130 = scalar_lea.vmem %s10, 96
  %v3131 = vld [vmem:[%s3130] sm:$0xf]
  %v3132 = vld [vmem:[%s3130 + $0x4] sm:$0xf]
  %v3133 = vld [vmem:[%s3130 + $0x8] sm:$0xf]
  %v3134 = vld [vmem:[%s3130 + $0xc] sm:$0xf]
  %s3135 = scalar_lea.vmem %s11, 6
  %v3136 = vld [vmem:[%s3135] sm:$0x1]
  %v3138 = vlaneseq
  %v3139 = vshrl.u32 %v3138, 7
  %v3140 = vsub.s32 0, %v3139
  %v3141 = vrot.slane %v3136, %v3140
  %v3147 = vunpack.c.l.b16 %v3131
  %v3148 = vunpack.c.l.b16 %v3132
  %v3149 = vunpack.c.l.b16 %v3133
  %v3150 = vunpack.c.l.b16 %v3134
  %v3151 = vpack.c.b16 %v3148, %v3147
  %v3152 = vpack.c.b16 %v3150, %v3149
  %3155 = vmatprep.subr.bf16.mxu0 0
  %3156 = vmatpush1.bf16.msra.mxu0 0
  %3157 = vmatprep.subr.bf16.mxu0 0
  %3158 = vmatpush1.bf16.msra.mxu0 0
  %3159 = vmatprep.subr.bf16.mxu0 0
  %3160 = vmatpush1.bf16.msra.mxu0 0
  %3161 = vmatprep.subr.bf16.mxu0 0
  %3162 = vmatpush1.bf16.msra.mxu0 0
  %3163 = vmatprep.subr.bf16.mxu0 0
  %3164 = vmatpush1.bf16.msra.mxu0 0
  %3165 = vmatprep.subr.bf16.mxu0 0
  %3166 = vmatpush1.bf16.msra.mxu0 0
  %3167 = vmatprep.subr.bf16.mxu0 0
  %3168 = vmatpush1.bf16.msra.mxu0 %v3152
  %3169 = vmatprep.subr.bf16.mxu0 0
  %3170 = vmatpush1.bf16.msra.mxu0 %v3151
  %3171 = vmatprep.subr.bf16.mxu0 0
  %3172 = vmatpush2.bf16.msra.mxu0 0
  %3173 = vmatprep.subr.bf16.mxu0 0
  %3174 = vmatpush2.bf16.msra.mxu0 0
  %3175 = vmatprep.subr.bf16.mxu0 0
  %3176 = vmatpush2.bf16.msra.mxu0 0
  %3177 = vmatprep.subr.bf16.mxu0 0
  %3178 = vmatpush2.bf16.msra.mxu0 0
  %3179 = vmatprep.subr.bf16.mxu0 0
  %3180 = vmatpush2.bf16.msra.mxu0 0
  %3181 = vmatprep.subr.bf16.mxu0 0
  %3182 = vmatpush2.bf16.msra.mxu0 0
  %3183 = vmatprep.subr.bf16.mxu0 0
  %3184 = vmatpush2.bf16.msra.mxu0 0
  %3185 = vmatprep.subr.bf16.mxu0 0
  %3186 = vmatpush2.bf16.msra.mxu0 0
  %3187 = vmatprep.mubr.bf16.mxu0 0
  %3188 = vmatmul.mubr.bf16.gmra.mxu0 %v2231
  %v3189 = vpop.f32.mrf.mxu0
  %v3190 = vadd.f32 %v3141, %v3189
  %v3191 = vpop.f32.mrf.mxu0
  %v3192 = vpop.f32.mrf.mxu0
  %v3193 = vadd.f32 %v3141, %v3192
  %v3194 = vpop.f32.mrf.mxu0
  %3195 = vdwg.mxu0
  %v3197 = vsel %vm512, %v3058, 0
  %v3200 = vsel %vm512, %v3061, 0
  %v3203 = vsel %vm512, %v3124, 0
  %v3206 = vsel %vm512, %v3127, 0
  %3208 = vmatprep.subr.mxu0 0.0
  %3209 = vmatpush1.xpose.msra.mxu0 0.0
  %3210 = vmatprep.subr.mxu0 0.0
  %3211 = vmatpush1.xpose.msra.mxu0 0.0
  %3212 = vmatprep.subr.mxu0 0.0
  %3213 = vmatpush1.xpose.msra.mxu0 0.0
  %3214 = vmatprep.subr.mxu0 0.0
  %3215 = vmatpush1.xpose.msra.mxu0 0.0
  %3216 = vmatprep.subr.mxu0 0.0
  %3217 = vmatpush1.xpose.msra.mxu0 0.0
  %3218 = vmatprep.subr.mxu0 0.0
  %3219 = vmatpush1.xpose.msra.mxu0 0.0
  %3220 = vmatprep.subr.mxu0 0.0
  %3221 = vmatpush1.xpose.msra.mxu0 0.0
  %3222 = vmatprep.subr.mxu0 0.0
  %3223 = vmatpush1.xpose.msra.mxu0 0.0
  %3224 = vmatprep.subr.mxu0 0.0
  %3225 = vmatpush1.xpose.msra.mxu0 0.0
  %3226 = vmatprep.subr.mxu0 0.0
  %3227 = vmatpush1.xpose.msra.mxu0 0.0
  %3228 = vmatprep.subr.mxu0 0.0
  %3229 = vmatpush1.xpose.msra.mxu0 0.0
  %3230 = vmatprep.subr.mxu0 0.0
  %3231 = vmatpush1.xpose.msra.mxu0 0.0
  %3232 = vmatprep.subr.mxu0 0.0
  %3233 = vmatpush1.xpose.msra.mxu0 0.0
  %3234 = vmatprep.subr.mxu0 0.0
  %3235 = vmatpush1.xpose.msra.mxu0 0.0
  %3236 = vmatprep.subr.mxu0 0.0
  %3237 = vmatpush1.xpose.msra.mxu0 %v3206
  %3238 = vmatprep.subr.mxu0 0.0
  %3239 = vmatpush1.xpose.msra.mxu0 %v3203
  %3240 = vmatprep.subr.mxu0 0.0
  %3241 = vmatpush2.xpose.msra.mxu0 0.0
  %3242 = vmatprep.subr.mxu0 0.0
  %3243 = vmatpush2.xpose.msra.mxu0 0.0
  %3244 = vmatprep.subr.mxu0 0.0
  %3245 = vmatpush2.xpose.msra.mxu0 0.0
  %3246 = vmatprep.subr.mxu0 0.0
  %3247 = vmatpush2.xpose.msra.mxu0 0.0
  %3248 = vmatprep.subr.mxu0 0.0
  %3249 = vmatpush2.xpose.msra.mxu0 0.0
  %3250 = vmatprep.subr.mxu0 0.0
  %3251 = vmatpush2.xpose.msra.mxu0 0.0
  %3252 = vmatprep.subr.mxu0 0.0
  %3253 = vmatpush2.xpose.msra.mxu0 0.0
  %3254 = vmatprep.subr.mxu0 0.0
  %3255 = vmatpush2.xpose.msra.mxu0 0.0
  %3256 = vmatprep.subr.mxu0 0.0
  %3257 = vmatpush2.xpose.msra.mxu0 0.0
  %3258 = vmatprep.subr.mxu0 0.0
  %3259 = vmatpush2.xpose.msra.mxu0 0.0
  %3260 = vmatprep.subr.mxu0 0.0
  %3261 = vmatpush2.xpose.msra.mxu0 0.0
  %3262 = vmatprep.subr.mxu0 0.0
  %3263 = vmatpush2.xpose.msra.mxu0 0.0
  %3264 = vmatprep.subr.mxu0 0.0
  %3265 = vmatpush2.xpose.msra.mxu0 0.0
  %3266 = vmatprep.subr.mxu0 0.0
  %3267 = vmatpush2.xpose.msra.mxu0 0.0
  %3268 = vmatprep.subr.mxu0 0.0
  %3269 = vmatpush2.xpose.msra.mxu0 0.0
  %3270 = vmatprep.subr.mxu0 0.0
  %3271 = vmatpush2.xpose.msra.mxu0 0.0
  %3272 = vmatprep.mubr.f32.mxu0 0.0
  %3273 = vmatmul.mubr.f32.gmra.mxu0 %v3197
  %v3274 = vpop.f32.mrf.mxu0
  %v3275 = vadd.f32 0.0, %v3274
  %v3276 = vpop.f32.mrf.mxu0
  %3277 = vmatprep.mubr.f32.mxu0 0.0
  %3278 = vmatmul.mubr.f32.gmra.mxu0 %v3200
  %v3279 = vpop.f32.mrf.mxu0
  %v3280 = vadd.f32 0.0, %v3279
  %v3281 = vpop.f32.mrf.mxu0
  %3282 = vdwg.mxu0
  %v3283 = vmul.f32 %v3275, 0.35355338
  %v3284 = vmul.f32 %v3280, 0.35355338
  %v3285 = vadd.f32 %v3283, %v72
  %v3286 = vadd.f32 %v3284, %v73
  %v3287 = vsel %vm604, %v3285, -inf
  %3288 = vmax.xlane.f32.xlu0 %v3287
  %v3289 = vpop.xlane.xlu0 %3288
  %v3290 = vsel %vm608, %v3286, -inf
  %3291 = vmax.xlane.f32.xlu0 %v3290
  %v3292 = vpop.xlane.xlu0 %3291
  %v3293 = vsub.f32 %v3285, %v3289
  %v3294 = vsub.f32 %v3286, %v3292
  %v3295 = vmul.f32 %v3293, 1.442695
  %v3296 = vpow.pop %v3295
  %v3297 = vmul.f32 %v3294, 1.442695
  %v3298 = vpow.pop %v3297
  %v3299 = vsel %vm604, %v3296, 0.0
  %3300 = vadd.xlane.f32.xlu0 %v3299
  %v3301 = vpop.xlane.xlu0 %3300
  %v3302 = vsel %vm608, %v3298, 0.0
  %3303 = vadd.xlane.f32.xlu0 %v3302
  %v3304 = vpop.xlane.xlu0 %3303
  %v3305 = vrcp.pop %v3301
  %v3306 = vrcp.pop %v3304
  %v3307 = vmul.f32 %v3296, %v3305
  %v3308 = vmul.f32 %v3298, %v3306
  %v3310 = vsel %vm604, %v3307, 0
  %v3313 = vsel %vm604, %v3308, 0
  %v3316 = vsel %vm945, %v3193, 0
  %3318 = vmatprep.subr.mxu0 0.0
  %3319 = vmatpush1.msra.mxu0 0.0
  %3320 = vmatprep.subr.mxu0 0.0
  %3321 = vmatpush1.msra.mxu0 0.0
  %3322 = vmatprep.subr.mxu0 0.0
  %3323 = vmatpush1.msra.mxu0 0.0
  %3324 = vmatprep.subr.mxu0 0.0
  %3325 = vmatpush1.msra.mxu0 0.0
  %3326 = vmatprep.subr.mxu0 0.0
  %3327 = vmatpush1.msra.mxu0 0.0
  %3328 = vmatprep.subr.mxu0 0.0
  %3329 = vmatpush1.msra.mxu0 0.0
  %3330 = vmatprep.subr.mxu0 0.0
  %3331 = vmatpush1.msra.mxu0 0.0
  %3332 = vmatprep.subr.mxu0 0.0
  %3333 = vmatpush1.msra.mxu0 0.0
  %3334 = vmatprep.subr.mxu0 0.0
  %3335 = vmatpush1.msra.mxu0 0.0
  %3336 = vmatprep.subr.mxu0 0.0
  %3337 = vmatpush1.msra.mxu0 0.0
  %3338 = vmatprep.subr.mxu0 0.0
  %3339 = vmatpush1.msra.mxu0 0.0
  %3340 = vmatprep.subr.mxu0 0.0
  %3341 = vmatpush1.msra.mxu0 0.0
  %3342 = vmatprep.subr.mxu0 0.0
  %3343 = vmatpush1.msra.mxu0 0.0
  %3344 = vmatprep.subr.mxu0 0.0
  %3345 = vmatpush1.msra.mxu0 0.0
  %3346 = vmatprep.subr.mxu0 0.0
  %3347 = vmatpush1.msra.mxu0 %v3316
  %3348 = vmatprep.subr.mxu0 0.0
  %3349 = vmatpush1.msra.mxu0 %v3190
  %3350 = vmatprep.subr.mxu0 0.0
  %3351 = vmatpush2.msra.mxu0 0.0
  %3352 = vmatprep.subr.mxu0 0.0
  %3353 = vmatpush2.msra.mxu0 0.0
  %3354 = vmatprep.subr.mxu0 0.0
  %3355 = vmatpush2.msra.mxu0 0.0
  %3356 = vmatprep.subr.mxu0 0.0
  %3357 = vmatpush2.msra.mxu0 0.0
  %3358 = vmatprep.subr.mxu0 0.0
  %3359 = vmatpush2.msra.mxu0 0.0
  %3360 = vmatprep.subr.mxu0 0.0
  %3361 = vmatpush2.msra.mxu0 0.0
  %3362 = vmatprep.subr.mxu0 0.0
  %3363 = vmatpush2.msra.mxu0 0.0
  %3364 = vmatprep.subr.mxu0 0.0
  %3365 = vmatpush2.msra.mxu0 0.0
  %3366 = vmatprep.subr.mxu0 0.0
  %3367 = vmatpush2.msra.mxu0 0.0
  %3368 = vmatprep.subr.mxu0 0.0
  %3369 = vmatpush2.msra.mxu0 0.0
  %3370 = vmatprep.subr.mxu0 0.0
  %3371 = vmatpush2.msra.mxu0 0.0
  %3372 = vmatprep.subr.mxu0 0.0
  %3373 = vmatpush2.msra.mxu0 0.0
  %3374 = vmatprep.subr.mxu0 0.0
  %3375 = vmatpush2.msra.mxu0 0.0
  %3376 = vmatprep.subr.mxu0 0.0
  %3377 = vmatpush2.msra.mxu0 0.0
  %3378 = vmatprep.subr.mxu0 0.0
  %3379 = vmatpush2.msra.mxu0 0.0
  %3380 = vmatprep.subr.mxu0 0.0
  %3381 = vmatpush2.msra.mxu0 0.0
  %3382 = vmatprep.mubr.f32.mxu0 0.0
  %3383 = vmatmul.mubr.f32.gmra.mxu0 %v3310
  %v3384 = vpop.f32.mrf.mxu0
  %v3385 = vadd.f32 0.0, %v3384
  %v3386 = vpop.f32.mrf.mxu0
  %3387 = vmatprep.mubr.f32.mxu0 0.0
  %3388 = vmatmul.mubr.f32.gmra.mxu0 %v3313
  %v3389 = vpop.f32.mrf.mxu0
  %v3390 = vadd.f32 0.0, %v3389
  %v3391 = vpop.f32.mrf.mxu0
  %3392 = vdwg.mxu0
  %v3393 = vadd.f32 %v2990, %v3385
  %v3394 = vadd.f32 %v2995, %v3390
  %s3395 = scalar_lea.vmem %s8, 176
  %v3396 = vld [vmem:[%s3395] sm:$0xf]
  %v3397 = vld [vmem:[%s3395 + $0x4] sm:$0xf]
  %v3398 = vld [vmem:[%s3395 + $0x8] sm:$0xf]
  %v3399 = vld [vmem:[%s3395 + $0xc] sm:$0xf]
  %s3400 = scalar_lea.vmem %s9, 11
  %v3401 = vld [vmem:[%s3400] sm:$0x1]
  %v3403 = vlaneseq
  %v3404 = vshrl.u32 %v3403, 7
  %v3405 = vsub.s32 0, %v3404
  %v3406 = vrot.slane %v3401, %v3405
  %v3412 = vunpack.c.l.b16 %v3396
  %v3413 = vunpack.c.l.b16 %v3397
  %v3414 = vunpack.c.l.b16 %v3398
  %v3415 = vunpack.c.l.b16 %v3399
  %v3416 = vpack.c.b16 %v3413, %v3412
  %v3417 = vpack.c.b16 %v3415, %v3414
  %3420 = vmatprep.subr.bf16.mxu0 0
  %3421 = vmatpush1.bf16.msra.mxu0 0
  %3422 = vmatprep.subr.bf16.mxu0 0
  %3423 = vmatpush1.bf16.msra.mxu0 0
  %3424 = vmatprep.subr.bf16.mxu0 0
  %3425 = vmatpush1.bf16.msra.mxu0 0
  %3426 = vmatprep.subr.bf16.mxu0 0
  %3427 = vmatpush1.bf16.msra.mxu0 0
  %3428 = vmatprep.subr.bf16.mxu0 0
  %3429 = vmatpush1.bf16.msra.mxu0 0
  %3430 = vmatprep.subr.bf16.mxu0 0
  %3431 = vmatpush1.bf16.msra.mxu0 0
  %3432 = vmatprep.subr.bf16.mxu0 0
  %3433 = vmatpush1.bf16.msra.mxu0 %v3417
  %3434 = vmatprep.subr.bf16.mxu0 0
  %3435 = vmatpush1.bf16.msra.mxu0 %v3416
  %3436 = vmatprep.subr.bf16.mxu0 0
  %3437 = vmatpush2.bf16.msra.mxu0 0
  %3438 = vmatprep.subr.bf16.mxu0 0
  %3439 = vmatpush2.bf16.msra.mxu0 0
  %3440 = vmatprep.subr.bf16.mxu0 0
  %3441 = vmatpush2.bf16.msra.mxu0 0
  %3442 = vmatprep.subr.bf16.mxu0 0
  %3443 = vmatpush2.bf16.msra.mxu0 0
  %3444 = vmatprep.subr.bf16.mxu0 0
  %3445 = vmatpush2.bf16.msra.mxu0 0
  %3446 = vmatprep.subr.bf16.mxu0 0
  %3447 = vmatpush2.bf16.msra.mxu0 0
  %3448 = vmatprep.subr.bf16.mxu0 0
  %3449 = vmatpush2.bf16.msra.mxu0 0
  %3450 = vmatprep.subr.bf16.mxu0 0
  %3451 = vmatpush2.bf16.msra.mxu0 0
  %3452 = vmatprep.mubr.bf16.mxu0 0
  %3453 = vmatmul.mubr.bf16.gmra.mxu0 %v2231
  %v3454 = vpop.f32.mrf.mxu0
  %v3455 = vadd.f32 %v3406, %v3454
  %v3456 = vpop.f32.mrf.mxu0
  %v3457 = vpop.f32.mrf.mxu0
  %v3458 = vadd.f32 %v3406, %v3457
  %v3459 = vpop.f32.mrf.mxu0
  %3460 = vdwg.mxu0
  %s3461 = scalar_lea.vmem %s8, 240
  %v3462 = vld [vmem:[%s3461] sm:$0xf]
  %v3463 = vld [vmem:[%s3461 + $0x4] sm:$0xf]
  %v3464 = vld [vmem:[%s3461 + $0x8] sm:$0xf]
  %v3465 = vld [vmem:[%s3461 + $0xc] sm:$0xf]
  %s3466 = scalar_lea.vmem %s9, 15
  %v3467 = vld [vmem:[%s3466] sm:$0x1]
  %v3469 = vlaneseq
  %v3470 = vshrl.u32 %v3469, 7
  %v3471 = vsub.s32 0, %v3470
  %v3472 = vrot.slane %v3467, %v3471
  %v3478 = vunpack.c.l.b16 %v3462
  %v3479 = vunpack.c.l.b16 %v3463
  %v3480 = vunpack.c.l.b16 %v3464
  %v3481 = vunpack.c.l.b16 %v3465
  %v3482 = vpack.c.b16 %v3479, %v3478
  %v3483 = vpack.c.b16 %v3481, %v3480
  %3486 = vmatprep.subr.bf16.mxu0 0
  %3487 = vmatpush1.bf16.msra.mxu0 0
  %3488 = vmatprep.subr.bf16.mxu0 0
  %3489 = vmatpush1.bf16.msra.mxu0 0
  %3490 = vmatprep.subr.bf16.mxu0 0
  %3491 = vmatpush1.bf16.msra.mxu0 0
  %3492 = vmatprep.subr.bf16.mxu0 0
  %3493 = vmatpush1.bf16.msra.mxu0 0
  %3494 = vmatprep.subr.bf16.mxu0 0
  %3495 = vmatpush1.bf16.msra.mxu0 0
  %3496 = vmatprep.subr.bf16.mxu0 0
  %3497 = vmatpush1.bf16.msra.mxu0 0
  %3498 = vmatprep.subr.bf16.mxu0 0
  %3499 = vmatpush1.bf16.msra.mxu0 %v3483
  %3500 = vmatprep.subr.bf16.mxu0 0
  %3501 = vmatpush1.bf16.msra.mxu0 %v3482
  %3502 = vmatprep.subr.bf16.mxu0 0
  %3503 = vmatpush2.bf16.msra.mxu0 0
  %3504 = vmatprep.subr.bf16.mxu0 0
  %3505 = vmatpush2.bf16.msra.mxu0 0
  %3506 = vmatprep.subr.bf16.mxu0 0
  %3507 = vmatpush2.bf16.msra.mxu0 0
  %3508 = vmatprep.subr.bf16.mxu0 0
  %3509 = vmatpush2.bf16.msra.mxu0 0
  %3510 = vmatprep.subr.bf16.mxu0 0
  %3511 = vmatpush2.bf16.msra.mxu0 0
  %3512 = vmatprep.subr.bf16.mxu0 0
  %3513 = vmatpush2.bf16.msra.mxu0 0
  %3514 = vmatprep.subr.bf16.mxu0 0
  %3515 = vmatpush2.bf16.msra.mxu0 0
  %3516 = vmatprep.subr.bf16.mxu0 0
  %3517 = vmatpush2.bf16.msra.mxu0 0
  %3518 = vmatprep.mubr.bf16.mxu0 0
  %3519 = vmatmul.mubr.bf16.gmra.mxu0 %v2231
  %v3520 = vpop.f32.mrf.mxu0
  %v3521 = vadd.f32 %v3472, %v3520
  %v3522 = vpop.f32.mrf.mxu0
  %v3523 = vpop.f32.mrf.mxu0
  %v3524 = vadd.f32 %v3472, %v3523
  %v3525 = vpop.f32.mrf.mxu0
  %3526 = vdwg.mxu0
  %s3527 = scalar_lea.vmem %s10, 112
  %v3528 = vld [vmem:[%s3527] sm:$0xf]
  %v3529 = vld [vmem:[%s3527 + $0x4] sm:$0xf]
  %v3530 = vld [vmem:[%s3527 + $0x8] sm:$0xf]
  %v3531 = vld [vmem:[%s3527 + $0xc] sm:$0xf]
  %s3532 = scalar_lea.vmem %s11, 7
  %v3533 = vld [vmem:[%s3532] sm:$0x1]
  %v3535 = vlaneseq
  %v3536 = vshrl.u32 %v3535, 7
  %v3537 = vsub.s32 0, %v3536
  %v3538 = vrot.slane %v3533, %v3537
  %v3544 = vunpack.c.l.b16 %v3528
  %v3545 = vunpack.c.l.b16 %v3529
  %v3546 = vunpack.c.l.b16 %v3530
  %v3547 = vunpack.c.l.b16 %v3531
  %v3548 = vpack.c.b16 %v3545, %v3544
  %v3549 = vpack.c.b16 %v3547, %v3546
  %3552 = vmatprep.subr.bf16.mxu0 0
  %3553 = vmatpush1.bf16.msra.mxu0 0
  %3554 = vmatprep.subr.bf16.mxu0 0
  %3555 = vmatpush1.bf16.msra.mxu0 0
  %3556 = vmatprep.subr.bf16.mxu0 0
  %3557 = vmatpush1.bf16.msra.mxu0 0
  %3558 = vmatprep.subr.bf16.mxu0 0
  %3559 = vmatpush1.bf16.msra.mxu0 0
  %3560 = vmatprep.subr.bf16.mxu0 0
  %3561 = vmatpush1.bf16.msra.mxu0 0
  %3562 = vmatprep.subr.bf16.mxu0 0
  %3563 = vmatpush1.bf16.msra.mxu0 0
  %3564 = vmatprep.subr.bf16.mxu0 0
  %3565 = vmatpush1.bf16.msra.mxu0 %v3549
  %3566 = vmatprep.subr.bf16.mxu0 0
  %3567 = vmatpush1.bf16.msra.mxu0 %v3548
  %3568 = vmatprep.subr.bf16.mxu0 0
  %3569 = vmatpush2.bf16.msra.mxu0 0
  %3570 = vmatprep.subr.bf16.mxu0 0
  %3571 = vmatpush2.bf16.msra.mxu0 0
  %3572 = vmatprep.subr.bf16.mxu0 0
  %3573 = vmatpush2.bf16.msra.mxu0 0
  %3574 = vmatprep.subr.bf16.mxu0 0
  %3575 = vmatpush2.bf16.msra.mxu0 0
  %3576 = vmatprep.subr.bf16.mxu0 0
  %3577 = vmatpush2.bf16.msra.mxu0 0
  %3578 = vmatprep.subr.bf16.mxu0 0
  %3579 = vmatpush2.bf16.msra.mxu0 0
  %3580 = vmatprep.subr.bf16.mxu0 0
  %3581 = vmatpush2.bf16.msra.mxu0 0
  %3582 = vmatprep.subr.bf16.mxu0 0
  %3583 = vmatpush2.bf16.msra.mxu0 0
  %3584 = vmatprep.mubr.bf16.mxu0 0
  %3585 = vmatmul.mubr.bf16.gmra.mxu0 %v2231
  %v3586 = vpop.f32.mrf.mxu0
  %v3587 = vadd.f32 %v3538, %v3586
  %v3588 = vpop.f32.mrf.mxu0
  %v3589 = vpop.f32.mrf.mxu0
  %v3590 = vadd.f32 %v3538, %v3589
  %v3591 = vpop.f32.mrf.mxu0
  %3592 = vdwg.mxu0
  %v3594 = vsel %vm512, %v3455, 0
  %v3597 = vsel %vm512, %v3458, 0
  %v3600 = vsel %vm512, %v3521, 0
  %v3603 = vsel %vm512, %v3524, 0
  %3605 = vmatprep.subr.mxu0 0.0
  %3606 = vmatpush1.xpose.msra.mxu0 0.0
  %3607 = vmatprep.subr.mxu0 0.0
  %3608 = vmatpush1.xpose.msra.mxu0 0.0
  %3609 = vmatprep.subr.mxu0 0.0
  %3610 = vmatpush1.xpose.msra.mxu0 0.0
  %3611 = vmatprep.subr.mxu0 0.0
  %3612 = vmatpush1.xpose.msra.mxu0 0.0
  %3613 = vmatprep.subr.mxu0 0.0
  %3614 = vmatpush1.xpose.msra.mxu0 0.0
  %3615 = vmatprep.subr.mxu0 0.0
  %3616 = vmatpush1.xpose.msra.mxu0 0.0
  %3617 = vmatprep.subr.mxu0 0.0
  %3618 = vmatpush1.xpose.msra.mxu0 0.0
  %3619 = vmatprep.subr.mxu0 0.0
  %3620 = vmatpush1.xpose.msra.mxu0 0.0
  %3621 = vmatprep.subr.mxu0 0.0
  %3622 = vmatpush1.xpose.msra.mxu0 0.0
  %3623 = vmatprep.subr.mxu0 0.0
  %3624 = vmatpush1.xpose.msra.mxu0 0.0
  %3625 = vmatprep.subr.mxu0 0.0
  %3626 = vmatpush1.xpose.msra.mxu0 0.0
  %3627 = vmatprep.subr.mxu0 0.0
  %3628 = vmatpush1.xpose.msra.mxu0 0.0
  %3629 = vmatprep.subr.mxu0 0.0
  %3630 = vmatpush1.xpose.msra.mxu0 0.0
  %3631 = vmatprep.subr.mxu0 0.0
  %3632 = vmatpush1.xpose.msra.mxu0 0.0
  %3633 = vmatprep.subr.mxu0 0.0
  %3634 = vmatpush1.xpose.msra.mxu0 %v3603
  %3635 = vmatprep.subr.mxu0 0.0
  %3636 = vmatpush1.xpose.msra.mxu0 %v3600
  %3637 = vmatprep.subr.mxu0 0.0
  %3638 = vmatpush2.xpose.msra.mxu0 0.0
  %3639 = vmatprep.subr.mxu0 0.0
  %3640 = vmatpush2.xpose.msra.mxu0 0.0
  %3641 = vmatprep.subr.mxu0 0.0
  %3642 = vmatpush2.xpose.msra.mxu0 0.0
  %3643 = vmatprep.subr.mxu0 0.0
  %3644 = vmatpush2.xpose.msra.mxu0 0.0
  %3645 = vmatprep.subr.mxu0 0.0
  %3646 = vmatpush2.xpose.msra.mxu0 0.0
  %3647 = vmatprep.subr.mxu0 0.0
  %3648 = vmatpush2.xpose.msra.mxu0 0.0
  %3649 = vmatprep.subr.mxu0 0.0
  %3650 = vmatpush2.xpose.msra.mxu0 0.0
  %3651 = vmatprep.subr.mxu0 0.0
  %3652 = vmatpush2.xpose.msra.mxu0 0.0
  %3653 = vmatprep.subr.mxu0 0.0
  %3654 = vmatpush2.xpose.msra.mxu0 0.0
  %3655 = vmatprep.subr.mxu0 0.0
  %3656 = vmatpush2.xpose.msra.mxu0 0.0
  %3657 = vmatprep.subr.mxu0 0.0
  %3658 = vmatpush2.xpose.msra.mxu0 0.0
  %3659 = vmatprep.subr.mxu0 0.0
  %3660 = vmatpush2.xpose.msra.mxu0 0.0
  %3661 = vmatprep.subr.mxu0 0.0
  %3662 = vmatpush2.xpose.msra.mxu0 0.0
  %3663 = vmatprep.subr.mxu0 0.0
  %3664 = vmatpush2.xpose.msra.mxu0 0.0
  %3665 = vmatprep.subr.mxu0 0.0
  %3666 = vmatpush2.xpose.msra.mxu0 0.0
  %3667 = vmatprep.subr.mxu0 0.0
  %3668 = vmatpush2.xpose.msra.mxu0 0.0
  %3669 = vmatprep.mubr.f32.mxu0 0.0
  %3670 = vmatmul.mubr.f32.gmra.mxu0 %v3594
  %v3671 = vpop.f32.mrf.mxu0
  %v3672 = vadd.f32 0.0, %v3671
  %v3673 = vpop.f32.mrf.mxu0
  %3674 = vmatprep.mubr.f32.mxu0 0.0
  %3675 = vmatmul.mubr.f32.gmra.mxu0 %v3597
  %v3676 = vpop.f32.mrf.mxu0
  %v3677 = vadd.f32 0.0, %v3676
  %v3678 = vpop.f32.mrf.mxu0
  %3679 = vdwg.mxu0
  %v3680 = vmul.f32 %v3672, 0.35355338
  %v3681 = vmul.f32 %v3677, 0.35355338
  %v3682 = vadd.f32 %v3680, %v72
  %v3683 = vadd.f32 %v3681, %v73
  %v3684 = vsel %vm604, %v3682, -inf
  %3685 = vmax.xlane.f32.xlu0 %v3684
  %v3686 = vpop.xlane.xlu0 %3685
  %v3687 = vsel %vm608, %v3683, -inf
  %3688 = vmax.xlane.f32.xlu0 %v3687
  %v3689 = vpop.xlane.xlu0 %3688
  %v3690 = vsub.f32 %v3682, %v3686
  %v3691 = vsub.f32 %v3683, %v3689
  %v3692 = vmul.f32 %v3690, 1.442695
  %v3693 = vpow.pop %v3692
  %v3694 = vmul.f32 %v3691, 1.442695
  %v3695 = vpow.pop %v3694
  %v3696 = vsel %vm604, %v3693, 0.0
  %3697 = vadd.xlane.f32.xlu0 %v3696
  %v3698 = vpop.xlane.xlu0 %3697
  %v3699 = vsel %vm608, %v3695, 0.0
  %3700 = vadd.xlane.f32.xlu0 %v3699
  %v3701 = vpop.xlane.xlu0 %3700
  %v3702 = vrcp.pop %v3698
  %v3703 = vrcp.pop %v3701
  %v3704 = vmul.f32 %v3693, %v3702
  %v3705 = vmul.f32 %v3695, %v3703
  %v3707 = vsel %vm604, %v3704, 0
  %v3710 = vsel %vm604, %v3705, 0
  %v3713 = vsel %vm945, %v3590, 0
  %3715 = vmatprep.subr.mxu0 0.0
  %3716 = vmatpush1.msra.mxu0 0.0
  %3717 = vmatprep.subr.mxu0 0.0
  %3718 = vmatpush1.msra.mxu0 0.0
  %3719 = vmatprep.subr.mxu0 0.0
  %3720 = vmatpush1.msra.mxu0 0.0
  %3721 = vmatprep.subr.mxu0 0.0
  %3722 = vmatpush1.msra.mxu0 0.0
  %3723 = vmatprep.subr.mxu0 0.0
  %3724 = vmatpush1.msra.mxu0 0.0
  %3725 = vmatprep.subr.mxu0 0.0
  %3726 = vmatpush1.msra.mxu0 0.0
  %3727 = vmatprep.subr.mxu0 0.0
  %3728 = vmatpush1.msra.mxu0 0.0
  %3729 = vmatprep.subr.mxu0 0.0
  %3730 = vmatpush1.msra.mxu0 0.0
  %3731 = vmatprep.subr.mxu0 0.0
  %3732 = vmatpush1.msra.mxu0 0.0
  %3733 = vmatprep.subr.mxu0 0.0
  %3734 = vmatpush1.msra.mxu0 0.0
  %3735 = vmatprep.subr.mxu0 0.0
  %3736 = vmatpush1.msra.mxu0 0.0
  %3737 = vmatprep.subr.mxu0 0.0
  %3738 = vmatpush1.msra.mxu0 0.0
  %3739 = vmatprep.subr.mxu0 0.0
  %3740 = vmatpush1.msra.mxu0 0.0
  %3741 = vmatprep.subr.mxu0 0.0
  %3742 = vmatpush1.msra.mxu0 0.0
  %3743 = vmatprep.subr.mxu0 0.0
  %3744 = vmatpush1.msra.mxu0 %v3713
  %3745 = vmatprep.subr.mxu0 0.0
  %3746 = vmatpush1.msra.mxu0 %v3587
  %3747 = vmatprep.subr.mxu0 0.0
  %3748 = vmatpush2.msra.mxu0 0.0
  %3749 = vmatprep.subr.mxu0 0.0
  %3750 = vmatpush2.msra.mxu0 0.0
  %3751 = vmatprep.subr.mxu0 0.0
  %3752 = vmatpush2.msra.mxu0 0.0
  %3753 = vmatprep.subr.mxu0 0.0
  %3754 = vmatpush2.msra.mxu0 0.0
  %3755 = vmatprep.subr.mxu0 0.0
  %3756 = vmatpush2.msra.mxu0 0.0
  %3757 = vmatprep.subr.mxu0 0.0
  %3758 = vmatpush2.msra.mxu0 0.0
  %3759 = vmatprep.subr.mxu0 0.0
  %3760 = vmatpush2.msra.mxu0 0.0
  %3761 = vmatprep.subr.mxu0 0.0
  %3762 = vmatpush2.msra.mxu0 0.0
  %3763 = vmatprep.subr.mxu0 0.0
  %3764 = vmatpush2.msra.mxu0 0.0
  %3765 = vmatprep.subr.mxu0 0.0
  %3766 = vmatpush2.msra.mxu0 0.0
  %3767 = vmatprep.subr.mxu0 0.0
  %3768 = vmatpush2.msra.mxu0 0.0
  %3769 = vmatprep.subr.mxu0 0.0
  %3770 = vmatpush2.msra.mxu0 0.0
  %3771 = vmatprep.subr.mxu0 0.0
  %3772 = vmatpush2.msra.mxu0 0.0
  %3773 = vmatprep.subr.mxu0 0.0
  %3774 = vmatpush2.msra.mxu0 0.0
  %3775 = vmatprep.subr.mxu0 0.0
  %3776 = vmatpush2.msra.mxu0 0.0
  %3777 = vmatprep.subr.mxu0 0.0
  %3778 = vmatpush2.msra.mxu0 0.0
  %3779 = vmatprep.mubr.f32.mxu0 0.0
  %3780 = vmatmul.mubr.f32.gmra.mxu0 %v3707
  %v3781 = vpop.f32.mrf.mxu0
  %v3782 = vadd.f32 0.0, %v3781
  %v3783 = vpop.f32.mrf.mxu0
  %3784 = vmatprep.mubr.f32.mxu0 0.0
  %3785 = vmatmul.mubr.f32.gmra.mxu0 %v3710
  %v3786 = vpop.f32.mrf.mxu0
  %v3787 = vadd.f32 0.0, %v3786
  %v3788 = vpop.f32.mrf.mxu0
  %3789 = vdwg.mxu0
  %v3790 = vadd.f32 %v3393, %v3782
  %v3791 = vadd.f32 %v3394, %v3787
  %v3792 = vadd.f32 %v2156, %v3790
  %v3793 = vadd.f32 %v2157, %v3791
  %s3794 = scalar_lea.vmem %s12, 1
  %v3795 = vld [vmem:[%s3794] sm:$0x1]
  %v3797 = vlaneseq
  %v3798 = vshrl.u32 %v3797, 7
  %v3799 = vsub.s32 0, %v3798
  %v3800 = vrot.slane %v3795, %v3799
  %v3802 = vadd.f32 %v3792, %v3800
  %v3803 = vadd.f32 %v3793, %v3800
  %s3804 = scalar_lea.vmem %s13, 1
  %v3805 = vld [vmem:[%s3804] sm:$0x1]
  %s3806 = scalar_lea.vmem %s14, 1
  %v3807 = vld [vmem:[%s3806] sm:$0x1]
  %v3808 = vsel %vm225, %v3802, 0.0
  %3809 = vadd.xlane.f32.xlu0 %v3808
  %v3810 = vpop.xlane.xlu0 %3809
  %v3811 = vsel %vm229, %v3803, 0.0
  %3812 = vadd.xlane.f32.xlu0 %v3811
  %v3813 = vpop.xlane.xlu0 %3812
  %v3814 = vmul.f32 %v3810, %v233
  %v3815 = vmul.f32 %v3813, %v233
  %v3816 = vsub.f32 %v3802, %v3814
  %v3817 = vsub.f32 %v3803, %v3815
  %v3818 = vmul.f32 %v3816, %v3816
  %v3819 = vmul.f32 %v3817, %v3817
  %v3820 = vsel %vm225, %v3818, 0.0
  %3821 = vadd.xlane.f32.xlu0 %v3820
  %v3822 = vpop.xlane.xlu0 %3821
  %v3823 = vsel %vm229, %v3819, 0.0
  %3824 = vadd.xlane.f32.xlu0 %v3823
  %v3825 = vpop.xlane.xlu0 %3824
  %v3826 = vmul.f32 %v3822, %v233
  %v3827 = vmul.f32 %v3825, %v233
  %v3828 = vadd.f32 %v3826, 1e-05
  %v3829 = vadd.f32 %v3827, 1e-05
  %v3830 = vrsqrt.pop %v3828
  %v3831 = vrsqrt.pop %v3829
  %v3832 = vmul.f32 %v3816, %v3830
  %v3833 = vmul.f32 %v3817, %v3831
  %v3835 = vlaneseq
  %v3836 = vshrl.u32 %v3835, 7
  %v3837 = vsub.s32 0, %v3836
  %v3838 = vrot.slane %v3805, %v3837
  %v3840 = vmul.f32 %v3832, %v3838
  %v3841 = vmul.f32 %v3833, %v3838
  %v3843 = vlaneseq
  %v3844 = vshrl.u32 %v3843, 7
  %v3845 = vsub.s32 0, %v3844
  %v3846 = vrot.slane %v3807, %v3845
  %v3848 = vadd.f32 %v3840, %v3846
  %v3849 = vadd.f32 %v3841, %v3846
  %s3850 = scalar_lea.vmem %s15, 16
  %v3851 = vld [vmem:[%s3850] sm:$0xf]
  %v3852 = vld [vmem:[%s3850 + $0x4] sm:$0xf]
  %v3853 = vld [vmem:[%s3850 + $0x8] sm:$0xf]
  %v3854 = vld [vmem:[%s3850 + $0xc] sm:$0xf]
  %v3855 = vpack.c.bf16 %v3849, %v3848
  %s3856 = scalar_lea.vmem %s16, 1
  %v3857 = vld [vmem:[%s3856] sm:$0x1]
  %v3859 = vlaneseq
  %v3860 = vshrl.u32 %v3859, 7
  %v3861 = vsub.s32 0, %v3860
  %v3862 = vrot.slane %v3857, %v3861
  %v3868 = vunpack.c.l.b16 %v3851
  %v3869 = vunpack.c.l.b16 %v3852
  %v3870 = vunpack.c.l.b16 %v3853
  %v3871 = vunpack.c.l.b16 %v3854
  %v3872 = vpack.c.b16 %v3869, %v3868
  %v3873 = vpack.c.b16 %v3871, %v3870
  %v3877 = vsel %vm225, %v3855, 0
  %3879 = vmatprep.subr.bf16.mxu0 0
  %3880 = vmatpush1.bf16.msra.mxu0 0
  %3881 = vmatprep.subr.bf16.mxu0 0
  %3882 = vmatpush1.bf16.msra.mxu0 0
  %3883 = vmatprep.subr.bf16.mxu0 0
  %3884 = vmatpush1.bf16.msra.mxu0 0
  %3885 = vmatprep.subr.bf16.mxu0 0
  %3886 = vmatpush1.bf16.msra.mxu0 0
  %3887 = vmatprep.subr.bf16.mxu0 0
  %3888 = vmatpush1.bf16.msra.mxu0 0
  %3889 = vmatprep.subr.bf16.mxu0 0
  %3890 = vmatpush1.bf16.msra.mxu0 0
  %3891 = vmatprep.subr.bf16.mxu0 0
  %3892 = vmatpush1.bf16.msra.mxu0 %v3873
  %3893 = vmatprep.subr.bf16.mxu0 0
  %3894 = vmatpush1.bf16.msra.mxu0 %v3872
  %3895 = vmatprep.subr.bf16.mxu0 0
  %3896 = vmatpush2.bf16.msra.mxu0 0
  %3897 = vmatprep.subr.bf16.mxu0 0
  %3898 = vmatpush2.bf16.msra.mxu0 0
  %3899 = vmatprep.subr.bf16.mxu0 0
  %3900 = vmatpush2.bf16.msra.mxu0 0
  %3901 = vmatprep.subr.bf16.mxu0 0
  %3902 = vmatpush2.bf16.msra.mxu0 0
  %3903 = vmatprep.subr.bf16.mxu0 0
  %3904 = vmatpush2.bf16.msra.mxu0 0
  %3905 = vmatprep.subr.bf16.mxu0 0
  %3906 = vmatpush2.bf16.msra.mxu0 0
  %3907 = vmatprep.subr.bf16.mxu0 0
  %3908 = vmatpush2.bf16.msra.mxu0 0
  %3909 = vmatprep.subr.bf16.mxu0 0
  %3910 = vmatpush2.bf16.msra.mxu0 0
  %3911 = vmatprep.mubr.bf16.mxu0 0
  %3912 = vmatmul.mubr.bf16.gmra.mxu0 %v3877
  %v3913 = vpop.f32.mrf.mxu0
  %v3914 = vadd.f32 %v3862, %v3913
  %v3915 = vpop.f32.mrf.mxu0
  %v3916 = vpop.f32.mrf.mxu0
  %v3917 = vadd.f32 %v3862, %v3916
  %v3918 = vpop.f32.mrf.mxu0
  %3919 = vdwg.mxu0
  %v3920 = vmul.f32 %v3914, 1.702
  %v3921 = vmul.f32 %v3917, 1.702
  %v3922 = vxor.u32 %v3920, 2147483648
  %v3923 = vxor.u32 %v3921, 2147483648
  %v3924 = vmul.f32 %v3922, 1.442695
  %v3925 = vpow.pop %v3924
  %v3926 = vmul.f32 %v3923, 1.442695
  %v3927 = vpow.pop %v3926
  %v3928 = vadd.f32 %v3925, 1.0
  %v3929 = vadd.f32 %v3927, 1.0
  %v3930 = vrcp.pop %v3928
  %v3931 = vmul.f32 1.0, %v3930
  %v3932 = vrcp.pop %v3929
  %v3933 = vmul.f32 1.0, %v3932
  %v3934 = vmul.f32 %v3914, %v3931
  %v3935 = vmul.f32 %v3917, %v3933
  %s3936 = scalar_lea.vmem %s17, 64
  %v3937 = vld [vmem:[%s3936] sm:$0xf]
  %v3938 = vld [vmem:[%s3936 + $0x4] sm:$0xf]
  %v3939 = vld [vmem:[%s3936 + $0x8] sm:$0xf]
  %v3940 = vld [vmem:[%s3936 + $0xc] sm:$0xf]
  %v3941 = vld [vmem:[%s3936 + $0x10] sm:$0xf]
  %v3942 = vld [vmem:[%s3936 + $0x14] sm:$0xf]
  %v3943 = vld [vmem:[%s3936 + $0x18] sm:$0xf]
  %v3944 = vld [vmem:[%s3936 + $0x1c] sm:$0xf]
  %v3945 = vld [vmem:[%s3936 + $0x20] sm:$0xf]
  %v3946 = vld [vmem:[%s3936 + $0x24] sm:$0xf]
  %v3947 = vld [vmem:[%s3936 + $0x28] sm:$0xf]
  %v3948 = vld [vmem:[%s3936 + $0x2c] sm:$0xf]
  %v3949 = vld [vmem:[%s3936 + $0x30] sm:$0xf]
  %v3950 = vld [vmem:[%s3936 + $0x34] sm:$0xf]
  %v3951 = vld [vmem:[%s3936 + $0x38] sm:$0xf]
  %v3952 = vld [vmem:[%s3936 + $0x3c] sm:$0xf]
  %v3953 = vpack.c.bf16 %v3935, %v3934
  %v3970 = vunpack.c.l.b16 %v3937
  %v3971 = vunpack.c.l.b16 %v3938
  %v3972 = vunpack.c.l.b16 %v3939
  %v3973 = vunpack.c.l.b16 %v3940
  %v3974 = vunpack.c.l.b16 %v3941
  %v3975 = vunpack.c.l.b16 %v3942
  %v3976 = vunpack.c.l.b16 %v3943
  %v3977 = vunpack.c.l.b16 %v3944
  %v3978 = vunpack.c.l.b16 %v3945
  %v3979 = vunpack.c.l.b16 %v3946
  %v3980 = vunpack.c.l.b16 %v3947
  %v3981 = vunpack.c.l.b16 %v3948
  %v3982 = vunpack.c.l.b16 %v3949
  %v3983 = vunpack.c.l.b16 %v3950
  %v3984 = vunpack.c.l.b16 %v3951
  %v3985 = vunpack.c.l.b16 %v3952
  %v3986 = vpack.c.b16 %v3971, %v3970
  %v3987 = vpack.c.b16 %v3973, %v3972
  %v3988 = vpack.c.b16 %v3975, %v3974
  %v3989 = vpack.c.b16 %v3977, %v3976
  %v3990 = vpack.c.b16 %v3979, %v3978
  %v3991 = vpack.c.b16 %v3981, %v3980
  %v3992 = vpack.c.b16 %v3983, %v3982
  %v3993 = vpack.c.b16 %v3985, %v3984
  %4002 = vmatprep.subr.bf16.mxu0 0
  %4003 = vmatpush1.bf16.msra.mxu0 %v3993
  %4004 = vmatprep.subr.bf16.mxu0 0
  %4005 = vmatpush1.bf16.msra.mxu0 %v3992
  %4006 = vmatprep.subr.bf16.mxu0 0
  %4007 = vmatpush1.bf16.msra.mxu0 %v3991
  %4008 = vmatprep.subr.bf16.mxu0 0
  %4009 = vmatpush1.bf16.msra.mxu0 %v3990
  %4010 = vmatprep.subr.bf16.mxu0 0
  %4011 = vmatpush1.bf16.msra.mxu0 %v3989
  %4012 = vmatprep.subr.bf16.mxu0 0
  %4013 = vmatpush1.bf16.msra.mxu0 %v3988
  %4014 = vmatprep.subr.bf16.mxu0 0
  %4015 = vmatpush1.bf16.msra.mxu0 %v3987
  %4016 = vmatprep.subr.bf16.mxu0 0
  %4017 = vmatpush1.bf16.msra.mxu0 %v3986
  %4018 = vmatprep.subr.bf16.mxu0 0
  %4019 = vmatpush2.bf16.msra.mxu0 0
  %4020 = vmatprep.subr.bf16.mxu0 0
  %4021 = vmatpush2.bf16.msra.mxu0 0
  %4022 = vmatprep.subr.bf16.mxu0 0
  %4023 = vmatpush2.bf16.msra.mxu0 0
  %4024 = vmatprep.subr.bf16.mxu0 0
  %4025 = vmatpush2.bf16.msra.mxu0 0
  %4026 = vmatprep.subr.bf16.mxu0 0
  %4027 = vmatpush2.bf16.msra.mxu0 0
  %4028 = vmatprep.subr.bf16.mxu0 0
  %4029 = vmatpush2.bf16.msra.mxu0 0
  %4030 = vmatprep.subr.bf16.mxu0 0
  %4031 = vmatpush2.bf16.msra.mxu0 0
  %4032 = vmatprep.subr.bf16.mxu0 0
  %4033 = vmatpush2.bf16.msra.mxu0 0
  %4034 = vmatprep.mubr.bf16.mxu0 0
  %4035 = vmatmul.mubr.bf16.gmra.mxu0 %v3953
  %v4036 = vpop.f32.mrf.mxu0
  %v4037 = vadd.f32 0.0, %v4036
  %v4038 = vpop.f32.mrf.mxu0
  %v4039 = vpop.f32.mrf.mxu0
  %v4040 = vadd.f32 0.0, %v4039
  %v4041 = vpop.f32.mrf.mxu0
  %4042 = vdwg.mxu0
  %v4043 = vadd.f32 %v3802, %v4037
  %v4044 = vadd.f32 %v3803, %v4040
  %s4045 = scalar_lea.vmem %s18, 1
  %v4046 = vld [vmem:[%s4045] sm:$0x1]
  %v4048 = vlaneseq
  %v4049 = vshrl.u32 %v4048, 7
  %v4050 = vsub.s32 0, %v4049
  %v4051 = vrot.slane %v4046, %v4050
  %v4053 = vadd.f32 %v4043, %v4051
  %v4054 = vadd.f32 %v4044, %v4051
  %v4055 = vld [vmem:[%s19] sm:$0x1]
  %v4056 = vld [vmem:[%s20] sm:$0x1]
  %v4057 = vsel %vm225, %v4053, 0.0
  %4058 = vadd.xlane.f32.xlu0 %v4057
  %v4059 = vpop.xlane.xlu0 %4058
  %v4060 = vsel %vm229, %v4054, 0.0
  %4061 = vadd.xlane.f32.xlu0 %v4060
  %v4062 = vpop.xlane.xlu0 %4061
  %v4063 = vmul.f32 %v4059, %v233
  %v4064 = vmul.f32 %v4062, %v233
  %v4065 = vsub.f32 %v4053, %v4063
  %v4066 = vsub.f32 %v4054, %v4064
  %v4067 = vmul.f32 %v4065, %v4065
  %v4068 = vmul.f32 %v4066, %v4066
  %v4069 = vsel %vm225, %v4067, 0.0
  %4070 = vadd.xlane.f32.xlu0 %v4069
  %v4071 = vpop.xlane.xlu0 %4070
  %v4072 = vsel %vm229, %v4068, 0.0
  %4073 = vadd.xlane.f32.xlu0 %v4072
  %v4074 = vpop.xlane.xlu0 %4073
  %v4075 = vmul.f32 %v4071, %v233
  %v4076 = vmul.f32 %v4074, %v233
  %v4077 = vadd.f32 %v4075, 1e-05
  %v4078 = vadd.f32 %v4076, 1e-05
  %v4079 = vrsqrt.pop %v4077
  %v4080 = vrsqrt.pop %v4078
  %v4081 = vmul.f32 %v4065, %v4079
  %v4082 = vmul.f32 %v4066, %v4080
  %v4084 = vlaneseq
  %v4085 = vshrl.u32 %v4084, 7
  %v4086 = vsub.s32 0, %v4085
  %v4087 = vrot.slane %v4055, %v4086
  %v4089 = vmul.f32 %v4081, %v4087
  %v4090 = vmul.f32 %v4082, %v4087
  %v4092 = vlaneseq
  %v4093 = vshrl.u32 %v4092, 7
  %v4094 = vsub.s32 0, %v4093
  %v4095 = vrot.slane %v4056, %v4094
  %v4097 = vadd.f32 %v4089, %v4095
  %v4098 = vadd.f32 %v4090, %v4095
  %v4099 = vld [vmem:[%s21] sm:$0xf]
  %v4100 = vld [vmem:[%s21 + $0x4] sm:$0xf]
  %v4101 = vld [vmem:[%s21 + $0x8] sm:$0xf]
  %v4102 = vld [vmem:[%s21 + $0xc] sm:$0xf]
  %v4103 = vpack.c.bf16 %v4098, %v4097
  %v4108 = vunpack.c.l.b16 %v4099
  %v4109 = vunpack.c.l.b16 %v4100
  %v4110 = vunpack.c.l.b16 %v4101
  %v4111 = vunpack.c.l.b16 %v4102
  %v4112 = vpack.c.b16 %v4109, %v4108
  %v4113 = vpack.c.b16 %v4111, %v4110
  %v4117 = vsel %vm225, %v4103, 0
  %4119 = vmatprep.subr.bf16.mxu0 0
  %4120 = vmatpush1.bf16.msra.mxu0 0
  %4121 = vmatprep.subr.bf16.mxu0 0
  %4122 = vmatpush1.bf16.msra.mxu0 0
  %4123 = vmatprep.subr.bf16.mxu0 0
  %4124 = vmatpush1.bf16.msra.mxu0 0
  %4125 = vmatprep.subr.bf16.mxu0 0
  %4126 = vmatpush1.bf16.msra.mxu0 0
  %4127 = vmatprep.subr.bf16.mxu0 0
  %4128 = vmatpush1.bf16.msra.mxu0 0
  %4129 = vmatprep.subr.bf16.mxu0 0
  %4130 = vmatpush1.bf16.msra.mxu0 0
  %4131 = vmatprep.subr.bf16.mxu0 0
  %4132 = vmatpush1.bf16.msra.mxu0 %v4113
  %4133 = vmatprep.subr.bf16.mxu0 0
  %4134 = vmatpush1.bf16.msra.mxu0 %v4112
  %4135 = vmatprep.subr.bf16.mxu0 0
  %4136 = vmatpush2.bf16.msra.mxu0 0
  %4137 = vmatprep.subr.bf16.mxu0 0
  %4138 = vmatpush2.bf16.msra.mxu0 0
  %4139 = vmatprep.subr.bf16.mxu0 0
  %4140 = vmatpush2.bf16.msra.mxu0 0
  %4141 = vmatprep.subr.bf16.mxu0 0
  %4142 = vmatpush2.bf16.msra.mxu0 0
  %4143 = vmatprep.subr.bf16.mxu0 0
  %4144 = vmatpush2.bf16.msra.mxu0 0
  %4145 = vmatprep.subr.bf16.mxu0 0
  %4146 = vmatpush2.bf16.msra.mxu0 0
  %4147 = vmatprep.subr.bf16.mxu0 0
  %4148 = vmatpush2.bf16.msra.mxu0 0
  %4149 = vmatprep.subr.bf16.mxu0 0
  %4150 = vmatpush2.bf16.msra.mxu0 0
  %4151 = vmatprep.mubr.bf16.mxu0 0
  %4152 = vmatmul.mubr.bf16.gmra.mxu0 %v4117
  %v4153 = vpop.f32.mrf.mxu0
  %v4154 = vadd.f32 0.0, %v4153
  %v4155 = vpop.f32.mrf.mxu0
  %v4156 = vpop.f32.mrf.mxu0
  %v4157 = vadd.f32 0.0, %v4156
  %v4158 = vpop.f32.mrf.mxu0
  %4159 = vdwg.mxu0
  %vm4160 = vcmask 130048
  %4161 = vst.msk [vmem:[%s22] sm:$0xff] %vm4160, %v4154
  %vm4162 = vcmask 123904
  %4163 = vst.msk [vmem:[%s22 + $0x8] sm:$0x3] %vm4162, %v4157
  // Predicated region
  $region90: #{feature_generator_clip_forward.1} parent=0 // pred_check
    _
  $region91: #{feature_generator_clip_forward.1} parent=0 // pred_check_branch
    %4165 = sbr.rel (0) target = $region93
  $region92: #{feature_generator_clip_forward.1} parent=0 // pred_region
    _
  $region93: #{feature_generator_clip_forward.1} parent=0 // pred_fallthru
    _
  // Predicated region
  $region94: #{feature_generator_clip_forward.1} parent=0 // pred_check
    _
  $region95: #{feature_generator_clip_forward.1} parent=0 // pred_check_branch
    %4167 = sbr.rel (0) target = $region97
  $region96: #{feature_generator_clip_forward.1} parent=0 // pred_region
    _
  $region97: #{feature_generator_clip_forward.1} parent=0 // pred_fallthru
    _

</llo_original>
